<compile_context>
chip_gen: v5e
topology: v5e:2x2
jax: 0.10.0
libtpu: 0.0.40
codegen_flags: <defaults>
</compile_context>

<pallas_src>
import functools
import math

import jax
import jax.numpy as jnp
from jax.experimental import pallas as pl
from jax.experimental.pallas import tpu as pltpu


def _rcl_kernel(K, Wp, Koff, n_valid, iter_time, eps,
                xext_ref, wf_ref, wr_ref, gamma_ref, beta_ref, bf_ref, mask_ref,
                out_ref, rcol_ref, *maybe_rext):
    """Whole RCL forward in one grid-less invocation (everything fits VMEM).

    Layouts (channel rows; flattened zero-padded NCHW grid on the lane axis,
    padded to a multiple of 128 columns):
      xext_ref  : (Cin_p, Lx)  bf16   zero-padded input on the flat grid
      wf_ref    : (Cout_p, K*K*Cin_p) bf16
      wr_ref    : (Cout_p, K*K*Cin_p) bf16
      gamma/beta/bf : (Cout_p, 1) f32
      mask_ref  : (1, Sp) f32         1.0 at valid (anchored) conv-output columns
      out_ref   : (Cout_p, Sp) f32
      rcol_ref  : (K*K*Cin_p, Sp) bf16   im2col scratch, shared by both convs
      maybe_rext: (Cin_p, Lr) bf16       extended padded grid for r (iter_time>1)
    """
    Cin_p = xext_ref.shape[0]
    Sp = out_ref.shape[1]
    inv_n = 1.0 / float(n_valid)

    gamma = gamma_ref[...]        # (Cout_p, 1)
    beta = beta_ref[...]          # (Cout_p, 1)
    mask = mask_ref[...]          # (1, Sp)

    def im2col(src_ref):
        # Gather the K*K taps as static lane-offset slices of the flattened
        # padded grid, stacked along the contraction axis.  Cin_p % 16 == 0, so
        # every destination row block is a whole bf16 sublane group.
        for kh in range(K):
            for kw in range(K):
                t = kh * K + kw
                off = kh * Wp + kw
                rcol_ref[t * Cin_p:(t + 1) * Cin_p, :] = src_ref[:, off:off + Sp]

    def bn_relu(v, mask_out):
        # Train-mode BatchNorm2d over the n_valid unmasked columns.  Two-pass
        # variance (subtract mean, then sum of squares) for numerical
        # robustness; affine folded into a single per-channel scale/shift; ReLU
        # fused.  The trailing mask (only needed when the result feeds the next
        # recurrent conv) forces exact zeros at padding columns.
        mean = jnp.sum(v * mask, axis=1, keepdims=True) * inv_n
        cen = (v - mean) * mask
        var = jnp.sum(cen * cen, axis=1, keepdims=True) * inv_n
        scale = gamma * jax.lax.rsqrt(var + eps)
        shift = beta - mean * scale
        out = jnp.maximum(v * scale + shift, 0.0)
        return out * mask if mask_out else out

    # conv_f: im2col built in-kernel from the padded input, ONE fused matmul
    # (bf16 operands, f32 accumulation).
    im2col(xext_ref)
    f = jnp.dot(wf_ref[...], rcol_ref[...], preferred_element_type=jnp.float32)

    if iter_time == 0:
        # BN is never applied, so the conv bias is visible in the output.
        r = f + bf_ref[...]
    else:
        # Conv biases are dropped: a per-channel constant is cancelled exactly
        # by the train-mode BN mean subtraction, so it never affects the output.
        r = bn_relu(f, mask_out=(iter_time > 1))
        if iter_time > 1:
            rext_ref, = maybe_rext
            wr = wr_ref[...]
            rext_ref[...] = jnp.zeros(rext_ref.shape, rext_ref.dtype)  # zero caps once
            for it in range(1, iter_time):
                # Place r (exactly zero outside the valid window) onto the
                # extended padded grid, re-im2col it, and run conv_r as ONE
                # fused matmul.
                rext_ref[:, Koff:Koff + Sp] = r.astype(jnp.bfloat16)
                im2col(rext_ref)
                rc = jnp.dot(wr, rcol_ref[...], preferred_element_type=jnp.float32)
                r = bn_relu(f + rc, mask_out=(it < iter_time - 1))

    out_ref[...] = r.astype(out_ref.dtype)


def _round_up(v, m):
    return (v + m - 1) // m * m


def rcl_forward(x_nchw, wf, bf, wr, br, gamma, beta, *,
                kernel_size, iter_time, stride=1, padding=0, eps=1e-5):
    """RCL forward. PyTorch layouts in (NCHW activations / OIHW weights), NCHW out."""
    assert stride == 1, "kernel implements stride=1"
    del br  # recurrent-conv bias only ever enters through train-mode BN -> cancelled
    K, P = kernel_size, padding
    B, Cin, H, W = x_nchw.shape
    Cout = wf.shape[0]
    Hp, Wp = H + 2 * P, W + 2 * P
    Ho, Wo = Hp - K + 1, Wp - K + 1           # stride-1 output size
    if iter_time > 1:
        # the recurrence only type-checks for 'same' convs with Cin == Cout
        assert Ho == H and Wo == W and wf.shape[1] == Cout and Cin == Cout

    S = B * Hp * Wp                           # flattened padded grid (lane axis)
    Sp = _round_up(S, 128)                    # lane-dense padded width
    Cin_p = _round_up(Cin, 16)                # bf16 sublane packing for tap blocks
    Cout_p = _round_up(Cout, 16)              # keeps r directly re-usable in rext
    KKCp = K * K * Cin_p
    n_valid = B * Ho * Wo                     # BN population (N*H*W)
    Koff = P * Wp + P                         # flat offset of the padded interior
    Tmax = (K - 1) * Wp + (K - 1)             # largest tap offset
    Lx = _round_up(Sp + Tmax, 128)            # extended grid for the input taps

    # Zero-padded input, channel-major rows over the flattened (b, i, j) grid.
    x = x_nchw.astype(jnp.float32)
    xpad = jnp.pad(x, ((0, 0), (0, 0), (P, P), (P, P)))            # (B,Cin,Hp,Wp)
    xflat = jnp.transpose(xpad, (1, 0, 2, 3)).reshape(Cin, S)      # (Cin, S)
    xext = jnp.zeros((Cin_p, Lx), jnp.bfloat16)
    xext = xext.at[:Cin, :S].set(xflat.astype(jnp.bfloat16))

    # Weights OIHW -> (Cout_p, K*K*Cin_p); column = tap*Cin_p + ci, matching the
    # in-kernel im2col row order.  Padded rows/cols are zero (free on the MXU).
    def pack_w(w):
        wt = jnp.transpose(w, (0, 2, 3, 1)).astype(jnp.float32)    # (Cout,K,K,Cin)
        wp = jnp.zeros((Cout_p, K, K, Cin_p), jnp.float32)
        wp = wp.at[:Cout, :, :, :Cin].set(wt)
        return wp.reshape(Cout_p, KKCp).astype(jnp.bfloat16)

    wf_m = pack_w(wf)
    wr_m = pack_w(wr)

    def pad_col(v):
        return jnp.zeros((Cout_p, 1), jnp.float32).at[:Cout, 0].set(v.astype(jnp.float32))

    gamma2, beta2, bf2 = pad_col(gamma), pad_col(beta), pad_col(bf)

    # Validity mask of the anchored conv outputs on the flattened padded grid.
    ii = jnp.arange(Hp).reshape(Hp, 1)
    jj = jnp.arange(Wp).reshape(1, Wp)
    mask2d = ((ii < Ho) & (jj < Wo)).astype(jnp.float32)
    mask = jnp.broadcast_to(mask2d.reshape(1, Hp * Wp), (B, Hp * Wp)).reshape(1, S)
    mask = jnp.zeros((1, Sp), jnp.float32).at[:, :S].set(mask)

    scratch = [pltpu.VMEM((KKCp, Sp), jnp.bfloat16)]              # shared im2col
    rext_bytes = 0
    if iter_time > 1:
        Lr = _round_up(Koff + Sp + Tmax, 128)
        scratch.append(pltpu.VMEM((Cin_p, Lr), jnp.bfloat16))     # padded r grid
        rext_bytes = Cin_p * Lr * 2

    # VMEM budget computed from the actual buffers (inputs/outputs/scratch),
    # doubled for pipeline buffering slack and rounded up to a whole MiB.
    buf_bytes = (Cin_p * Lx * 2                 # xext (bf16)
                 + 2 * Cout_p * KKCp * 2        # wf, wr (bf16)
                 + 3 * Cout_p * 4 + Sp * 4      # gamma, beta, bf, mask (f32)
                 + Cout_p * Sp * 4              # output (f32)
                 + KKCp * Sp * 2                # rcol scratch (bf16)
                 + rext_bytes)                  # rext scratch (bf16)
    vmem_limit = min(_round_up(2 * buf_bytes + (1 << 20), 1 << 20), 64 << 20)

    kernel = functools.partial(_rcl_kernel, K, Wp, Koff, n_valid, iter_time, eps)
    vspec = lambda: pl.BlockSpec(memory_space=pltpu.MemorySpace.VMEM)

    out_flat = pl.pallas_call(
        kernel,
        out_shape=jax.ShapeDtypeStruct((Cout_p, Sp), jnp.float32),
        in_specs=[vspec() for _ in range(7)],
        out_specs=vspec(),
        scratch_shapes=scratch,
        compiler_params=pltpu.CompilerParams(vmem_limit_bytes=vmem_limit),
    )(xext, wf_m, wr_m, gamma2, beta2, bf2, mask)

    # Valid outputs live in the top-left Ho x Wo corner of each padded image.
    out = out_flat[:Cout, :S].reshape(Cout, B, Hp, Wp)[:, :, :Ho, :Wo]
    return jnp.transpose(out, (1, 0, 2, 3))   # (B, Cout, Ho, Wo), NCHW


def _rcl_reference(x, wf, bf, wr, br, gamma, beta, *,
                   kernel_size, iter_time, stride=1, padding=0, eps=1e-5):
    """Pure-JAX (XLA) reference of the PyTorch module's forward in train mode."""
    dn = jax.lax.conv_dimension_numbers(x.shape, wf.shape, ("NCHW", "OIHW", "NCHW"))

    def conv(inp, w, b):
        out = jax.lax.conv_general_dilated(
            inp.astype(jnp.bfloat16), w.astype(jnp.bfloat16),
            window_strides=(stride, stride),
            padding=[(padding, padding), (padding, padding)],
            dimension_numbers=dn,
            preferred_element_type=jnp.float32)
        return out + b.reshape(1, -1, 1, 1).astype(jnp.float32)

    g = gamma.reshape(1, -1, 1, 1).astype(jnp.float32)
    bta = beta.reshape(1, -1, 1, 1).astype(jnp.float32)

    def bn_relu(v):
        mean = jnp.mean(v, axis=(0, 2, 3), keepdims=True)
        var = jnp.mean((v - mean) ** 2, axis=(0, 2, 3), keepdims=True)
        return jnp.maximum((v - mean) * jax.lax.rsqrt(var + eps) * g + bta, 0.0)

    f = conv(x, wf, bf)
    r = f
    for i in range(iter_time):
        r = bn_relu(r) if i == 0 else bn_relu(f + conv(r, wr, br))
    return r


if __name__ == "__main__":
    # Small, deterministic config consistent with the module's recurrence
    # (Cin == Cout and 'same' padding are required for iter_time > 1).
    B, Cin, H, W = 2, 4, 16, 16
    Cout, K, P, stride = 4, 3, 1, 1
    iter_time = 3

    key = jax.random.PRNGKey(0)
    k1, k2, k3, k4, k5 = jax.random.split(key, 5)

    fan_in = Cin * K * K
    bound_w = math.sqrt(6.0 / fan_in)        # kaiming_uniform_ (relu) bound
    bound_b = 1.0 / math.sqrt(fan_in)        # default Conv2d bias bound

    wf = jax.random.uniform(k1, (Cout, Cin, K, K), jnp.float32, -bound_w, bound_w)
    wr = jax.random.uniform(k2, (Cout, Cin, K, K), jnp.float32, -bound_w, bound_w)
    bf = jax.random.uniform(k3, (Cout,), jnp.float32, -bound_b, bound_b)
    br = jax.random.uniform(k4, (Cout,), jnp.float32, -bound_b, bound_b)
    gamma = jnp.ones((Cout,), jnp.float32)   # BatchNorm2d default affine init
    beta = jnp.zeros((Cout,), jnp.float32)

    x = jax.random.normal(k5, (B, Cin, H, W), jnp.float32)

    out = rcl_forward(x, wf, bf, wr, br, gamma, beta,
                      kernel_size=K, iter_time=iter_time, stride=stride, padding=P)
    out = jax.block_until_ready(out)
    assert out.shape == (B, Cout, H, W)

    ref = _rcl_reference(x, wf, bf, wr, br, gamma, beta,
                         kernel_size=K, iter_time=iter_time, stride=stride, padding=P)
    err = float(jnp.max(jnp.abs(out - ref)))
    assert err < 2e-2, f"mismatch vs reference: max abs err = {err}"
    print("KERNEL_OK")
</pallas_src>

<mosaic_0001>
module attributes {stable_mosaic.version = 11 : i64} {
  func.func @_rcl_kernel(%arg0: memref<16x896xbf16, #tpu.memory_space<vmem>>, %arg1: memref<16x144xbf16, #tpu.memory_space<vmem>>, %arg2: memref<16x144xbf16, #tpu.memory_space<vmem>>, %arg3: memref<16x1xf32, #tpu.memory_space<vmem>>, %arg4: memref<16x1xf32, #tpu.memory_space<vmem>>, %arg5: memref<16x1xf32, #tpu.memory_space<vmem>>, %arg6: memref<1x768xf32, #tpu.memory_space<vmem>>, %arg7: memref<16x768xf32, #tpu.memory_space<vmem>>, %arg8: memref<144x768xbf16, #tpu.memory_space<vmem>>, %arg9: memref<16x896xbf16, #tpu.memory_space<vmem>>) attributes {dimension_semantics = [], scalar_prefetch = 0 : i64, scratch_operands = 2 : i64, tpu.core_type = #tpu.core_type<tc>} {
    %c0 = arith.constant 0 : index
    %c0_0 = arith.constant 0 : index
    %0 = vector.load %arg3[%c0, %c0_0] : memref<16x1xf32, #tpu.memory_space<vmem>>, vector<16x1xf32>
    %c0_1 = arith.constant 0 : index
    %c0_2 = arith.constant 0 : index
    %1 = vector.load %arg4[%c0_1, %c0_2] : memref<16x1xf32, #tpu.memory_space<vmem>>, vector<16x1xf32>
    %c0_3 = arith.constant 0 : index
    %c0_4 = arith.constant 0 : index
    %2 = vector.load %arg6[%c0_3, %c0_4] : memref<1x768xf32, #tpu.memory_space<vmem>>, vector<1x768xf32>
    %c0_5 = arith.constant 0 : index
    %c0_6 = arith.constant 0 : index
    %3 = vector.load %arg0[%c0_5, %c0_6] : memref<16x896xbf16, #tpu.memory_space<vmem>>, vector<16x768xbf16>
    %c0_7 = arith.constant 0 : index
    %c0_8 = arith.constant 0 : index
    %4 = vector.load %arg8[%c0_7, %c0_8] : memref<144x768xbf16, #tpu.memory_space<vmem>>, vector<16x768xbf16>
    tpu.vector_store %arg8[%c0_7, %c0_8], %3 {strides = array<i32>} : memref<144x768xbf16, #tpu.memory_space<vmem>>, vector<16x768xbf16>,
    %c0_9 = arith.constant 0 : index
    %c1 = arith.constant 1 : index
    %5 = vector.load %arg0[%c0_9, %c1] : memref<16x896xbf16, #tpu.memory_space<vmem>>, vector<16x768xbf16>
    %c16 = arith.constant 16 : index
    %c0_10 = arith.constant 0 : index
    %6 = vector.load %arg8[%c16, %c0_10] : memref<144x768xbf16, #tpu.memory_space<vmem>>, vector<16x768xbf16>
    tpu.vector_store %arg8[%c16, %c0_10], %5 {strides = array<i32>} : memref<144x768xbf16, #tpu.memory_space<vmem>>, vector<16x768xbf16>,
    %c0_11 = arith.constant 0 : index
    %c2 = arith.constant 2 : index
    %7 = vector.load %arg0[%c0_11, %c2] : memref<16x896xbf16, #tpu.memory_space<vmem>>, vector<16x768xbf16>
    %c32 = arith.constant 32 : index
    %c0_12 = arith.constant 0 : index
    %8 = vector.load %arg8[%c32, %c0_12] : memref<144x768xbf16, #tpu.memory_space<vmem>>, vector<16x768xbf16>
    tpu.vector_store %arg8[%c32, %c0_12], %7 {strides = array<i32>} : memref<144x768xbf16, #tpu.memory_space<vmem>>, vector<16x768xbf16>,
    %c0_13 = arith.constant 0 : index
    %c18 = arith.constant 18 : index
    %9 = vector.load %arg0[%c0_13, %c18] : memref<16x896xbf16, #tpu.memory_space<vmem>>, vector<16x768xbf16>
    %c48 = arith.constant 48 : index
    %c0_14 = arith.constant 0 : index
    %10 = vector.load %arg8[%c48, %c0_14] : memref<144x768xbf16, #tpu.memory_space<vmem>>, vector<16x768xbf16>
    tpu.vector_store %arg8[%c48, %c0_14], %9 {strides = array<i32>} : memref<144x768xbf16, #tpu.memory_space<vmem>>, vector<16x768xbf16>,
    %c0_15 = arith.constant 0 : index
    %c19 = arith.constant 19 : index
    %11 = vector.load %arg0[%c0_15, %c19] : memref<16x896xbf16, #tpu.memory_space<vmem>>, vector<16x768xbf16>
    %c64 = arith.constant 64 : index
    %c0_16 = arith.constant 0 : index
    %12 = vector.load %arg8[%c64, %c0_16] : memref<144x768xbf16, #tpu.memory_space<vmem>>, vector<16x768xbf16>
    tpu.vector_store %arg8[%c64, %c0_16], %11 {strides = array<i32>} : memref<144x768xbf16, #tpu.memory_space<vmem>>, vector<16x768xbf16>,
    %c0_17 = arith.constant 0 : index
    %c20 = arith.constant 20 : index
    %13 = vector.load %arg0[%c0_17, %c20] : memref<16x896xbf16, #tpu.memory_space<vmem>>, vector<16x768xbf16>
    %c80 = arith.constant 80 : index
    %c0_18 = arith.constant 0 : index
    %14 = vector.load %arg8[%c80, %c0_18] : memref<144x768xbf16, #tpu.memory_space<vmem>>, vector<16x768xbf16>
    tpu.vector_store %arg8[%c80, %c0_18], %13 {strides = array<i32>} : memref<144x768xbf16, #tpu.memory_space<vmem>>, vector<16x768xbf16>,
    %c0_19 = arith.constant 0 : index
    %c36 = arith.constant 36 : index
    %15 = vector.load %arg0[%c0_19, %c36] : memref<16x896xbf16, #tpu.memory_space<vmem>>, vector<16x768xbf16>
    %c96 = arith.constant 96 : index
    %c0_20 = arith.constant 0 : index
    %16 = vector.load %arg8[%c96, %c0_20] : memref<144x768xbf16, #tpu.memory_space<vmem>>, vector<16x768xbf16>
    tpu.vector_store %arg8[%c96, %c0_20], %15 {strides = array<i32>} : memref<144x768xbf16, #tpu.memory_space<vmem>>, vector<16x768xbf16>,
    %c0_21 = arith.constant 0 : index
    %c37 = arith.constant 37 : index
    %17 = vector.load %arg0[%c0_21, %c37] : memref<16x896xbf16, #tpu.memory_space<vmem>>, vector<16x768xbf16>
    %c112 = arith.constant 112 : index
    %c0_22 = arith.constant 0 : index
    %18 = vector.load %arg8[%c112, %c0_22] : memref<144x768xbf16, #tpu.memory_space<vmem>>, vector<16x768xbf16>
    tpu.vector_store %arg8[%c112, %c0_22], %17 {strides = array<i32>} : memref<144x768xbf16, #tpu.memory_space<vmem>>, vector<16x768xbf16>,
    %c0_23 = arith.constant 0 : index
    %c38 = arith.constant 38 : index
    %19 = vector.load %arg0[%c0_23, %c38] : memref<16x896xbf16, #tpu.memory_space<vmem>>, vector<16x768xbf16>
    %c128 = arith.constant 128 : index
    %c0_24 = arith.constant 0 : index
    %20 = vector.load %arg8[%c128, %c0_24] : memref<144x768xbf16, #tpu.memory_space<vmem>>, vector<16x768xbf16>
    tpu.vector_store %arg8[%c128, %c0_24], %19 {strides = array<i32>} : memref<144x768xbf16, #tpu.memory_space<vmem>>, vector<16x768xbf16>,
    %c0_25 = arith.constant 0 : index
    %c0_26 = arith.constant 0 : index
    %21 = vector.load %arg1[%c0_25, %c0_26] : memref<16x144xbf16, #tpu.memory_space<vmem>>, vector<16x144xbf16>
    %c0_27 = arith.constant 0 : index
    %c0_28 = arith.constant 0 : index
    %22 = vector.load %arg8[%c0_27, %c0_28] : memref<144x768xbf16, #tpu.memory_space<vmem>>, vector<144x768xbf16>
    %cst = arith.constant dense<0.000000e+00> : vector<16x768xf32>
    %23 = tpu.matmul %21, %22, %cst {dimension_numbers = #tpu.dot_dimension_numbers<[1], [0], [0], [1], [0, 0, 1, 1], [], []>} : vector<16x144xbf16>, vector<144x768xbf16>, vector<16x768xf32> -> vector<16x768xf32>
    %24 = vector.broadcast %2 : vector<1x768xf32> to vector<16x768xf32>
    %25 = arith.mulf %23, %24 : vector<16x768xf32>
    %cst_29 = arith.constant dense<0.000000e+00> : vector<16xf32>
    %26 = vector.multi_reduction <add>, %25, %cst_29 [1] : vector<16x768xf32> to vector<16xf32>
    %27 = vector.shape_cast %26 : vector<16xf32> to vector<16x1xf32>
    %cst_30 = arith.constant 0.001953125 : f32
    %28 = vector.broadcast %cst_30 : f32 to vector<16x1xf32>
    %29 = arith.mulf %27, %28 : vector<16x1xf32>
    %30 = vector.broadcast %29 : vector<16x1xf32> to vector<16x768xf32>
    %31 = arith.subf %23, %30 : vector<16x768xf32>
    %32 = vector.broadcast %2 : vector<1x768xf32> to vector<16x768xf32>
    %33 = arith.mulf %31, %32 : vector<16x768xf32>
    %34 = arith.mulf %33, %33 : vector<16x768xf32>
    %cst_31 = arith.constant dense<0.000000e+00> : vector<16xf32>
    %35 = vector.multi_reduction <add>, %34, %cst_31 [1] : vector<16x768xf32> to vector<16xf32>
    %36 = vector.shape_cast %35 : vector<16xf32> to vector<16x1xf32>
    %cst_32 = arith.constant 0.001953125 : f32
    %37 = vector.broadcast %cst_32 : f32 to vector<16x1xf32>
    %38 = arith.mulf %36, %37 : vector<16x1xf32>
    %cst_33 = arith.constant 9.99999974E-6 : f32
    %39 = vector.broadcast %cst_33 : f32 to vector<16x1xf32>
    %40 = arith.addf %38, %39 : vector<16x1xf32>
    %41 = math.rsqrt %40 : vector<16x1xf32>
    %42 = arith.mulf %0, %41 : vector<16x1xf32>
    %43 = arith.mulf %29, %42 : vector<16x1xf32>
    %44 = arith.subf %1, %43 : vector<16x1xf32>
    %45 = vector.broadcast %42 : vector<16x1xf32> to vector<16x768xf32>
    %46 = arith.mulf %23, %45 : vector<16x768xf32>
    %47 = vector.broadcast %44 : vector<16x1xf32> to vector<16x768xf32>
    %48 = arith.addf %46, %47 : vector<16x768xf32>
    %cst_34 = arith.constant 0.000000e+00 : f32
    %49 = vector.broadcast %cst_34 : f32 to vector<16x768xf32>
    %50 = arith.maximumf %48, %49 : vector<16x768xf32>
    %51 = vector.broadcast %2 : vector<1x768xf32> to vector<16x768xf32>
    %52 = arith.mulf %50, %51 : vector<16x768xf32>
    %c0_35 = arith.constant 0 : index
    %c0_36 = arith.constant 0 : index
    %53 = vector.load %arg2[%c0_35, %c0_36] : memref<16x144xbf16, #tpu.memory_space<vmem>>, vector<16x144xbf16>
    %cst_37 = arith.constant 0.000000e+00 : bf16
    %54 = vector.broadcast %cst_37 : bf16 to vector<16x896xbf16>
    %c0_38 = arith.constant 0 : index
    %c0_39 = arith.constant 0 : index
    %55 = vector.load %arg9[%c0_38, %c0_39] : memref<16x896xbf16, #tpu.memory_space<vmem>>, vector<16x896xbf16>
    tpu.vector_store %arg9[%c0_38, %c0_39], %54 {strides = array<i32>} : memref<16x896xbf16, #tpu.memory_space<vmem>>, vector<16x896xbf16>,
    %56 = arith.truncf %52 : vector<16x768xf32> to vector<16x768xbf16>
    %c0_40 = arith.constant 0 : index
    %c19_41 = arith.constant 19 : index
    %57 = vector.load %arg9[%c0_40, %c19_41] : memref<16x896xbf16, #tpu.memory_space<vmem>>, vector<16x768xbf16>
    tpu.vector_store %arg9[%c0_40, %c19_41], %56 {strides = array<i32>} : memref<16x896xbf16, #tpu.memory_space<vmem>>, vector<16x768xbf16>,
    %c0_42 = arith.constant 0 : index
    %c0_43 = arith.constant 0 : index
    %58 = vector.load %arg9[%c0_42, %c0_43] : memref<16x896xbf16, #tpu.memory_space<vmem>>, vector<16x768xbf16>
    %c0_44 = arith.constant 0 : index
    %c0_45 = arith.constant 0 : index
    %59 = vector.load %arg8[%c0_44, %c0_45] : memref<144x768xbf16, #tpu.memory_space<vmem>>, vector<16x768xbf16>
    tpu.vector_store %arg8[%c0_44, %c0_45], %58 {strides = array<i32>} : memref<144x768xbf16, #tpu.memory_space<vmem>>, vector<16x768xbf16>,
    %c0_46 = arith.constant 0 : index
    %c1_47 = arith.constant 1 : index
    %60 = vector.load %arg9[%c0_46, %c1_47] : memref<16x896xbf16, #tpu.memory_space<vmem>>, vector<16x768xbf16>
    %c16_48 = arith.constant 16 : index
    %c0_49 = arith.constant 0 : index
    %61 = vector.load %arg8[%c16_48, %c0_49] : memref<144x768xbf16, #tpu.memory_space<vmem>>, vector<16x768xbf16>
    tpu.vector_store %arg8[%c16_48, %c0_49], %60 {strides = array<i32>} : memref<144x768xbf16, #tpu.memory_space<vmem>>, vector<16x768xbf16>,
    %c0_50 = arith.constant 0 : index
    %c2_51 = arith.constant 2 : index
    %62 = vector.load %arg9[%c0_50, %c2_51] : memref<16x896xbf16, #tpu.memory_space<vmem>>, vector<16x768xbf16>
    %c32_52 = arith.constant 32 : index
    %c0_53 = arith.constant 0 : index
    %63 = vector.load %arg8[%c32_52, %c0_53] : memref<144x768xbf16, #tpu.memory_space<vmem>>, vector<16x768xbf16>
    tpu.vector_store %arg8[%c32_52, %c0_53], %62 {strides = array<i32>} : memref<144x768xbf16, #tpu.memory_space<vmem>>, vector<16x768xbf16>,
    %c0_54 = arith.constant 0 : index
    %c18_55 = arith.constant 18 : index
    %64 = vector.load %arg9[%c0_54, %c18_55] : memref<16x896xbf16, #tpu.memory_space<vmem>>, vector<16x768xbf16>
    %c48_56 = arith.constant 48 : index
    %c0_57 = arith.constant 0 : index
    %65 = vector.load %arg8[%c48_56, %c0_57] : memref<144x768xbf16, #tpu.memory_space<vmem>>, vector<16x768xbf16>
    tpu.vector_store %arg8[%c48_56, %c0_57], %64 {strides = array<i32>} : memref<144x768xbf16, #tpu.memory_space<vmem>>, vector<16x768xbf16>,
    %c0_58 = arith.constant 0 : index
    %c19_59 = arith.constant 19 : index
    %66 = vector.load %arg9[%c0_58, %c19_59] : memref<16x896xbf16, #tpu.memory_space<vmem>>, vector<16x768xbf16>
    %c64_60 = arith.constant 64 : index
    %c0_61 = arith.constant 0 : index
    %67 = vector.load %arg8[%c64_60, %c0_61] : memref<144x768xbf16, #tpu.memory_space<vmem>>, vector<16x768xbf16>
    tpu.vector_store %arg8[%c64_60, %c0_61], %66 {strides = array<i32>} : memref<144x768xbf16, #tpu.memory_space<vmem>>, vector<16x768xbf16>,
    %c0_62 = arith.constant 0 : index
    %c20_63 = arith.constant 20 : index
    %68 = vector.load %arg9[%c0_62, %c20_63] : memref<16x896xbf16, #tpu.memory_space<vmem>>, vector<16x768xbf16>
    %c80_64 = arith.constant 80 : index
    %c0_65 = arith.constant 0 : index
    %69 = vector.load %arg8[%c80_64, %c0_65] : memref<144x768xbf16, #tpu.memory_space<vmem>>, vector<16x768xbf16>
    tpu.vector_store %arg8[%c80_64, %c0_65], %68 {strides = array<i32>} : memref<144x768xbf16, #tpu.memory_space<vmem>>, vector<16x768xbf16>,
    %c0_66 = arith.constant 0 : index
    %c36_67 = arith.constant 36 : index
    %70 = vector.load %arg9[%c0_66, %c36_67] : memref<16x896xbf16, #tpu.memory_space<vmem>>, vector<16x768xbf16>
    %c96_68 = arith.constant 96 : index
    %c0_69 = arith.constant 0 : index
    %71 = vector.load %arg8[%c96_68, %c0_69] : memref<144x768xbf16, #tpu.memory_space<vmem>>, vector<16x768xbf16>
    tpu.vector_store %arg8[%c96_68, %c0_69], %70 {strides = array<i32>} : memref<144x768xbf16, #tpu.memory_space<vmem>>, vector<16x768xbf16>,
    %c0_70 = arith.constant 0 : index
    %c37_71 = arith.constant 37 : index
    %72 = vector.load %arg9[%c0_70, %c37_71] : memref<16x896xbf16, #tpu.memory_space<vmem>>, vector<16x768xbf16>
    %c112_72 = arith.constant 112 : index
    %c0_73 = arith.constant 0 : index
    %73 = vector.load %arg8[%c112_72, %c0_73] : memref<144x768xbf16, #tpu.memory_space<vmem>>, vector<16x768xbf16>
    tpu.vector_store %arg8[%c112_72, %c0_73], %72 {strides = array<i32>} : memref<144x768xbf16, #tpu.memory_space<vmem>>, vector<16x768xbf16>,
    %c0_74 = arith.constant 0 : index
    %c38_75 = arith.constant 38 : index
    %74 = vector.load %arg9[%c0_74, %c38_75] : memref<16x896xbf16, #tpu.memory_space<vmem>>, vector<16x768xbf16>
    %c128_76 = arith.constant 128 : index
    %c0_77 = arith.constant 0 : index
    %75 = vector.load %arg8[%c128_76, %c0_77] : memref<144x768xbf16, #tpu.memory_space<vmem>>, vector<16x768xbf16>
    tpu.vector_store %arg8[%c128_76, %c0_77], %74 {strides = array<i32>} : memref<144x768xbf16, #tpu.memory_space<vmem>>, vector<16x768xbf16>,
    %c0_78 = arith.constant 0 : index
    %c0_79 = arith.constant 0 : index
    %76 = vector.load %arg8[%c0_78, %c0_79] : memref<144x768xbf16, #tpu.memory_space<vmem>>, vector<144x768xbf16>
    %cst_80 = arith.constant dense<0.000000e+00> : vector<16x768xf32>
    %77 = tpu.matmul %53, %76, %cst_80 {dimension_numbers = #tpu.dot_dimension_numbers<[1], [0], [0], [1], [0, 0, 1, 1], [], []>} : vector<16x144xbf16>, vector<144x768xbf16>, vector<16x768xf32> -> vector<16x768xf32>
    %78 = arith.addf %23, %77 : vector<16x768xf32>
    %79 = vector.broadcast %2 : vector<1x768xf32> to vector<16x768xf32>
    %80 = arith.mulf %78, %79 : vector<16x768xf32>
    %cst_81 = arith.constant dense<0.000000e+00> : vector<16xf32>
    %81 = vector.multi_reduction <add>, %80, %cst_81 [1] : vector<16x768xf32> to vector<16xf32>
    %82 = vector.shape_cast %81 : vector<16xf32> to vector<16x1xf32>
    %cst_82 = arith.constant 0.001953125 : f32
    %83 = vector.broadcast %cst_82 : f32 to vector<16x1xf32>
    %84 = arith.mulf %82, %83 : vector<16x1xf32>
    %85 = vector.broadcast %84 : vector<16x1xf32> to vector<16x768xf32>
    %86 = arith.subf %78, %85 : vector<16x768xf32>
    %87 = vector.broadcast %2 : vector<1x768xf32> to vector<16x768xf32>
    %88 = arith.mulf %86, %87 : vector<16x768xf32>
    %89 = arith.mulf %88, %88 : vector<16x768xf32>
    %cst_83 = arith.constant dense<0.000000e+00> : vector<16xf32>
    %90 = vector.multi_reduction <add>, %89, %cst_83 [1] : vector<16x768xf32> to vector<16xf32>
    %91 = vector.shape_cast %90 : vector<16xf32> to vector<16x1xf32>
    %cst_84 = arith.constant 0.001953125 : f32
    %92 = vector.broadcast %cst_84 : f32 to vector<16x1xf32>
    %93 = arith.mulf %91, %92 : vector<16x1xf32>
    %cst_85 = arith.constant 9.99999974E-6 : f32
    %94 = vector.broadcast %cst_85 : f32 to vector<16x1xf32>
    %95 = arith.addf %93, %94 : vector<16x1xf32>
    %96 = math.rsqrt %95 : vector<16x1xf32>
    %97 = arith.mulf %0, %96 : vector<16x1xf32>
    %98 = arith.mulf %84, %97 : vector<16x1xf32>
    %99 = arith.subf %1, %98 : vector<16x1xf32>
    %100 = vector.broadcast %97 : vector<16x1xf32> to vector<16x768xf32>
    %101 = arith.mulf %78, %100 : vector<16x768xf32>
    %102 = vector.broadcast %99 : vector<16x1xf32> to vector<16x768xf32>
    %103 = arith.addf %101, %102 : vector<16x768xf32>
    %cst_86 = arith.constant 0.000000e+00 : f32
    %104 = vector.broadcast %cst_86 : f32 to vector<16x768xf32>
    %105 = arith.maximumf %103, %104 : vector<16x768xf32>
    %106 = vector.broadcast %2 : vector<1x768xf32> to vector<16x768xf32>
    %107 = arith.mulf %105, %106 : vector<16x768xf32>
    %108 = arith.truncf %107 : vector<16x768xf32> to vector<16x768xbf16>
    %c0_87 = arith.constant 0 : index
    %c19_88 = arith.constant 19 : index
    %109 = vector.load %arg9[%c0_87, %c19_88] : memref<16x896xbf16, #tpu.memory_space<vmem>>, vector<16x768xbf16>
    tpu.vector_store %arg9[%c0_87, %c19_88], %108 {strides = array<i32>} : memref<16x896xbf16, #tpu.memory_space<vmem>>, vector<16x768xbf16>,
    %c0_89 = arith.constant 0 : index
    %c0_90 = arith.constant 0 : index
    %110 = vector.load %arg9[%c0_89, %c0_90] : memref<16x896xbf16, #tpu.memory_space<vmem>>, vector<16x768xbf16>
    %c0_91 = arith.constant 0 : index
    %c0_92 = arith.constant 0 : index
    %111 = vector.load %arg8[%c0_91, %c0_92] : memref<144x768xbf16, #tpu.memory_space<vmem>>, vector<16x768xbf16>
    tpu.vector_store %arg8[%c0_91, %c0_92], %110 {strides = array<i32>} : memref<144x768xbf16, #tpu.memory_space<vmem>>, vector<16x768xbf16>,
    %c0_93 = arith.constant 0 : index
    %c1_94 = arith.constant 1 : index
    %112 = vector.load %arg9[%c0_93, %c1_94] : memref<16x896xbf16, #tpu.memory_space<vmem>>, vector<16x768xbf16>
    %c16_95 = arith.constant 16 : index
    %c0_96 = arith.constant 0 : index
    %113 = vector.load %arg8[%c16_95, %c0_96] : memref<144x768xbf16, #tpu.memory_space<vmem>>, vector<16x768xbf16>
    tpu.vector_store %arg8[%c16_95, %c0_96], %112 {strides = array<i32>} : memref<144x768xbf16, #tpu.memory_space<vmem>>, vector<16x768xbf16>,
    %c0_97 = arith.constant 0 : index
    %c2_98 = arith.constant 2 : index
    %114 = vector.load %arg9[%c0_97, %c2_98] : memref<16x896xbf16, #tpu.memory_space<vmem>>, vector<16x768xbf16>
    %c32_99 = arith.constant 32 : index
    %c0_100 = arith.constant 0 : index
    %115 = vector.load %arg8[%c32_99, %c0_100] : memref<144x768xbf16, #tpu.memory_space<vmem>>, vector<16x768xbf16>
    tpu.vector_store %arg8[%c32_99, %c0_100], %114 {strides = array<i32>} : memref<144x768xbf16, #tpu.memory_space<vmem>>, vector<16x768xbf16>,
    %c0_101 = arith.constant 0 : index
    %c18_102 = arith.constant 18 : index
    %116 = vector.load %arg9[%c0_101, %c18_102] : memref<16x896xbf16, #tpu.memory_space<vmem>>, vector<16x768xbf16>
    %c48_103 = arith.constant 48 : index
    %c0_104 = arith.constant 0 : index
    %117 = vector.load %arg8[%c48_103, %c0_104] : memref<144x768xbf16, #tpu.memory_space<vmem>>, vector<16x768xbf16>
    tpu.vector_store %arg8[%c48_103, %c0_104], %116 {strides = array<i32>} : memref<144x768xbf16, #tpu.memory_space<vmem>>, vector<16x768xbf16>,
    %c0_105 = arith.constant 0 : index
    %c19_106 = arith.constant 19 : index
    %118 = vector.load %arg9[%c0_105, %c19_106] : memref<16x896xbf16, #tpu.memory_space<vmem>>, vector<16x768xbf16>
    %c64_107 = arith.constant 64 : index
    %c0_108 = arith.constant 0 : index
    %119 = vector.load %arg8[%c64_107, %c0_108] : memref<144x768xbf16, #tpu.memory_space<vmem>>, vector<16x768xbf16>
    tpu.vector_store %arg8[%c64_107, %c0_108], %118 {strides = array<i32>} : memref<144x768xbf16, #tpu.memory_space<vmem>>, vector<16x768xbf16>,
    %c0_109 = arith.constant 0 : index
    %c20_110 = arith.constant 20 : index
    %120 = vector.load %arg9[%c0_109, %c20_110] : memref<16x896xbf16, #tpu.memory_space<vmem>>, vector<16x768xbf16>
    %c80_111 = arith.constant 80 : index
    %c0_112 = arith.constant 0 : index
    %121 = vector.load %arg8[%c80_111, %c0_112] : memref<144x768xbf16, #tpu.memory_space<vmem>>, vector<16x768xbf16>
    tpu.vector_store %arg8[%c80_111, %c0_112], %120 {strides = array<i32>} : memref<144x768xbf16, #tpu.memory_space<vmem>>, vector<16x768xbf16>,
    %c0_113 = arith.constant 0 : index
    %c36_114 = arith.constant 36 : index
    %122 = vector.load %arg9[%c0_113, %c36_114] : memref<16x896xbf16, #tpu.memory_space<vmem>>, vector<16x768xbf16>
    %c96_115 = arith.constant 96 : index
    %c0_116 = arith.constant 0 : index
    %123 = vector.load %arg8[%c96_115, %c0_116] : memref<144x768xbf16, #tpu.memory_space<vmem>>, vector<16x768xbf16>
    tpu.vector_store %arg8[%c96_115, %c0_116], %122 {strides = array<i32>} : memref<144x768xbf16, #tpu.memory_space<vmem>>, vector<16x768xbf16>,
    %c0_117 = arith.constant 0 : index
    %c37_118 = arith.constant 37 : index
    %124 = vector.load %arg9[%c0_117, %c37_118] : memref<16x896xbf16, #tpu.memory_space<vmem>>, vector<16x768xbf16>
    %c112_119 = arith.constant 112 : index
    %c0_120 = arith.constant 0 : index
    %125 = vector.load %arg8[%c112_119, %c0_120] : memref<144x768xbf16, #tpu.memory_space<vmem>>, vector<16x768xbf16>
    tpu.vector_store %arg8[%c112_119, %c0_120], %124 {strides = array<i32>} : memref<144x768xbf16, #tpu.memory_space<vmem>>, vector<16x768xbf16>,
    %c0_121 = arith.constant 0 : index
    %c38_122 = arith.constant 38 : index
    %126 = vector.load %arg9[%c0_121, %c38_122] : memref<16x896xbf16, #tpu.memory_space<vmem>>, vector<16x768xbf16>
    %c128_123 = arith.constant 128 : index
    %c0_124 = arith.constant 0 : index
    %127 = vector.load %arg8[%c128_123, %c0_124] : memref<144x768xbf16, #tpu.memory_space<vmem>>, vector<16x768xbf16>
    tpu.vector_store %arg8[%c128_123, %c0_124], %126 {strides = array<i32>} : memref<144x768xbf16, #tpu.memory_space<vmem>>, vector<16x768xbf16>,
    %c0_125 = arith.constant 0 : index
    %c0_126 = arith.constant 0 : index
    %128 = vector.load %arg8[%c0_125, %c0_126] : memref<144x768xbf16, #tpu.memory_space<vmem>>, vector<144x768xbf16>
    %cst_127 = arith.constant dense<0.000000e+00> : vector<16x768xf32>
    %129 = tpu.matmul %53, %128, %cst_127 {dimension_numbers = #tpu.dot_dimension_numbers<[1], [0], [0], [1], [0, 0, 1, 1], [], []>} : vector<16x144xbf16>, vector<144x768xbf16>, vector<16x768xf32> -> vector<16x768xf32>
    %130 = arith.addf %23, %129 : vector<16x768xf32>
    %131 = vector.broadcast %2 : vector<1x768xf32> to vector<16x768xf32>
    %132 = arith.mulf %130, %131 : vector<16x768xf32>
    %cst_128 = arith.constant dense<0.000000e+00> : vector<16xf32>
    %133 = vector.multi_reduction <add>, %132, %cst_128 [1] : vector<16x768xf32> to vector<16xf32>
    %134 = vector.shape_cast %133 : vector<16xf32> to vector<16x1xf32>
    %cst_129 = arith.constant 0.001953125 : f32
    %135 = vector.broadcast %cst_129 : f32 to vector<16x1xf32>
    %136 = arith.mulf %134, %135 : vector<16x1xf32>
    %137 = vector.broadcast %136 : vector<16x1xf32> to vector<16x768xf32>
    %138 = arith.subf %130, %137 : vector<16x768xf32>
    %139 = vector.broadcast %2 : vector<1x768xf32> to vector<16x768xf32>
    %140 = arith.mulf %138, %139 : vector<16x768xf32>
    %141 = arith.mulf %140, %140 : vector<16x768xf32>
    %cst_130 = arith.constant dense<0.000000e+00> : vector<16xf32>
    %142 = vector.multi_reduction <add>, %141, %cst_130 [1] : vector<16x768xf32> to vector<16xf32>
    %143 = vector.shape_cast %142 : vector<16xf32> to vector<16x1xf32>
    %cst_131 = arith.constant 0.001953125 : f32
    %144 = vector.broadcast %cst_131 : f32 to vector<16x1xf32>
    %145 = arith.mulf %143, %144 : vector<16x1xf32>
    %cst_132 = arith.constant 9.99999974E-6 : f32
    %146 = vector.broadcast %cst_132 : f32 to vector<16x1xf32>
    %147 = arith.addf %145, %146 : vector<16x1xf32>
    %148 = math.rsqrt %147 : vector<16x1xf32>
    %149 = arith.mulf %0, %148 : vector<16x1xf32>
    %150 = arith.mulf %136, %149 : vector<16x1xf32>
    %151 = arith.subf %1, %150 : vector<16x1xf32>
    %152 = vector.broadcast %149 : vector<16x1xf32> to vector<16x768xf32>
    %153 = arith.mulf %130, %152 : vector<16x768xf32>
    %154 = vector.broadcast %151 : vector<16x1xf32> to vector<16x768xf32>
    %155 = arith.addf %153, %154 : vector<16x768xf32>
    %cst_133 = arith.constant 0.000000e+00 : f32
    %156 = vector.broadcast %cst_133 : f32 to vector<16x768xf32>
    %157 = arith.maximumf %155, %156 : vector<16x768xf32>
    %c0_134 = arith.constant 0 : index
    %c0_135 = arith.constant 0 : index
    %158 = vector.load %arg7[%c0_134, %c0_135] : memref<16x768xf32, #tpu.memory_space<vmem>>, vector<16x768xf32>
    tpu.vector_store %arg7[%c0_134, %c0_135], %157 {strides = array<i32>} : memref<16x768xf32, #tpu.memory_space<vmem>>, vector<16x768xf32>,
    return
  }
}

</mosaic_0001>

<llo_original>
// kernel: tpu_custom_call.1
$region0: #{tpu_custom_call.1}
  #allocation0 [shape = 'u32[]', space=smem, size = 0x4, offset = 0x4, fixed_abs, tag = 'smem constant byte address 0x4 - core index']
  #allocation1 [shape = 'u32[72,128]{1,0:T(1,128)}', space=vmem, size = 0x9000, scoped, tag = 'internal scratch']
  #allocation2 [shape = 'bf16[144,768]{1,0:T(8,128)(2,1)}', space=vmem, size = 0x36000, scoped, tag = 'scratch operand']
  #allocation3 [shape = 'bf16[16,896]{1,0:T(8,128)(2,1)}', space=vmem, size = 0x7000, scoped, tag = 'scratch operand']
  %s0 = inlined_call_operand.hbm [shape: bf16[16,896], index: 0, kind: input, shape index: {}]
  %s1 = inlined_call_operand.vmem [shape: bf16[16,144], index: 1, kind: input, shape index: {}]
  %s2 = inlined_call_operand.vmem [shape: bf16[16,144], index: 2, kind: input, shape index: {}]
  %s3 = inlined_call_operand.vmem [shape: f32[16,1], index: 3, kind: input, shape index: {}]
  %s4 = inlined_call_operand.vmem [shape: f32[16,1], index: 4, kind: input, shape index: {}]
  %s5 = inlined_call_operand.vmem [shape: f32[16,1], index: 5, kind: input, shape index: {}]
  %s6 = inlined_call_operand.vmem [shape: f32[1,768], index: 6, kind: input, shape index: {}]
  %s7 = inlined_call_operand.hbm [shape: f32[16,768], index: 7, kind: output, shape index: {}]
  %s8 = sld [smem:[#allocation0]]
  $region42: #{tpu_custom_call.1} parent=0
    _
  %s10 = ssub.s32 1, %s8
  %s11 = scalar_select 0, %s10, %s8
  $region1: #{tpu_custom_call.1} parent=0
    #allocation4 [shape = 'u8[28672]{0}', space=vmem, size = 0x7000, scoped, tag = 'input window, operand 0, single buffered']
    #allocation5 [shape = 's32[1]{0}', space=sflag, size = 0x4, scoped, tag = 'scoped memory for tpu_custom_call.1']
    #allocation6 [shape = 's32[1]{0}', space=sflag, size = 0x4, scoped, tag = 'scoped memory for tpu_custom_call.1']
    #allocation7 [shape = 'u8[49152]{0}', space=vmem, size = 0xc000, scoped, tag = 'output window, operand 0, single buffered']
    %12 = vsyncpa [#allocation5], 0
    %13 = vsyncpa [#allocation6], 0
    // Predicated region
    $region2: #{tpu_custom_call.1} parent=1 // pred_check
      _
    $region3: #{tpu_custom_call.1} parent=1 // pred_check_branch
      %15 = sbr.rel (0) target = $region5
    $region4: #{tpu_custom_call.1} parent=1 // pred_region
      %17 = vsyncadd [#allocation5], 0
      %s18 = sshll.u32 %s0, 4
      %s19 = int_to_ptr.hbm [resolvable:$true] %s18
      %s20 = sshll.u32 [#allocation4], 4
      %s21 = int_to_ptr.vmem [resolvable:$true] %s20
      %26 = dma.hbm_to_vmem [thread:$0]  %s19, 896, %s21, [#allocation5], 448, 448, 28
    $region5: #{tpu_custom_call.1} parent=1 // pred_fallthru
      _
    // Predicated region
    $region6: #{tpu_custom_call.1} parent=1 // pred_check
      _
    $region7: #{tpu_custom_call.1} parent=1 // pred_check_branch
      %28 = sbr.rel (0) target = $region9
    $region8: #{tpu_custom_call.1} parent=1 // pred_region
      _
    $region9: #{tpu_custom_call.1} parent=1 // pred_fallthru
      _
    // Predicated region
    $region10: #{tpu_custom_call.1} parent=1 // pred_check
      _
    $region11: #{tpu_custom_call.1} parent=1 // pred_check_branch
      %30 = sbr.rel (0) target = $region13
    $region12: #{tpu_custom_call.1} parent=1 // pred_region
      _
    $region13: #{tpu_custom_call.1} parent=1 // pred_fallthru
      _
    // Predicated region
    $region14: #{tpu_custom_call.1} parent=1 // pred_check
      _
    $region15: #{tpu_custom_call.1} parent=1 // pred_check_branch
      %32 = sbr.rel (0) target = $region17
    $region16: #{tpu_custom_call.1} parent=1 // pred_region
      _
    $region17: #{tpu_custom_call.1} parent=1 // pred_fallthru
      _
    // Predicated region
    $region18: #{tpu_custom_call.1} parent=1 // pred_check
      _
    $region19: #{tpu_custom_call.1} parent=1 // pred_check_branch
      %34 = sbr.rel (0) target = $region21
    $region20: #{tpu_custom_call.1} parent=1 // pred_region
      _
    $region21: #{tpu_custom_call.1} parent=1 // pred_fallthru
      _
    // Predicated region
    $region22: #{tpu_custom_call.1} parent=1 // pred_check
      _
    $region23: #{tpu_custom_call.1} parent=1 // pred_check_branch
      %36 = sbr.rel (0) target = $region25
    $region24: #{tpu_custom_call.1} parent=1 // pred_region
      _
    $region25: #{tpu_custom_call.1} parent=1 // pred_fallthru
      _
    // Predicated region
    $region26: #{tpu_custom_call.1} parent=1 // pred_check
      _
    $region27: #{tpu_custom_call.1} parent=1 // pred_check_branch
      %38 = sbr.rel (0) target = $region29
    $region28: #{tpu_custom_call.1} parent=1 // pred_region
      _
    $region29: #{tpu_custom_call.1} parent=1 // pred_fallthru
      _
    // Predicated region
    $region30: #{tpu_custom_call.1} parent=1 // pred_check
      _
    $region31: #{tpu_custom_call.1} parent=1 // pred_check_branch
      %40 = sbr.rel (0) target = $region33
    $region32: #{tpu_custom_call.1} parent=1 // pred_region
      %42 = dma.done [#allocation5], 896
    $region33: #{tpu_custom_call.1} parent=1 // pred_fallthru
      _
    %v44 = vld [vmem:[%s3] sm:$0xff]
    %v45 = vld [vmem:[%s3 + $0x8] sm:$0xff]
    %v46 = vld [vmem:[%s4] sm:$0xff]
    %v47 = vld [vmem:[%s4 + $0x8] sm:$0xff]
    %v48 = vld [vmem:[%s6] sm:$0x3f]
    %v49 = vld [vmem:[#allocation4] sm:$0xff]
    %v50 = vld [vmem:[#allocation4 + $0x8] sm:$0xff]
    %v51 = vld [vmem:[#allocation4 + $0x10] sm:$0xff]
    %v52 = vld [vmem:[#allocation4 + $0x1c] sm:$0xff]
    %v53 = vld [vmem:[#allocation4 + $0x24] sm:$0xff]
    %v54 = vld [vmem:[#allocation4 + $0x2c] sm:$0xff]
    %55 = vst [vmem:[#allocation2] sm:$0xff] %v49
    %56 = vst [vmem:[#allocation2 + $0x8] sm:$0xff] %v50
    %57 = vst [vmem:[#allocation2 + $0x10] sm:$0xff] %v51
    %58 = vst [vmem:[#allocation2 + $0x18] sm:$0xff] %v52
    %59 = vst [vmem:[#allocation2 + $0x20] sm:$0xff] %v53
    %60 = vst [vmem:[#allocation2 + $0x28] sm:$0xff] %v54
    %v61 = vld [vmem:[#allocation4] sm:$0xff]
    %v62 = vld [vmem:[#allocation4 + $0x8] sm:$0xff]
    %v63 = vld [vmem:[#allocation4 + $0x10] sm:$0xff]
    %v64 = vld [vmem:[#allocation4 + $0x18] sm:$0xf]
    %v65 = vld [vmem:[#allocation4 + $0x1c] sm:$0xff]
    %v66 = vld [vmem:[#allocation4 + $0x24] sm:$0xff]
    %v67 = vld [vmem:[#allocation4 + $0x2c] sm:$0xff]
    %v68 = vld [vmem:[#allocation4 + $0x34] sm:$0xf]
    %77 = vrot.lane.b32.xlu0 %v61, 127
    %v78 = vpop.permute.xlu0 %77
    %79 = vrot.lane.b32.xlu0 %v62, 127
    %v80 = vpop.permute.xlu0 %79
    %81 = vrot.lane.b32.xlu0 %v63, 127
    %v82 = vpop.permute.xlu0 %81
    %83 = vrot.lane.b32.xlu0 %v64, 127
    %v84 = vpop.permute.xlu0 %83
    %85 = vrot.lane.b32.xlu0 %v65, 127
    %v86 = vpop.permute.xlu0 %85
    %87 = vrot.lane.b32.xlu0 %v66, 127
    %v88 = vpop.permute.xlu0 %87
    %89 = vrot.lane.b32.xlu0 %v67, 127
    %v90 = vpop.permute.xlu0 %89
    %91 = vrot.lane.b32.xlu0 %v68, 127
    %v92 = vpop.permute.xlu0 %91
    %v93 = vrot.slane %v78, 4
    %v94 = vrot.slane %v80, 4
    %v95 = vrot.slane %v82, 4
    %v96 = vrot.slane %v84, 4
    %v97 = vrot.slane %v86, 4
    %v98 = vrot.slane %v88, 4
    %v99 = vrot.slane %v90, 4
    %v100 = vrot.slane %v92, 4
    %vm101 = vcmask 1043456
    %v102 = vsel %vm101, %v93, %v94
    %vm103 = vcmask 1039360
    %v104 = vsel %vm103, %v78, %v102
    %v105 = vsel %vm101, %v94, %v95
    %v106 = vsel %vm103, %v80, %v105
    %v107 = vsel %vm101, %v95, %v96
    %v108 = vsel %vm103, %v82, %v107
    %v109 = vsel %vm101, %v97, %v98
    %v110 = vsel %vm103, %v86, %v109
    %v111 = vsel %vm101, %v98, %v99
    %v112 = vsel %vm103, %v88, %v111
    %v113 = vsel %vm101, %v99, %v100
    %v114 = vsel %vm103, %v90, %v113
    %121 = vst [vmem:[#allocation2 + $0x30] sm:$0xff] %v104
    %122 = vst [vmem:[#allocation2 + $0x38] sm:$0xff] %v106
    %123 = vst [vmem:[#allocation2 + $0x40] sm:$0xff] %v108
    %124 = vst [vmem:[#allocation2 + $0x48] sm:$0xff] %v110
    %125 = vst [vmem:[#allocation2 + $0x50] sm:$0xff] %v112
    %126 = vst [vmem:[#allocation2 + $0x58] sm:$0xff] %v114
    %v127 = vld [vmem:[#allocation4] sm:$0xff]
    %v128 = vld [vmem:[#allocation4 + $0x8] sm:$0xff]
    %v129 = vld [vmem:[#allocation4 + $0x10] sm:$0xff]
    %v130 = vld [vmem:[#allocation4 + $0x18] sm:$0xf]
    %v131 = vld [vmem:[#allocation4 + $0x1c] sm:$0xff]
    %v132 = vld [vmem:[#allocation4 + $0x24] sm:$0xff]
    %v133 = vld [vmem:[#allocation4 + $0x2c] sm:$0xff]
    %v134 = vld [vmem:[#allocation4 + $0x34] sm:$0xf]
    %143 = vrot.lane.b32.xlu0 %v127, 126
    %v144 = vpop.permute.xlu0 %143
    %145 = vrot.lane.b32.xlu0 %v128, 126
    %v146 = vpop.permute.xlu0 %145
    %147 = vrot.lane.b32.xlu0 %v129, 126
    %v148 = vpop.permute.xlu0 %147
    %149 = vrot.lane.b32.xlu0 %v130, 126
    %v150 = vpop.permute.xlu0 %149
    %151 = vrot.lane.b32.xlu0 %v131, 126
    %v152 = vpop.permute.xlu0 %151
    %153 = vrot.lane.b32.xlu0 %v132, 126
    %v154 = vpop.permute.xlu0 %153
    %155 = vrot.lane.b32.xlu0 %v133, 126
    %v156 = vpop.permute.xlu0 %155
    %157 = vrot.lane.b32.xlu0 %v134, 126
    %v158 = vpop.permute.xlu0 %157
    %v159 = vrot.slane %v144, 4
    %v160 = vrot.slane %v146, 4
    %v161 = vrot.slane %v148, 4
    %v162 = vrot.slane %v150, 4
    %v163 = vrot.slane %v152, 4
    %v164 = vrot.slane %v154, 4
    %v165 = vrot.slane %v156, 4
    %v166 = vrot.slane %v158, 4
    %v167 = vsel %vm101, %v159, %v160
    %vm168 = vcmask 1031168
    %v169 = vsel %vm168, %v144, %v167
    %v170 = vsel %vm101, %v160, %v161
    %v171 = vsel %vm168, %v146, %v170
    %v172 = vsel %vm101, %v161, %v162
    %v173 = vsel %vm168, %v148, %v172
    %v174 = vsel %vm101, %v163, %v164
    %v175 = vsel %vm168, %v152, %v174
    %v176 = vsel %vm101, %v164, %v165
    %v177 = vsel %vm168, %v154, %v176
    %v178 = vsel %vm101, %v165, %v166
    %v179 = vsel %vm168, %v156, %v178
    %186 = vst [vmem:[#allocation2 + $0x60] sm:$0xff] %v169
    %187 = vst [vmem:[#allocation2 + $0x68] sm:$0xff] %v171
    %188 = vst [vmem:[#allocation2 + $0x70] sm:$0xff] %v173
    %189 = vst [vmem:[#allocation2 + $0x78] sm:$0xff] %v175
    %190 = vst [vmem:[#allocation2 + $0x80] sm:$0xff] %v177
    %191 = vst [vmem:[#allocation2 + $0x88] sm:$0xff] %v179
    %v192 = vld [vmem:[#allocation4] sm:$0xff]
    %v193 = vld [vmem:[#allocation4 + $0x8] sm:$0xff]
    %v194 = vld [vmem:[#allocation4 + $0x10] sm:$0xff]
    %v195 = vld [vmem:[#allocation4 + $0x18] sm:$0xf]
    %v196 = vld [vmem:[#allocation4 + $0x1c] sm:$0xff]
    %v197 = vld [vmem:[#allocation4 + $0x24] sm:$0xff]
    %v198 = vld [vmem:[#allocation4 + $0x2c] sm:$0xff]
    %v199 = vld [vmem:[#allocation4 + $0x34] sm:$0xf]
    %208 = vrot.lane.b32.xlu0 %v192, 110
    %v209 = vpop.permute.xlu0 %208
    %210 = vrot.lane.b32.xlu0 %v193, 110
    %v211 = vpop.permute.xlu0 %210
    %212 = vrot.lane.b32.xlu0 %v194, 110
    %v213 = vpop.permute.xlu0 %212
    %214 = vrot.lane.b32.xlu0 %v195, 110
    %v215 = vpop.permute.xlu0 %214
    %216 = vrot.lane.b32.xlu0 %v196, 110
    %v217 = vpop.permute.xlu0 %216
    %218 = vrot.lane.b32.xlu0 %v197, 110
    %v219 = vpop.permute.xlu0 %218
    %220 = vrot.lane.b32.xlu0 %v198, 110
    %v221 = vpop.permute.xlu0 %220
    %222 = vrot.lane.b32.xlu0 %v199, 110
    %v223 = vpop.permute.xlu0 %222
    %v224 = vrot.slane %v209, 4
    %v225 = vrot.slane %v211, 4
    %v226 = vrot.slane %v213, 4
    %v227 = vrot.slane %v215, 4
    %v228 = vrot.slane %v217, 4
    %v229 = vrot.slane %v219, 4
    %v230 = vrot.slane %v221, 4
    %v231 = vrot.slane %v223, 4
    %v232 = vsel %vm101, %v224, %v225
    %vm233 = vcmask 900096
    %v234 = vsel %vm233, %v209, %v232
    %v235 = vsel %vm101, %v225, %v226
    %v236 = vsel %vm233, %v211, %v235
    %v237 = vsel %vm101, %v226, %v227
    %v238 = vsel %vm233, %v213, %v237
    %v239 = vsel %vm101, %v228, %v229
    %v240 = vsel %vm233, %v217, %v239
    %v241 = vsel %vm101, %v229, %v230
    %v242 = vsel %vm233, %v219, %v241
    %v243 = vsel %vm101, %v230, %v231
    %v244 = vsel %vm233, %v221, %v243
    %251 = vst [vmem:[#allocation2 + $0x90] sm:$0xff] %v234
    %252 = vst [vmem:[#allocation2 + $0x98] sm:$0xff] %v236
    %253 = vst [vmem:[#allocation2 + $0xa0] sm:$0xff] %v238
    %254 = vst [vmem:[#allocation2 + $0xa8] sm:$0xff] %v240
    %255 = vst [vmem:[#allocation2 + $0xb0] sm:$0xff] %v242
    %256 = vst [vmem:[#allocation2 + $0xb8] sm:$0xff] %v244
    %v257 = vld [vmem:[#allocation4] sm:$0xff]
    %v258 = vld [vmem:[#allocation4 + $0x8] sm:$0xff]
    %v259 = vld [vmem:[#allocation4 + $0x10] sm:$0xff]
    %v260 = vld [vmem:[#allocation4 + $0x18] sm:$0xf]
    %v261 = vld [vmem:[#allocation4 + $0x1c] sm:$0xff]
    %v262 = vld [vmem:[#allocation4 + $0x24] sm:$0xff]
    %v263 = vld [vmem:[#allocation4 + $0x2c] sm:$0xff]
    %v264 = vld [vmem:[#allocation4 + $0x34] sm:$0xf]
    %273 = vrot.lane.b32.xlu0 %v257, 109
    %v274 = vpop.permute.xlu0 %273
    %275 = vrot.lane.b32.xlu0 %v258, 109
    %v276 = vpop.permute.xlu0 %275
    %277 = vrot.lane.b32.xlu0 %v259, 109
    %v278 = vpop.permute.xlu0 %277
    %279 = vrot.lane.b32.xlu0 %v260, 109
    %v280 = vpop.permute.xlu0 %279
    %281 = vrot.lane.b32.xlu0 %v261, 109
    %v282 = vpop.permute.xlu0 %281
    %283 = vrot.lane.b32.xlu0 %v262, 109
    %v284 = vpop.permute.xlu0 %283
    %285 = vrot.lane.b32.xlu0 %v263, 109
    %v286 = vpop.permute.xlu0 %285
    %287 = vrot.lane.b32.xlu0 %v264, 109
    %v288 = vpop.permute.xlu0 %287
    %v289 = vrot.slane %v274, 4
    %v290 = vrot.slane %v276, 4
    %v291 = vrot.slane %v278, 4
    %v292 = vrot.slane %v280, 4
    %v293 = vrot.slane %v282, 4
    %v294 = vrot.slane %v284, 4
    %v295 = vrot.slane %v286, 4
    %v296 = vrot.slane %v288, 4
    %v297 = vsel %vm101, %v289, %v290
    %vm298 = vcmask 891904
    %v299 = vsel %vm298, %v274, %v297
    %v300 = vsel %vm101, %v290, %v291
    %v301 = vsel %vm298, %v276, %v300
    %v302 = vsel %vm101, %v291, %v292
    %v303 = vsel %vm298, %v278, %v302
    %v304 = vsel %vm101, %v293, %v294
    %v305 = vsel %vm298, %v282, %v304
    %v306 = vsel %vm101, %v294, %v295
    %v307 = vsel %vm298, %v284, %v306
    %v308 = vsel %vm101, %v295, %v296
    %v309 = vsel %vm298, %v286, %v308
    %316 = vst [vmem:[#allocation2 + $0xc0] sm:$0xff] %v299
    %317 = vst [vmem:[#allocation2 + $0xc8] sm:$0xff] %v301
    %318 = vst [vmem:[#allocation2 + $0xd0] sm:$0xff] %v303
    %319 = vst [vmem:[#allocation2 + $0xd8] sm:$0xff] %v305
    %320 = vst [vmem:[#allocation2 + $0xe0] sm:$0xff] %v307
    %321 = vst [vmem:[#allocation2 + $0xe8] sm:$0xff] %v309
    %v322 = vld [vmem:[#allocation4] sm:$0xff]
    %v323 = vld [vmem:[#allocation4 + $0x8] sm:$0xff]
    %v324 = vld [vmem:[#allocation4 + $0x10] sm:$0xff]
    %v325 = vld [vmem:[#allocation4 + $0x18] sm:$0xf]
    %v326 = vld [vmem:[#allocation4 + $0x1c] sm:$0xff]
    %v327 = vld [vmem:[#allocation4 + $0x24] sm:$0xff]
    %v328 = vld [vmem:[#allocation4 + $0x2c] sm:$0xff]
    %v329 = vld [vmem:[#allocation4 + $0x34] sm:$0xf]
    %338 = vrot.lane.b32.xlu0 %v322, 108
    %v339 = vpop.permute.xlu0 %338
    %340 = vrot.lane.b32.xlu0 %v323, 108
    %v341 = vpop.permute.xlu0 %340
    %342 = vrot.lane.b32.xlu0 %v324, 108
    %v343 = vpop.permute.xlu0 %342
    %344 = vrot.lane.b32.xlu0 %v325, 108
    %v345 = vpop.permute.xlu0 %344
    %346 = vrot.lane.b32.xlu0 %v326, 108
    %v347 = vpop.permute.xlu0 %346
    %348 = vrot.lane.b32.xlu0 %v327, 108
    %v349 = vpop.permute.xlu0 %348
    %350 = vrot.lane.b32.xlu0 %v328, 108
    %v351 = vpop.permute.xlu0 %350
    %352 = vrot.lane.b32.xlu0 %v329, 108
    %v353 = vpop.permute.xlu0 %352
    %v354 = vrot.slane %v339, 4
    %v355 = vrot.slane %v341, 4
    %v356 = vrot.slane %v343, 4
    %v357 = vrot.slane %v345, 4
    %v358 = vrot.slane %v347, 4
    %v359 = vrot.slane %v349, 4
    %v360 = vrot.slane %v351, 4
    %v361 = vrot.slane %v353, 4
    %v362 = vsel %vm101, %v354, %v355
    %vm363 = vcmask 883712
    %v364 = vsel %vm363, %v339, %v362
    %v365 = vsel %vm101, %v355, %v356
    %v366 = vsel %vm363, %v341, %v365
    %v367 = vsel %vm101, %v356, %v357
    %v368 = vsel %vm363, %v343, %v367
    %v369 = vsel %vm101, %v358, %v359
    %v370 = vsel %vm363, %v347, %v369
    %v371 = vsel %vm101, %v359, %v360
    %v372 = vsel %vm363, %v349, %v371
    %v373 = vsel %vm101, %v360, %v361
    %v374 = vsel %vm363, %v351, %v373
    %381 = vst [vmem:[#allocation2 + $0xf0] sm:$0xff] %v364
    %382 = vst [vmem:[#allocation2 + $0xf8] sm:$0xff] %v366
    %383 = vst [vmem:[#allocation2 + $0x100] sm:$0xff] %v368
    %384 = vst [vmem:[#allocation2 + $0x108] sm:$0xff] %v370
    %385 = vst [vmem:[#allocation2 + $0x110] sm:$0xff] %v372
    %386 = vst [vmem:[#allocation2 + $0x118] sm:$0xff] %v374
    %v387 = vld [vmem:[#allocation4] sm:$0xff]
    %v388 = vld [vmem:[#allocation4 + $0x8] sm:$0xff]
    %v389 = vld [vmem:[#allocation4 + $0x10] sm:$0xff]
    %v390 = vld [vmem:[#allocation4 + $0x18] sm:$0xf]
    %v391 = vld [vmem:[#allocation4 + $0x1c] sm:$0xff]
    %v392 = vld [vmem:[#allocation4 + $0x24] sm:$0xff]
    %v393 = vld [vmem:[#allocation4 + $0x2c] sm:$0xff]
    %v394 = vld [vmem:[#allocation4 + $0x34] sm:$0xf]
    %403 = vrot.lane.b32.xlu0 %v387, 92
    %v404 = vpop.permute.xlu0 %403
    %405 = vrot.lane.b32.xlu0 %v388, 92
    %v406 = vpop.permute.xlu0 %405
    %407 = vrot.lane.b32.xlu0 %v389, 92
    %v408 = vpop.permute.xlu0 %407
    %409 = vrot.lane.b32.xlu0 %v390, 92
    %v410 = vpop.permute.xlu0 %409
    %411 = vrot.lane.b32.xlu0 %v391, 92
    %v412 = vpop.permute.xlu0 %411
    %413 = vrot.lane.b32.xlu0 %v392, 92
    %v414 = vpop.permute.xlu0 %413
    %415 = vrot.lane.b32.xlu0 %v393, 92
    %v416 = vpop.permute.xlu0 %415
    %417 = vrot.lane.b32.xlu0 %v394, 92
    %v418 = vpop.permute.xlu0 %417
    %v419 = vrot.slane %v404, 4
    %v420 = vrot.slane %v406, 4
    %v421 = vrot.slane %v408, 4
    %v422 = vrot.slane %v410, 4
    %v423 = vrot.slane %v412, 4
    %v424 = vrot.slane %v414, 4
    %v425 = vrot.slane %v416, 4
    %v426 = vrot.slane %v418, 4
    %v427 = vsel %vm101, %v419, %v420
    %vm428 = vcmask 752640
    %v429 = vsel %vm428, %v404, %v427
    %v430 = vsel %vm101, %v420, %v421
    %v431 = vsel %vm428, %v406, %v430
    %v432 = vsel %vm101, %v421, %v422
    %v433 = vsel %vm428, %v408, %v432
    %v434 = vsel %vm101, %v423, %v424
    %v435 = vsel %vm428, %v412, %v434
    %v436 = vsel %vm101, %v424, %v425
    %v437 = vsel %vm428, %v414, %v436
    %v438 = vsel %vm101, %v425, %v426
    %v439 = vsel %vm428, %v416, %v438
    %446 = vst [vmem:[#allocation2 + $0x120] sm:$0xff] %v429
    %447 = vst [vmem:[#allocation2 + $0x128] sm:$0xff] %v431
    %448 = vst [vmem:[#allocation2 + $0x130] sm:$0xff] %v433
    %449 = vst [vmem:[#allocation2 + $0x138] sm:$0xff] %v435
    %450 = vst [vmem:[#allocation2 + $0x140] sm:$0xff] %v437
    %451 = vst [vmem:[#allocation2 + $0x148] sm:$0xff] %v439
    %v452 = vld [vmem:[#allocation4] sm:$0xff]
    %v453 = vld [vmem:[#allocation4 + $0x8] sm:$0xff]
    %v454 = vld [vmem:[#allocation4 + $0x10] sm:$0xff]
    %v455 = vld [vmem:[#allocation4 + $0x18] sm:$0xf]
    %v456 = vld [vmem:[#allocation4 + $0x1c] sm:$0xff]
    %v457 = vld [vmem:[#allocation4 + $0x24] sm:$0xff]
    %v458 = vld [vmem:[#allocation4 + $0x2c] sm:$0xff]
    %v459 = vld [vmem:[#allocation4 + $0x34] sm:$0xf]
    %468 = vrot.lane.b32.xlu0 %v452, 91
    %v469 = vpop.permute.xlu0 %468
    %470 = vrot.lane.b32.xlu0 %v453, 91
    %v471 = vpop.permute.xlu0 %470
    %472 = vrot.lane.b32.xlu0 %v454, 91
    %v473 = vpop.permute.xlu0 %472
    %474 = vrot.lane.b32.xlu0 %v455, 91
    %v475 = vpop.permute.xlu0 %474
    %476 = vrot.lane.b32.xlu0 %v456, 91
    %v477 = vpop.permute.xlu0 %476
    %478 = vrot.lane.b32.xlu0 %v457, 91
    %v479 = vpop.permute.xlu0 %478
    %480 = vrot.lane.b32.xlu0 %v458, 91
    %v481 = vpop.permute.xlu0 %480
    %482 = vrot.lane.b32.xlu0 %v459, 91
    %v483 = vpop.permute.xlu0 %482
    %v484 = vrot.slane %v469, 4
    %v485 = vrot.slane %v471, 4
    %v486 = vrot.slane %v473, 4
    %v487 = vrot.slane %v475, 4
    %v488 = vrot.slane %v477, 4
    %v489 = vrot.slane %v479, 4
    %v490 = vrot.slane %v481, 4
    %v491 = vrot.slane %v483, 4
    %v492 = vsel %vm101, %v484, %v485
    %vm493 = vcmask 744448
    %v494 = vsel %vm493, %v469, %v492
    %v495 = vsel %vm101, %v485, %v486
    %v496 = vsel %vm493, %v471, %v495
    %v497 = vsel %vm101, %v486, %v487
    %v498 = vsel %vm493, %v473, %v497
    %v499 = vsel %vm101, %v488, %v489
    %v500 = vsel %vm493, %v477, %v499
    %v501 = vsel %vm101, %v489, %v490
    %v502 = vsel %vm493, %v479, %v501
    %v503 = vsel %vm101, %v490, %v491
    %v504 = vsel %vm493, %v481, %v503
    %511 = vst [vmem:[#allocation2 + $0x150] sm:$0xff] %v494
    %512 = vst [vmem:[#allocation2 + $0x158] sm:$0xff] %v496
    %513 = vst [vmem:[#allocation2 + $0x160] sm:$0xff] %v498
    %514 = vst [vmem:[#allocation2 + $0x168] sm:$0xff] %v500
    %515 = vst [vmem:[#allocation2 + $0x170] sm:$0xff] %v502
    %516 = vst [vmem:[#allocation2 + $0x178] sm:$0xff] %v504
    %v517 = vld [vmem:[#allocation4] sm:$0xff]
    %v518 = vld [vmem:[#allocation4 + $0x8] sm:$0xff]
    %v519 = vld [vmem:[#allocation4 + $0x10] sm:$0xff]
    %v520 = vld [vmem:[#allocation4 + $0x18] sm:$0xf]
    %v521 = vld [vmem:[#allocation4 + $0x1c] sm:$0xff]
    %v522 = vld [vmem:[#allocation4 + $0x24] sm:$0xff]
    %v523 = vld [vmem:[#allocation4 + $0x2c] sm:$0xff]
    %v524 = vld [vmem:[#allocation4 + $0x34] sm:$0xf]
    %533 = vrot.lane.b32.xlu0 %v517, 90
    %v534 = vpop.permute.xlu0 %533
    %535 = vrot.lane.b32.xlu0 %v518, 90
    %v536 = vpop.permute.xlu0 %535
    %537 = vrot.lane.b32.xlu0 %v519, 90
    %v538 = vpop.permute.xlu0 %537
    %539 = vrot.lane.b32.xlu0 %v520, 90
    %v540 = vpop.permute.xlu0 %539
    %541 = vrot.lane.b32.xlu0 %v521, 90
    %v542 = vpop.permute.xlu0 %541
    %543 = vrot.lane.b32.xlu0 %v522, 90
    %v544 = vpop.permute.xlu0 %543
    %545 = vrot.lane.b32.xlu0 %v523, 90
    %v546 = vpop.permute.xlu0 %545
    %547 = vrot.lane.b32.xlu0 %v524, 90
    %v548 = vpop.permute.xlu0 %547
    %v549 = vrot.slane %v534, 4
    %v550 = vrot.slane %v536, 4
    %v551 = vrot.slane %v538, 4
    %v552 = vrot.slane %v540, 4
    %v553 = vrot.slane %v542, 4
    %v554 = vrot.slane %v544, 4
    %v555 = vrot.slane %v546, 4
    %v556 = vrot.slane %v548, 4
    %v557 = vsel %vm101, %v549, %v550
    %vm558 = vcmask 736256
    %v559 = vsel %vm558, %v534, %v557
    %v560 = vsel %vm101, %v550, %v551
    %v561 = vsel %vm558, %v536, %v560
    %v562 = vsel %vm101, %v551, %v552
    %v563 = vsel %vm558, %v538, %v562
    %v564 = vsel %vm101, %v553, %v554
    %v565 = vsel %vm558, %v542, %v564
    %v566 = vsel %vm101, %v554, %v555
    %v567 = vsel %vm558, %v544, %v566
    %v568 = vsel %vm101, %v555, %v556
    %v569 = vsel %vm558, %v546, %v568
    %576 = vst [vmem:[#allocation2 + $0x180] sm:$0xff] %v559
    %577 = vst [vmem:[#allocation2 + $0x188] sm:$0xff] %v561
    %578 = vst [vmem:[#allocation2 + $0x190] sm:$0xff] %v563
    %579 = vst [vmem:[#allocation2 + $0x198] sm:$0xff] %v565
    %580 = vst [vmem:[#allocation2 + $0x1a0] sm:$0xff] %v567
    %581 = vst [vmem:[#allocation2 + $0x1a8] sm:$0xff] %v569
    %v582 = vld [vmem:[%s1] sm:$0xff]
    %v583 = vld [vmem:[%s1 + $0x8] sm:$0xff]
    %v584 = vld [vmem:[#allocation2] sm:$0xff]
    %v585 = vld [vmem:[#allocation2 + $0x8] sm:$0xff]
    %v586 = vld [vmem:[#allocation2 + $0x10] sm:$0xff]
    %v587 = vld [vmem:[#allocation2 + $0x18] sm:$0xff]
    %v588 = vld [vmem:[#allocation2 + $0x20] sm:$0xff]
    %v589 = vld [vmem:[#allocation2 + $0x28] sm:$0xff]
    %v590 = vld [vmem:[#allocation2 + $0x30] sm:$0xff]
    %v591 = vld [vmem:[#allocation2 + $0x38] sm:$0xff]
    %v592 = vld [vmem:[#allocation2 + $0x40] sm:$0xff]
    %v593 = vld [vmem:[#allocation2 + $0x48] sm:$0xff]
    %v594 = vld [vmem:[#allocation2 + $0x50] sm:$0xff]
    %v595 = vld [vmem:[#allocation2 + $0x58] sm:$0xff]
    %v596 = vld [vmem:[#allocation2 + $0x60] sm:$0xff]
    %v597 = vld [vmem:[#allocation2 + $0x68] sm:$0xff]
    %v598 = vld [vmem:[#allocation2 + $0x70] sm:$0xff]
    %v599 = vld [vmem:[#allocation2 + $0x78] sm:$0xff]
    %v600 = vld [vmem:[#allocation2 + $0x80] sm:$0xff]
    %v601 = vld [vmem:[#allocation2 + $0x88] sm:$0xff]
    %v602 = vld [vmem:[#allocation2 + $0x90] sm:$0xff]
    %v603 = vld [vmem:[#allocation2 + $0x98] sm:$0xff]
    %v604 = vld [vmem:[#allocation2 + $0xa0] sm:$0xff]
    %v605 = vld [vmem:[#allocation2 + $0xa8] sm:$0xff]
    %v606 = vld [vmem:[#allocation2 + $0xb0] sm:$0xff]
    %v607 = vld [vmem:[#allocation2 + $0xb8] sm:$0xff]
    %v608 = vld [vmem:[#allocation2 + $0xc0] sm:$0xff]
    %v609 = vld [vmem:[#allocation2 + $0xc8] sm:$0xff]
    %v610 = vld [vmem:[#allocation2 + $0xd0] sm:$0xff]
    %v611 = vld [vmem:[#allocation2 + $0xd8] sm:$0xff]
    %v612 = vld [vmem:[#allocation2 + $0xe0] sm:$0xff]
    %v613 = vld [vmem:[#allocation2 + $0xe8] sm:$0xff]
    %v614 = vld [vmem:[#allocation2 + $0xf0] sm:$0xff]
    %v615 = vld [vmem:[#allocation2 + $0xf8] sm:$0xff]
    %v616 = vld [vmem:[#allocation2 + $0x100] sm:$0xff]
    %v617 = vld [vmem:[#allocation2 + $0x108] sm:$0xff]
    %v618 = vld [vmem:[#allocation2 + $0x110] sm:$0xff]
    %v619 = vld [vmem:[#allocation2 + $0x118] sm:$0xff]
    %v620 = vld [vmem:[#allocation2 + $0x120] sm:$0xff]
    %v621 = vld [vmem:[#allocation2 + $0x128] sm:$0xff]
    %v622 = vld [vmem:[#allocation2 + $0x130] sm:$0xff]
    %v623 = vld [vmem:[#allocation2 + $0x138] sm:$0xff]
    %v624 = vld [vmem:[#allocation2 + $0x140] sm:$0xff]
    %v625 = vld [vmem:[#allocation2 + $0x148] sm:$0xff]
    %v626 = vld [vmem:[#allocation2 + $0x150] sm:$0xff]
    %v627 = vld [vmem:[#allocation2 + $0x158] sm:$0xff]
    %v628 = vld [vmem:[#allocation2 + $0x160] sm:$0xff]
    %v629 = vld [vmem:[#allocation2 + $0x168] sm:$0xff]
    %v630 = vld [vmem:[#allocation2 + $0x170] sm:$0xff]
    %v631 = vld [vmem:[#allocation2 + $0x178] sm:$0xff]
    %v632 = vld [vmem:[#allocation2 + $0x180] sm:$0xff]
    %v633 = vld [vmem:[#allocation2 + $0x188] sm:$0xff]
    %v634 = vld [vmem:[#allocation2 + $0x190] sm:$0xff]
    %v635 = vld [vmem:[#allocation2 + $0x198] sm:$0xff]
    %v636 = vld [vmem:[#allocation2 + $0x1a0] sm:$0xff]
    %v637 = vld [vmem:[#allocation2 + $0x1a8] sm:$0xff]
    %v640 = vunpack.c.l.b16 %v582
    %v641 = vunpack.c.h.b16 %v582
    %v642 = vunpack.c.l.b16 %v583
    %v643 = vunpack.c.h.b16 %v583
    %v644 = vpack.c.b16 %v642, %v640
    %v645 = vpack.c.b16 %v643, %v641
    %v701 = vunpack.c.l.b16 %v584
    %v702 = vunpack.c.h.b16 %v584
    %v703 = vunpack.c.l.b16 %v585
    %v704 = vunpack.c.h.b16 %v585
    %v705 = vunpack.c.l.b16 %v586
    %v706 = vunpack.c.h.b16 %v586
    %v707 = vunpack.c.l.b16 %v587
    %v708 = vunpack.c.h.b16 %v587
    %v709 = vunpack.c.l.b16 %v588
    %v710 = vunpack.c.h.b16 %v588
    %v711 = vunpack.c.l.b16 %v589
    %v712 = vunpack.c.h.b16 %v589
    %v713 = vunpack.c.l.b16 %v590
    %v714 = vunpack.c.h.b16 %v590
    %v715 = vunpack.c.l.b16 %v591
    %v716 = vunpack.c.h.b16 %v591
    %v717 = vunpack.c.l.b16 %v592
    %v718 = vunpack.c.h.b16 %v592
    %v719 = vunpack.c.l.b16 %v593
    %v720 = vunpack.c.h.b16 %v593
    %v721 = vunpack.c.l.b16 %v594
    %v722 = vunpack.c.h.b16 %v594
    %v723 = vunpack.c.l.b16 %v595
    %v724 = vunpack.c.h.b16 %v595
    %v725 = vunpack.c.l.b16 %v596
    %v726 = vunpack.c.h.b16 %v596
    %v727 = vunpack.c.l.b16 %v597
    %v728 = vunpack.c.h.b16 %v597
    %v729 = vunpack.c.l.b16 %v598
    %v730 = vunpack.c.h.b16 %v598
    %v731 = vunpack.c.l.b16 %v599
    %v732 = vunpack.c.h.b16 %v599
    %v733 = vunpack.c.l.b16 %v600
    %v734 = vunpack.c.h.b16 %v600
    %v735 = vunpack.c.l.b16 %v601
    %v736 = vunpack.c.h.b16 %v601
    %v737 = vunpack.c.l.b16 %v602
    %v738 = vunpack.c.h.b16 %v602
    %v739 = vunpack.c.l.b16 %v603
    %v740 = vunpack.c.h.b16 %v603
    %v741 = vunpack.c.l.b16 %v604
    %v742 = vunpack.c.h.b16 %v604
    %v743 = vunpack.c.l.b16 %v605
    %v744 = vunpack.c.h.b16 %v605
    %v745 = vunpack.c.l.b16 %v606
    %v746 = vunpack.c.h.b16 %v606
    %v747 = vunpack.c.l.b16 %v607
    %v748 = vunpack.c.h.b16 %v607
    %v749 = vunpack.c.l.b16 %v608
    %v750 = vunpack.c.h.b16 %v608
    %v751 = vunpack.c.l.b16 %v609
    %v752 = vunpack.c.h.b16 %v609
    %v753 = vunpack.c.l.b16 %v610
    %v754 = vunpack.c.h.b16 %v610
    %v755 = vunpack.c.l.b16 %v611
    %v756 = vunpack.c.h.b16 %v611
    %v757 = vunpack.c.l.b16 %v612
    %v758 = vunpack.c.h.b16 %v612
    %v759 = vunpack.c.l.b16 %v613
    %v760 = vunpack.c.h.b16 %v613
    %v761 = vunpack.c.l.b16 %v614
    %v762 = vunpack.c.h.b16 %v614
    %v763 = vunpack.c.l.b16 %v615
    %v764 = vunpack.c.h.b16 %v615
    %v765 = vunpack.c.l.b16 %v616
    %v766 = vunpack.c.h.b16 %v616
    %v767 = vunpack.c.l.b16 %v617
    %v768 = vunpack.c.h.b16 %v617
    %v769 = vunpack.c.l.b16 %v618
    %v770 = vunpack.c.h.b16 %v618
    %v771 = vunpack.c.l.b16 %v619
    %v772 = vunpack.c.h.b16 %v619
    %v773 = vunpack.c.l.b16 %v620
    %v774 = vunpack.c.h.b16 %v620
    %v775 = vunpack.c.l.b16 %v621
    %v776 = vunpack.c.h.b16 %v621
    %v777 = vunpack.c.l.b16 %v622
    %v778 = vunpack.c.h.b16 %v622
    %v779 = vunpack.c.l.b16 %v623
    %v780 = vunpack.c.h.b16 %v623
    %v781 = vunpack.c.l.b16 %v624
    %v782 = vunpack.c.h.b16 %v624
    %v783 = vunpack.c.l.b16 %v625
    %v784 = vunpack.c.h.b16 %v625
    %v785 = vunpack.c.l.b16 %v626
    %v786 = vunpack.c.h.b16 %v626
    %v787 = vunpack.c.l.b16 %v627
    %v788 = vunpack.c.h.b16 %v627
    %v789 = vunpack.c.l.b16 %v628
    %v790 = vunpack.c.h.b16 %v628
    %v791 = vunpack.c.l.b16 %v629
    %v792 = vunpack.c.h.b16 %v629
    %v793 = vunpack.c.l.b16 %v630
    %v794 = vunpack.c.h.b16 %v630
    %v795 = vunpack.c.l.b16 %v631
    %v796 = vunpack.c.h.b16 %v631
    %v797 = vunpack.c.l.b16 %v632
    %v798 = vunpack.c.h.b16 %v632
    %v799 = vunpack.c.l.b16 %v633
    %v800 = vunpack.c.h.b16 %v633
    %v801 = vunpack.c.l.b16 %v634
    %v802 = vunpack.c.h.b16 %v634
    %v803 = vunpack.c.l.b16 %v635
    %v804 = vunpack.c.h.b16 %v635
    %v805 = vunpack.c.l.b16 %v636
    %v806 = vunpack.c.h.b16 %v636
    %v807 = vunpack.c.l.b16 %v637
    %v808 = vunpack.c.h.b16 %v637
    %v809 = vpack.c.b16 %v707, %v701
    %v810 = vpack.c.b16 %v708, %v702
    %v811 = vpack.c.b16 %v709, %v703
    %v812 = vpack.c.b16 %v710, %v704
    %v813 = vpack.c.b16 %v711, %v705
    %v814 = vpack.c.b16 %v712, %v706
    %v815 = vpack.c.b16 %v719, %v713
    %v816 = vpack.c.b16 %v720, %v714
    %v817 = vpack.c.b16 %v721, %v715
    %v818 = vpack.c.b16 %v722, %v716
    %v819 = vpack.c.b16 %v723, %v717
    %v820 = vpack.c.b16 %v724, %v718
    %v821 = vpack.c.b16 %v731, %v725
    %v822 = vpack.c.b16 %v732, %v726
    %v823 = vpack.c.b16 %v733, %v727
    %v824 = vpack.c.b16 %v734, %v728
    %v825 = vpack.c.b16 %v735, %v729
    %v826 = vpack.c.b16 %v736, %v730
    %v827 = vpack.c.b16 %v743, %v737
    %v828 = vpack.c.b16 %v744, %v738
    %v829 = vpack.c.b16 %v745, %v739
    %v830 = vpack.c.b16 %v746, %v740
    %v831 = vpack.c.b16 %v747, %v741
    %v832 = vpack.c.b16 %v748, %v742
    %v833 = vpack.c.b16 %v755, %v749
    %v834 = vpack.c.b16 %v756, %v750
    %v835 = vpack.c.b16 %v757, %v751
    %v836 = vpack.c.b16 %v758, %v752
    %v837 = vpack.c.b16 %v759, %v753
    %v838 = vpack.c.b16 %v760, %v754
    %v839 = vpack.c.b16 %v767, %v761
    %v840 = vpack.c.b16 %v768, %v762
    %v841 = vpack.c.b16 %v769, %v763
    %v842 = vpack.c.b16 %v770, %v764
    %v843 = vpack.c.b16 %v771, %v765
    %v844 = vpack.c.b16 %v772, %v766
    %v845 = vpack.c.b16 %v779, %v773
    %v846 = vpack.c.b16 %v780, %v774
    %v847 = vpack.c.b16 %v781, %v775
    %v848 = vpack.c.b16 %v782, %v776
    %v849 = vpack.c.b16 %v783, %v777
    %v850 = vpack.c.b16 %v784, %v778
    %v851 = vpack.c.b16 %v791, %v785
    %v852 = vpack.c.b16 %v792, %v786
    %v853 = vpack.c.b16 %v793, %v787
    %v854 = vpack.c.b16 %v794, %v788
    %v855 = vpack.c.b16 %v795, %v789
    %v856 = vpack.c.b16 %v796, %v790
    %v857 = vpack.c.b16 %v803, %v797
    %v858 = vpack.c.b16 %v804, %v798
    %v859 = vpack.c.b16 %v805, %v799
    %v860 = vpack.c.b16 %v806, %v800
    %v861 = vpack.c.b16 %v807, %v801
    %v862 = vpack.c.b16 %v808, %v802
    %vm917 = vcmask 130048
    %v919 = vsel %vm917, %v645, 0
    %921 = vmatpush.bf16.msra.mxu0 %v851
    %922 = vmatpush.bf16.msra.mxu0 %v845
    %923 = vmatpush.bf16.msra.mxu0 %v839
    %924 = vmatpush.bf16.msra.mxu0 %v833
    %925 = vmatpush.bf16.msra.mxu0 %v827
    %926 = vmatpush.bf16.msra.mxu0 %v821
    %927 = vmatpush.bf16.msra.mxu0 %v815
    %928 = vmatpush.bf16.msra.mxu0 %v809
    %929 = vmatmul.bf16.gmra.mxu0 %v644
    %v930 = vpop.f32.mrf.mxu0
    %v931 = vadd.f32 0.0, %v930
    %v932 = vpop.f32.mrf.mxu0
    %v933 = vadd.f32 0.0, %v932
    %934 = vdwg.mxu0
    %935 = vmatpush.bf16.msra.mxu0 0
    %936 = vmatpush.bf16.msra.mxu0 0
    %937 = vmatpush.bf16.msra.mxu0 0
    %938 = vmatpush.bf16.msra.mxu0 0
    %939 = vmatpush.bf16.msra.mxu0 0
    %940 = vmatpush.bf16.msra.mxu0 0
    %941 = vmatpush.bf16.msra.mxu0 0
    %942 = vmatpush.bf16.msra.mxu0 %v857
    %943 = vmatmul.bf16.gmra.mxu0 %v919
    %v944 = vpop.f32.mrf.mxu0
    %v945 = vadd.f32 %v931, %v944
    %v946 = vpop.f32.mrf.mxu0
    %v947 = vadd.f32 %v933, %v946
    %948 = vdwg.mxu0
    %949 = vmatpush.bf16.msra.mxu0 %v852
    %950 = vmatpush.bf16.msra.mxu0 %v846
    %951 = vmatpush.bf16.msra.mxu0 %v840
    %952 = vmatpush.bf16.msra.mxu0 %v834
    %953 = vmatpush.bf16.msra.mxu0 %v828
    %954 = vmatpush.bf16.msra.mxu0 %v822
    %955 = vmatpush.bf16.msra.mxu0 %v816
    %956 = vmatpush.bf16.msra.mxu0 %v810
    %957 = vmatmul.bf16.gmra.mxu0 %v644
    %v958 = vpop.f32.mrf.mxu0
    %v959 = vadd.f32 0.0, %v958
    %v960 = vpop.f32.mrf.mxu0
    %v961 = vadd.f32 0.0, %v960
    %962 = vdwg.mxu0
    %963 = vmatpush.bf16.msra.mxu0 0
    %964 = vmatpush.bf16.msra.mxu0 0
    %965 = vmatpush.bf16.msra.mxu0 0
    %966 = vmatpush.bf16.msra.mxu0 0
    %967 = vmatpush.bf16.msra.mxu0 0
    %968 = vmatpush.bf16.msra.mxu0 0
    %969 = vmatpush.bf16.msra.mxu0 0
    %970 = vmatpush.bf16.msra.mxu0 %v858
    %971 = vmatmul.bf16.gmra.mxu0 %v919
    %v972 = vpop.f32.mrf.mxu0
    %v973 = vadd.f32 %v959, %v972
    %v974 = vpop.f32.mrf.mxu0
    %v975 = vadd.f32 %v961, %v974
    %976 = vdwg.mxu0
    %977 = vmatpush.bf16.msra.mxu0 %v853
    %978 = vmatpush.bf16.msra.mxu0 %v847
    %979 = vmatpush.bf16.msra.mxu0 %v841
    %980 = vmatpush.bf16.msra.mxu0 %v835
    %981 = vmatpush.bf16.msra.mxu0 %v829
    %982 = vmatpush.bf16.msra.mxu0 %v823
    %983 = vmatpush.bf16.msra.mxu0 %v817
    %984 = vmatpush.bf16.msra.mxu0 %v811
    %985 = vmatmul.bf16.gmra.mxu0 %v644
    %v986 = vpop.f32.mrf.mxu0
    %v987 = vadd.f32 0.0, %v986
    %v988 = vpop.f32.mrf.mxu0
    %v989 = vadd.f32 0.0, %v988
    %990 = vdwg.mxu0
    %991 = vmatpush.bf16.msra.mxu0 0
    %992 = vmatpush.bf16.msra.mxu0 0
    %993 = vmatpush.bf16.msra.mxu0 0
    %994 = vmatpush.bf16.msra.mxu0 0
    %995 = vmatpush.bf16.msra.mxu0 0
    %996 = vmatpush.bf16.msra.mxu0 0
    %997 = vmatpush.bf16.msra.mxu0 0
    %998 = vmatpush.bf16.msra.mxu0 %v859
    %999 = vmatmul.bf16.gmra.mxu0 %v919
    %v1000 = vpop.f32.mrf.mxu0
    %v1001 = vadd.f32 %v987, %v1000
    %v1002 = vpop.f32.mrf.mxu0
    %v1003 = vadd.f32 %v989, %v1002
    %1004 = vdwg.mxu0
    %1005 = vmatpush.bf16.msra.mxu0 %v854
    %1006 = vmatpush.bf16.msra.mxu0 %v848
    %1007 = vmatpush.bf16.msra.mxu0 %v842
    %1008 = vmatpush.bf16.msra.mxu0 %v836
    %1009 = vmatpush.bf16.msra.mxu0 %v830
    %1010 = vmatpush.bf16.msra.mxu0 %v824
    %1011 = vmatpush.bf16.msra.mxu0 %v818
    %1012 = vmatpush.bf16.msra.mxu0 %v812
    %1013 = vmatmul.bf16.gmra.mxu0 %v644
    %v1014 = vpop.f32.mrf.mxu0
    %v1015 = vadd.f32 0.0, %v1014
    %v1016 = vpop.f32.mrf.mxu0
    %v1017 = vadd.f32 0.0, %v1016
    %1018 = vdwg.mxu0
    %1019 = vmatpush.bf16.msra.mxu0 0
    %1020 = vmatpush.bf16.msra.mxu0 0
    %1021 = vmatpush.bf16.msra.mxu0 0
    %1022 = vmatpush.bf16.msra.mxu0 0
    %1023 = vmatpush.bf16.msra.mxu0 0
    %1024 = vmatpush.bf16.msra.mxu0 0
    %1025 = vmatpush.bf16.msra.mxu0 0
    %1026 = vmatpush.bf16.msra.mxu0 %v860
    %1027 = vmatmul.bf16.gmra.mxu0 %v919
    %v1028 = vpop.f32.mrf.mxu0
    %v1029 = vadd.f32 %v1015, %v1028
    %v1030 = vpop.f32.mrf.mxu0
    %v1031 = vadd.f32 %v1017, %v1030
    %1032 = vdwg.mxu0
    %1033 = vmatpush.bf16.msra.mxu0 %v855
    %1034 = vmatpush.bf16.msra.mxu0 %v849
    %1035 = vmatpush.bf16.msra.mxu0 %v843
    %1036 = vmatpush.bf16.msra.mxu0 %v837
    %1037 = vmatpush.bf16.msra.mxu0 %v831
    %1038 = vmatpush.bf16.msra.mxu0 %v825
    %1039 = vmatpush.bf16.msra.mxu0 %v819
    %1040 = vmatpush.bf16.msra.mxu0 %v813
    %1041 = vmatmul.bf16.gmra.mxu0 %v644
    %v1042 = vpop.f32.mrf.mxu0
    %v1043 = vadd.f32 0.0, %v1042
    %v1044 = vpop.f32.mrf.mxu0
    %v1045 = vadd.f32 0.0, %v1044
    %1046 = vdwg.mxu0
    %1047 = vmatpush.bf16.msra.mxu0 0
    %1048 = vmatpush.bf16.msra.mxu0 0
    %1049 = vmatpush.bf16.msra.mxu0 0
    %1050 = vmatpush.bf16.msra.mxu0 0
    %1051 = vmatpush.bf16.msra.mxu0 0
    %1052 = vmatpush.bf16.msra.mxu0 0
    %1053 = vmatpush.bf16.msra.mxu0 0
    %1054 = vmatpush.bf16.msra.mxu0 %v861
    %1055 = vmatmul.bf16.gmra.mxu0 %v919
    %v1056 = vpop.f32.mrf.mxu0
    %v1057 = vadd.f32 %v1043, %v1056
    %v1058 = vpop.f32.mrf.mxu0
    %v1059 = vadd.f32 %v1045, %v1058
    %1060 = vdwg.mxu0
    %1061 = vmatpush.bf16.msra.mxu0 %v856
    %1062 = vmatpush.bf16.msra.mxu0 %v850
    %1063 = vmatpush.bf16.msra.mxu0 %v844
    %1064 = vmatpush.bf16.msra.mxu0 %v838
    %1065 = vmatpush.bf16.msra.mxu0 %v832
    %1066 = vmatpush.bf16.msra.mxu0 %v826
    %1067 = vmatpush.bf16.msra.mxu0 %v820
    %1068 = vmatpush.bf16.msra.mxu0 %v814
    %1069 = vmatmul.bf16.gmra.mxu0 %v644
    %v1070 = vpop.f32.mrf.mxu0
    %v1071 = vadd.f32 0.0, %v1070
    %v1072 = vpop.f32.mrf.mxu0
    %v1073 = vadd.f32 0.0, %v1072
    %1074 = vdwg.mxu0
    %1075 = vmatpush.bf16.msra.mxu0 0
    %1076 = vmatpush.bf16.msra.mxu0 0
    %1077 = vmatpush.bf16.msra.mxu0 0
    %1078 = vmatpush.bf16.msra.mxu0 0
    %1079 = vmatpush.bf16.msra.mxu0 0
    %1080 = vmatpush.bf16.msra.mxu0 0
    %1081 = vmatpush.bf16.msra.mxu0 0
    %1082 = vmatpush.bf16.msra.mxu0 %v862
    %1083 = vmatmul.bf16.gmra.mxu0 %v919
    %v1084 = vpop.f32.mrf.mxu0
    %v1085 = vadd.f32 %v1071, %v1084
    %v1086 = vpop.f32.mrf.mxu0
    %v1087 = vadd.f32 %v1073, %v1086
    %1088 = vdwg.mxu0
    %v1090 = vperm.slane %v48, 0
    %v1091 = vperm.slane %v48, 1
    %v1092 = vperm.slane %v48, 2
    %v1093 = vperm.slane %v48, 3
    %v1094 = vperm.slane %v48, 4
    %v1095 = vperm.slane %v48, 5
    %v1102 = vmul.f32 %v945, %v1090
    %v1103 = vmul.f32 %v973, %v1091
    %v1104 = vmul.f32 %v1001, %v1092
    %v1105 = vmul.f32 %v1029, %v1093
    %v1106 = vmul.f32 %v1057, %v1094
    %v1107 = vmul.f32 %v1085, %v1095
    %v1108 = vmul.f32 %v947, %v1090
    %v1109 = vmul.f32 %v975, %v1091
    %v1110 = vmul.f32 %v1003, %v1092
    %v1111 = vmul.f32 %v1031, %v1093
    %v1112 = vmul.f32 %v1059, %v1094
    %v1113 = vmul.f32 %v1087, %v1095
    %v1114 = vadd.f32 %v1102, %v1103
    %v1115 = vadd.f32 %v1114, %v1104
    %v1116 = vadd.f32 %v1115, %v1105
    %v1117 = vadd.f32 %v1116, %v1106
    %v1118 = vadd.f32 %v1117, %v1107
    %1119 = vadd.xlane.f32.xlu0 %v1118
    %v1120 = vpop.xlane.xlu0 %1119
    %v1121 = vadd.f32 %v1108, %v1109
    %v1122 = vadd.f32 %v1121, %v1110
    %v1123 = vadd.f32 %v1122, %v1111
    %v1124 = vadd.f32 %v1123, %v1112
    %v1125 = vadd.f32 %v1124, %v1113
    %1126 = vadd.xlane.f32.xlu0 %v1125
    %v1127 = vpop.xlane.xlu0 %1126
    %v1128 = vmul.f32 %v1120, 0.001953125
    %v1129 = vmul.f32 %v1127, 0.001953125
    %v1130 = vsub.f32 %v945, %v1128
    %v1131 = vsub.f32 %v973, %v1128
    %v1132 = vsub.f32 %v1001, %v1128
    %v1133 = vsub.f32 %v1029, %v1128
    %v1134 = vsub.f32 %v1057, %v1128
    %v1135 = vsub.f32 %v1085, %v1128
    %v1136 = vsub.f32 %v947, %v1129
    %v1137 = vsub.f32 %v975, %v1129
    %v1138 = vsub.f32 %v1003, %v1129
    %v1139 = vsub.f32 %v1031, %v1129
    %v1140 = vsub.f32 %v1059, %v1129
    %v1141 = vsub.f32 %v1087, %v1129
    %v1142 = vmul.f32 %v1130, %v1090
    %v1143 = vmul.f32 %v1131, %v1091
    %v1144 = vmul.f32 %v1132, %v1092
    %v1145 = vmul.f32 %v1133, %v1093
    %v1146 = vmul.f32 %v1134, %v1094
    %v1147 = vmul.f32 %v1135, %v1095
    %v1148 = vmul.f32 %v1136, %v1090
    %v1149 = vmul.f32 %v1137, %v1091
    %v1150 = vmul.f32 %v1138, %v1092
    %v1151 = vmul.f32 %v1139, %v1093
    %v1152 = vmul.f32 %v1140, %v1094
    %v1153 = vmul.f32 %v1141, %v1095
    %v1154 = vmul.f32 %v1142, %v1142
    %v1155 = vmul.f32 %v1143, %v1143
    %v1156 = vmul.f32 %v1144, %v1144
    %v1157 = vmul.f32 %v1145, %v1145
    %v1158 = vmul.f32 %v1146, %v1146
    %v1159 = vmul.f32 %v1147, %v1147
    %v1160 = vmul.f32 %v1148, %v1148
    %v1161 = vmul.f32 %v1149, %v1149
    %v1162 = vmul.f32 %v1150, %v1150
    %v1163 = vmul.f32 %v1151, %v1151
    %v1164 = vmul.f32 %v1152, %v1152
    %v1165 = vmul.f32 %v1153, %v1153
    %v1166 = vadd.f32 %v1154, %v1155
    %v1167 = vadd.f32 %v1166, %v1156
    %v1168 = vadd.f32 %v1167, %v1157
    %v1169 = vadd.f32 %v1168, %v1158
    %v1170 = vadd.f32 %v1169, %v1159
    %1171 = vadd.xlane.f32.xlu0 %v1170
    %v1172 = vpop.xlane.xlu0 %1171
    %v1173 = vadd.f32 %v1160, %v1161
    %v1174 = vadd.f32 %v1173, %v1162
    %v1175 = vadd.f32 %v1174, %v1163
    %v1176 = vadd.f32 %v1175, %v1164
    %v1177 = vadd.f32 %v1176, %v1165
    %1178 = vadd.xlane.f32.xlu0 %v1177
    %v1179 = vpop.xlane.xlu0 %1178
    %v1180 = vmul.f32 %v1172, 0.001953125
    %v1181 = vmul.f32 %v1179, 0.001953125
    %v1182 = vadd.f32 %v1180, 1e-05
    %v1183 = vadd.f32 %v1181, 1e-05
    %v1184 = vrsqrt.pop %v1182
    %v1185 = vmul.f32 %v1184, %v1182
    %v1186 = vmul.f32 %v1185, %v1184
    %v1187 = vmul.f32 0.5, %v1186
    %v1188 = vsub.f32 1.5, %v1187
    %v1189 = vmul.f32 %v1184, %v1188
    %vm1190 = vweird.f32 %v1182
    %vm1191 = vweird.f32 %v1184
    %vm1192 = vmor %vm1190, %vm1191
    %v1193 = vsel %vm1192, %v1184, %v1189
    %v1194 = vrsqrt.pop %v1183
    %v1195 = vmul.f32 %v1194, %v1183
    %v1196 = vmul.f32 %v1195, %v1194
    %v1197 = vmul.f32 0.5, %v1196
    %v1198 = vsub.f32 1.5, %v1197
    %v1199 = vmul.f32 %v1194, %v1198
    %vm1200 = vweird.f32 %v1183
    %vm1201 = vweird.f32 %v1194
    %vm1202 = vmor %vm1200, %vm1201
    %v1203 = vsel %vm1202, %v1194, %v1199
    %v1204 = vmul.f32 %v44, %v1193
    %v1205 = vmul.f32 %v45, %v1203
    %v1206 = vmul.f32 %v1128, %v1204
    %v1207 = vmul.f32 %v1129, %v1205
    %v1208 = vsub.f32 %v46, %v1206
    %v1209 = vsub.f32 %v47, %v1207
    %1211 = vset.pattern.permute.xlu0 0
    %1212 = vperm.xlu0 %1211, %v1204
    %v1213 = vpop.permute.xlu0 %1212
    %1216 = vset.pattern.permute.xlu0 0
    %1217 = vperm.xlu0 %1216, %v1205
    %v1218 = vpop.permute.xlu0 %1217
    %v1220 = vmul.f32 %v945, %v1213
    %v1221 = vmul.f32 %v973, %v1213
    %v1222 = vmul.f32 %v1001, %v1213
    %v1223 = vmul.f32 %v1029, %v1213
    %v1224 = vmul.f32 %v1057, %v1213
    %v1225 = vmul.f32 %v1085, %v1213
    %v1226 = vmul.f32 %v947, %v1218
    %v1227 = vmul.f32 %v975, %v1218
    %v1228 = vmul.f32 %v1003, %v1218
    %v1229 = vmul.f32 %v1031, %v1218
    %v1230 = vmul.f32 %v1059, %v1218
    %v1231 = vmul.f32 %v1087, %v1218
    %1233 = vset.pattern.permute.xlu0 0
    %1234 = vperm.xlu0 %1233, %v1208
    %v1235 = vpop.permute.xlu0 %1234
    %1238 = vset.pattern.permute.xlu0 0
    %1239 = vperm.xlu0 %1238, %v1209
    %v1240 = vpop.permute.xlu0 %1239
    %v1242 = vadd.f32 %v1220, %v1235
    %v1243 = vadd.f32 %v1221, %v1235
    %v1244 = vadd.f32 %v1222, %v1235
    %v1245 = vadd.f32 %v1223, %v1235
    %v1246 = vadd.f32 %v1224, %v1235
    %v1247 = vadd.f32 %v1225, %v1235
    %v1248 = vadd.f32 %v1226, %v1240
    %v1249 = vadd.f32 %v1227, %v1240
    %v1250 = vadd.f32 %v1228, %v1240
    %v1251 = vadd.f32 %v1229, %v1240
    %v1252 = vadd.f32 %v1230, %v1240
    %v1253 = vadd.f32 %v1231, %v1240
    %v1254 = vmax.f32 %v1242, 0.0
    %v1255 = vmax.f32 %v1243, 0.0
    %v1256 = vmax.f32 %v1244, 0.0
    %v1257 = vmax.f32 %v1245, 0.0
    %v1258 = vmax.f32 %v1246, 0.0
    %v1259 = vmax.f32 %v1247, 0.0
    %v1260 = vmax.f32 %v1248, 0.0
    %v1261 = vmax.f32 %v1249, 0.0
    %v1262 = vmax.f32 %v1250, 0.0
    %v1263 = vmax.f32 %v1251, 0.0
    %v1264 = vmax.f32 %v1252, 0.0
    %v1265 = vmax.f32 %v1253, 0.0
    %v1266 = vmul.f32 %v1254, %v1090
    %v1267 = vmul.f32 %v1255, %v1091
    %v1268 = vmul.f32 %v1256, %v1092
    %v1269 = vmul.f32 %v1257, %v1093
    %v1270 = vmul.f32 %v1258, %v1094
    %v1271 = vmul.f32 %v1259, %v1095
    %v1272 = vmul.f32 %v1260, %v1090
    %v1273 = vmul.f32 %v1261, %v1091
    %v1274 = vmul.f32 %v1262, %v1092
    %v1275 = vmul.f32 %v1263, %v1093
    %v1276 = vmul.f32 %v1264, %v1094
    %v1277 = vmul.f32 %v1265, %v1095
    %v1278 = vld [vmem:[%s2] sm:$0xff]
    %v1279 = vld [vmem:[%s2 + $0x8] sm:$0xff]
    %1280 = vst [vmem:[#allocation3] sm:$0xff] 0
    %1281 = vst [vmem:[#allocation3 + $0x8] sm:$0xff] 0
    %1282 = vst [vmem:[#allocation3 + $0x10] sm:$0xff] 0
    %1283 = vst [vmem:[#allocation3 + $0x18] sm:$0xf] 0
    %1284 = vst [vmem:[#allocation3 + $0x1c] sm:$0xff] 0
    %1285 = vst [vmem:[#allocation3 + $0x24] sm:$0xff] 0
    %1286 = vst [vmem:[#allocation3 + $0x2c] sm:$0xff] 0
    %1287 = vst [vmem:[#allocation3 + $0x34] sm:$0xf] 0
    %v1288 = vpack.c.bf16 %v1267, %v1266
    %v1289 = vpack.c.bf16 %v1269, %v1268
    %v1290 = vpack.c.bf16 %v1271, %v1270
    %v1291 = vpack.c.bf16 %v1273, %v1272
    %v1292 = vpack.c.bf16 %v1275, %v1274
    %v1293 = vpack.c.bf16 %v1277, %v1276
    %1300 = vrot.lane.b32.xlu0 %v1288, 19
    %v1301 = vpop.permute.xlu0 %1300
    %1302 = vrot.lane.b32.xlu0 %v1289, 19
    %v1303 = vpop.permute.xlu0 %1302
    %1304 = vrot.lane.b32.xlu0 %v1290, 19
    %v1305 = vpop.permute.xlu0 %1304
    %1306 = vrot.lane.b32.xlu0 %v1291, 19
    %v1307 = vpop.permute.xlu0 %1306
    %1308 = vrot.lane.b32.xlu0 %v1292, 19
    %v1309 = vpop.permute.xlu0 %1308
    %1310 = vrot.lane.b32.xlu0 %v1293, 19
    %v1311 = vpop.permute.xlu0 %1310
    %v1312 = vrot.slane %v1301, 4
    %v1313 = vrot.slane %v1303, 4
    %v1314 = vrot.slane %v1305, 4
    %v1315 = vrot.slane %v1307, 4
    %v1316 = vrot.slane %v1309, 4
    %v1317 = vrot.slane %v1311, 4
    %vm1318 = vcmask 154624
    %v1319 = vsel %vm1318, %v1312, %v1301
    %v1320 = vsel %vm101, %v1312, %v1313
    %v1321 = vsel %vm1318, %v1320, %v1303
    %v1322 = vsel %vm101, %v1313, %v1314
    %v1323 = vsel %vm1318, %v1322, %v1305
    %v1324 = vsel %vm1318, %v1315, %v1307
    %v1325 = vsel %vm101, %v1315, %v1316
    %v1326 = vsel %vm1318, %v1325, %v1309
    %v1327 = vsel %vm101, %v1316, %v1317
    %v1328 = vsel %vm1318, %v1327, %v1311
    %vm1337 = vcmask 1043608
    %vm1338 = vcmask 1047556
    %vm1339 = vmor %vm1338, %vm1337
    %1340 = vst.msk [vmem:[#allocation3] sm:$0xff] %vm1339, %v1319
    %1341 = vst [vmem:[#allocation3 + $0x8] sm:$0xff] %v1321
    %1342 = vst [vmem:[#allocation3 + $0x10] sm:$0xff] %v1323
    %vm1343 = vcmask 150528
    %1344 = vst.msk [vmem:[#allocation3 + $0x18] sm:$0xf] %vm1343, %v1314
    %1345 = vst.msk [vmem:[#allocation3 + $0x1c] sm:$0xff] %vm1339, %v1324
    %1346 = vst [vmem:[#allocation3 + $0x24] sm:$0xff] %v1326
    %1347 = vst [vmem:[#allocation3 + $0x2c] sm:$0xff] %v1328
    %1348 = vst.msk [vmem:[#allocation3 + $0x34] sm:$0xf] %vm1343, %v1317
    %v1349 = vld [vmem:[#allocation3] sm:$0xff]
    %v1350 = vld [vmem:[#allocation3 + $0x8] sm:$0xff]
    %v1351 = vld [vmem:[#allocation3 + $0x10] sm:$0xff]
    %v1352 = vld [vmem:[#allocation3 + $0x1c] sm:$0xff]
    %v1353 = vld [vmem:[#allocation3 + $0x24] sm:$0xff]
    %v1354 = vld [vmem:[#allocation3 + $0x2c] sm:$0xff]
    %1355 = vst [vmem:[#allocation2] sm:$0xff] %v1349
    %1356 = vst [vmem:[#allocation2 + $0x8] sm:$0xff] %v1350
    %1357 = vst [vmem:[#allocation2 + $0x10] sm:$0xff] %v1351
    %1358 = vst [vmem:[#allocation2 + $0x18] sm:$0xff] %v1352
    %1359 = vst [vmem:[#allocation2 + $0x20] sm:$0xff] %v1353
    %1360 = vst [vmem:[#allocation2 + $0x28] sm:$0xff] %v1354
    %v1361 = vld [vmem:[#allocation3] sm:$0xff]
    %v1362 = vld [vmem:[#allocation3 + $0x8] sm:$0xff]
    %v1363 = vld [vmem:[#allocation3 + $0x10] sm:$0xff]
    %v1364 = vld [vmem:[#allocation3 + $0x18] sm:$0xf]
    %v1365 = vld [vmem:[#allocation3 + $0x1c] sm:$0xff]
    %v1366 = vld [vmem:[#allocation3 + $0x24] sm:$0xff]
    %v1367 = vld [vmem:[#allocation3 + $0x2c] sm:$0xff]
    %v1368 = vld [vmem:[#allocation3 + $0x34] sm:$0xf]
    %1377 = vrot.lane.b32.xlu0 %v1361, 127
    %v1378 = vpop.permute.xlu0 %1377
    %1379 = vrot.lane.b32.xlu0 %v1362, 127
    %v1380 = vpop.permute.xlu0 %1379
    %1381 = vrot.lane.b32.xlu0 %v1363, 127
    %v1382 = vpop.permute.xlu0 %1381
    %1383 = vrot.lane.b32.xlu0 %v1364, 127
    %v1384 = vpop.permute.xlu0 %1383
    %1385 = vrot.lane.b32.xlu0 %v1365, 127
    %v1386 = vpop.permute.xlu0 %1385
    %1387 = vrot.lane.b32.xlu0 %v1366, 127
    %v1388 = vpop.permute.xlu0 %1387
    %1389 = vrot.lane.b32.xlu0 %v1367, 127
    %v1390 = vpop.permute.xlu0 %1389
    %1391 = vrot.lane.b32.xlu0 %v1368, 127
    %v1392 = vpop.permute.xlu0 %1391
    %v1393 = vrot.slane %v1378, 4
    %v1394 = vrot.slane %v1380, 4
    %v1395 = vrot.slane %v1382, 4
    %v1396 = vrot.slane %v1384, 4
    %v1397 = vrot.slane %v1386, 4
    %v1398 = vrot.slane %v1388, 4
    %v1399 = vrot.slane %v1390, 4
    %v1400 = vrot.slane %v1392, 4
    %v1401 = vsel %vm101, %v1393, %v1394
    %v1402 = vsel %vm103, %v1378, %v1401
    %v1403 = vsel %vm101, %v1394, %v1395
    %v1404 = vsel %vm103, %v1380, %v1403
    %v1405 = vsel %vm101, %v1395, %v1396
    %v1406 = vsel %vm103, %v1382, %v1405
    %v1407 = vsel %vm101, %v1397, %v1398
    %v1408 = vsel %vm103, %v1386, %v1407
    %v1409 = vsel %vm101, %v1398, %v1399
    %v1410 = vsel %vm103, %v1388, %v1409
    %v1411 = vsel %vm101, %v1399, %v1400
    %v1412 = vsel %vm103, %v1390, %v1411
    %1419 = vst [vmem:[#allocation2 + $0x30] sm:$0xff] %v1402
    %1420 = vst [vmem:[#allocation2 + $0x38] sm:$0xff] %v1404
    %1421 = vst [vmem:[#allocation2 + $0x40] sm:$0xff] %v1406
    %1422 = vst [vmem:[#allocation2 + $0x48] sm:$0xff] %v1408
    %1423 = vst [vmem:[#allocation2 + $0x50] sm:$0xff] %v1410
    %1424 = vst [vmem:[#allocation2 + $0x58] sm:$0xff] %v1412
    %v1425 = vld [vmem:[#allocation3] sm:$0xff]
    %v1426 = vld [vmem:[#allocation3 + $0x8] sm:$0xff]
    %v1427 = vld [vmem:[#allocation3 + $0x10] sm:$0xff]
    %v1428 = vld [vmem:[#allocation3 + $0x18] sm:$0xf]
    %v1429 = vld [vmem:[#allocation3 + $0x1c] sm:$0xff]
    %v1430 = vld [vmem:[#allocation3 + $0x24] sm:$0xff]
    %v1431 = vld [vmem:[#allocation3 + $0x2c] sm:$0xff]
    %v1432 = vld [vmem:[#allocation3 + $0x34] sm:$0xf]
    %1441 = vrot.lane.b32.xlu0 %v1425, 126
    %v1442 = vpop.permute.xlu0 %1441
    %1443 = vrot.lane.b32.xlu0 %v1426, 126
    %v1444 = vpop.permute.xlu0 %1443
    %1445 = vrot.lane.b32.xlu0 %v1427, 126
    %v1446 = vpop.permute.xlu0 %1445
    %1447 = vrot.lane.b32.xlu0 %v1428, 126
    %v1448 = vpop.permute.xlu0 %1447
    %1449 = vrot.lane.b32.xlu0 %v1429, 126
    %v1450 = vpop.permute.xlu0 %1449
    %1451 = vrot.lane.b32.xlu0 %v1430, 126
    %v1452 = vpop.permute.xlu0 %1451
    %1453 = vrot.lane.b32.xlu0 %v1431, 126
    %v1454 = vpop.permute.xlu0 %1453
    %1455 = vrot.lane.b32.xlu0 %v1432, 126
    %v1456 = vpop.permute.xlu0 %1455
    %v1457 = vrot.slane %v1442, 4
    %v1458 = vrot.slane %v1444, 4
    %v1459 = vrot.slane %v1446, 4
    %v1460 = vrot.slane %v1448, 4
    %v1461 = vrot.slane %v1450, 4
    %v1462 = vrot.slane %v1452, 4
    %v1463 = vrot.slane %v1454, 4
    %v1464 = vrot.slane %v1456, 4
    %v1465 = vsel %vm101, %v1457, %v1458
    %v1466 = vsel %vm168, %v1442, %v1465
    %v1467 = vsel %vm101, %v1458, %v1459
    %v1468 = vsel %vm168, %v1444, %v1467
    %v1469 = vsel %vm101, %v1459, %v1460
    %v1470 = vsel %vm168, %v1446, %v1469
    %v1471 = vsel %vm101, %v1461, %v1462
    %v1472 = vsel %vm168, %v1450, %v1471
    %v1473 = vsel %vm101, %v1462, %v1463
    %v1474 = vsel %vm168, %v1452, %v1473
    %v1475 = vsel %vm101, %v1463, %v1464
    %v1476 = vsel %vm168, %v1454, %v1475
    %1483 = vst [vmem:[#allocation2 + $0x60] sm:$0xff] %v1466
    %1484 = vst [vmem:[#allocation2 + $0x68] sm:$0xff] %v1468
    %1485 = vst [vmem:[#allocation2 + $0x70] sm:$0xff] %v1470
    %1486 = vst [vmem:[#allocation2 + $0x78] sm:$0xff] %v1472
    %1487 = vst [vmem:[#allocation2 + $0x80] sm:$0xff] %v1474
    %1488 = vst [vmem:[#allocation2 + $0x88] sm:$0xff] %v1476
    %v1489 = vld [vmem:[#allocation3] sm:$0xff]
    %v1490 = vld [vmem:[#allocation3 + $0x8] sm:$0xff]
    %v1491 = vld [vmem:[#allocation3 + $0x10] sm:$0xff]
    %v1492 = vld [vmem:[#allocation3 + $0x18] sm:$0xf]
    %v1493 = vld [vmem:[#allocation3 + $0x1c] sm:$0xff]
    %v1494 = vld [vmem:[#allocation3 + $0x24] sm:$0xff]
    %v1495 = vld [vmem:[#allocation3 + $0x2c] sm:$0xff]
    %v1496 = vld [vmem:[#allocation3 + $0x34] sm:$0xf]
    %1505 = vrot.lane.b32.xlu0 %v1489, 110
    %v1506 = vpop.permute.xlu0 %1505
    %1507 = vrot.lane.b32.xlu0 %v1490, 110
    %v1508 = vpop.permute.xlu0 %1507
    %1509 = vrot.lane.b32.xlu0 %v1491, 110
    %v1510 = vpop.permute.xlu0 %1509
    %1511 = vrot.lane.b32.xlu0 %v1492, 110
    %v1512 = vpop.permute.xlu0 %1511
    %1513 = vrot.lane.b32.xlu0 %v1493, 110
    %v1514 = vpop.permute.xlu0 %1513
    %1515 = vrot.lane.b32.xlu0 %v1494, 110
    %v1516 = vpop.permute.xlu0 %1515
    %1517 = vrot.lane.b32.xlu0 %v1495, 110
    %v1518 = vpop.permute.xlu0 %1517
    %1519 = vrot.lane.b32.xlu0 %v1496, 110
    %v1520 = vpop.permute.xlu0 %1519
    %v1521 = vrot.slane %v1506, 4
    %v1522 = vrot.slane %v1508, 4
    %v1523 = vrot.slane %v1510, 4
    %v1524 = vrot.slane %v1512, 4
    %v1525 = vrot.slane %v1514, 4
    %v1526 = vrot.slane %v1516, 4
    %v1527 = vrot.slane %v1518, 4
    %v1528 = vrot.slane %v1520, 4
    %v1529 = vsel %vm101, %v1521, %v1522
    %v1530 = vsel %vm233, %v1506, %v1529
    %v1531 = vsel %vm101, %v1522, %v1523
    %v1532 = vsel %vm233, %v1508, %v1531
    %v1533 = vsel %vm101, %v1523, %v1524
    %v1534 = vsel %vm233, %v1510, %v1533
    %v1535 = vsel %vm101, %v1525, %v1526
    %v1536 = vsel %vm233, %v1514, %v1535
    %v1537 = vsel %vm101, %v1526, %v1527
    %v1538 = vsel %vm233, %v1516, %v1537
    %v1539 = vsel %vm101, %v1527, %v1528
    %v1540 = vsel %vm233, %v1518, %v1539
    %1547 = vst [vmem:[#allocation2 + $0x90] sm:$0xff] %v1530
    %1548 = vst [vmem:[#allocation2 + $0x98] sm:$0xff] %v1532
    %1549 = vst [vmem:[#allocation2 + $0xa0] sm:$0xff] %v1534
    %1550 = vst [vmem:[#allocation2 + $0xa8] sm:$0xff] %v1536
    %1551 = vst [vmem:[#allocation2 + $0xb0] sm:$0xff] %v1538
    %1552 = vst [vmem:[#allocation2 + $0xb8] sm:$0xff] %v1540
    %v1553 = vld [vmem:[#allocation3] sm:$0xff]
    %v1554 = vld [vmem:[#allocation3 + $0x8] sm:$0xff]
    %v1555 = vld [vmem:[#allocation3 + $0x10] sm:$0xff]
    %v1556 = vld [vmem:[#allocation3 + $0x18] sm:$0xf]
    %v1557 = vld [vmem:[#allocation3 + $0x1c] sm:$0xff]
    %v1558 = vld [vmem:[#allocation3 + $0x24] sm:$0xff]
    %v1559 = vld [vmem:[#allocation3 + $0x2c] sm:$0xff]
    %v1560 = vld [vmem:[#allocation3 + $0x34] sm:$0xf]
    %1569 = vrot.lane.b32.xlu0 %v1553, 109
    %v1570 = vpop.permute.xlu0 %1569
    %1571 = vrot.lane.b32.xlu0 %v1554, 109
    %v1572 = vpop.permute.xlu0 %1571
    %1573 = vrot.lane.b32.xlu0 %v1555, 109
    %v1574 = vpop.permute.xlu0 %1573
    %1575 = vrot.lane.b32.xlu0 %v1556, 109
    %v1576 = vpop.permute.xlu0 %1575
    %1577 = vrot.lane.b32.xlu0 %v1557, 109
    %v1578 = vpop.permute.xlu0 %1577
    %1579 = vrot.lane.b32.xlu0 %v1558, 109
    %v1580 = vpop.permute.xlu0 %1579
    %1581 = vrot.lane.b32.xlu0 %v1559, 109
    %v1582 = vpop.permute.xlu0 %1581
    %1583 = vrot.lane.b32.xlu0 %v1560, 109
    %v1584 = vpop.permute.xlu0 %1583
    %v1585 = vrot.slane %v1570, 4
    %v1586 = vrot.slane %v1572, 4
    %v1587 = vrot.slane %v1574, 4
    %v1588 = vrot.slane %v1576, 4
    %v1589 = vrot.slane %v1578, 4
    %v1590 = vrot.slane %v1580, 4
    %v1591 = vrot.slane %v1582, 4
    %v1592 = vrot.slane %v1584, 4
    %v1593 = vsel %vm101, %v1585, %v1586
    %v1594 = vsel %vm298, %v1570, %v1593
    %v1595 = vsel %vm101, %v1586, %v1587
    %v1596 = vsel %vm298, %v1572, %v1595
    %v1597 = vsel %vm101, %v1587, %v1588
    %v1598 = vsel %vm298, %v1574, %v1597
    %v1599 = vsel %vm101, %v1589, %v1590
    %v1600 = vsel %vm298, %v1578, %v1599
    %v1601 = vsel %vm101, %v1590, %v1591
    %v1602 = vsel %vm298, %v1580, %v1601
    %v1603 = vsel %vm101, %v1591, %v1592
    %v1604 = vsel %vm298, %v1582, %v1603
    %1611 = vst [vmem:[#allocation2 + $0xc0] sm:$0xff] %v1594
    %1612 = vst [vmem:[#allocation2 + $0xc8] sm:$0xff] %v1596
    %1613 = vst [vmem:[#allocation2 + $0xd0] sm:$0xff] %v1598
    %1614 = vst [vmem:[#allocation2 + $0xd8] sm:$0xff] %v1600
    %1615 = vst [vmem:[#allocation2 + $0xe0] sm:$0xff] %v1602
    %1616 = vst [vmem:[#allocation2 + $0xe8] sm:$0xff] %v1604
    %v1617 = vld [vmem:[#allocation3] sm:$0xff]
    %v1618 = vld [vmem:[#allocation3 + $0x8] sm:$0xff]
    %v1619 = vld [vmem:[#allocation3 + $0x10] sm:$0xff]
    %v1620 = vld [vmem:[#allocation3 + $0x18] sm:$0xf]
    %v1621 = vld [vmem:[#allocation3 + $0x1c] sm:$0xff]
    %v1622 = vld [vmem:[#allocation3 + $0x24] sm:$0xff]
    %v1623 = vld [vmem:[#allocation3 + $0x2c] sm:$0xff]
    %v1624 = vld [vmem:[#allocation3 + $0x34] sm:$0xf]
    %1633 = vrot.lane.b32.xlu0 %v1617, 108
    %v1634 = vpop.permute.xlu0 %1633
    %1635 = vrot.lane.b32.xlu0 %v1618, 108
    %v1636 = vpop.permute.xlu0 %1635
    %1637 = vrot.lane.b32.xlu0 %v1619, 108
    %v1638 = vpop.permute.xlu0 %1637
    %1639 = vrot.lane.b32.xlu0 %v1620, 108
    %v1640 = vpop.permute.xlu0 %1639
    %1641 = vrot.lane.b32.xlu0 %v1621, 108
    %v1642 = vpop.permute.xlu0 %1641
    %1643 = vrot.lane.b32.xlu0 %v1622, 108
    %v1644 = vpop.permute.xlu0 %1643
    %1645 = vrot.lane.b32.xlu0 %v1623, 108
    %v1646 = vpop.permute.xlu0 %1645
    %1647 = vrot.lane.b32.xlu0 %v1624, 108
    %v1648 = vpop.permute.xlu0 %1647
    %v1649 = vrot.slane %v1634, 4
    %v1650 = vrot.slane %v1636, 4
    %v1651 = vrot.slane %v1638, 4
    %v1652 = vrot.slane %v1640, 4
    %v1653 = vrot.slane %v1642, 4
    %v1654 = vrot.slane %v1644, 4
    %v1655 = vrot.slane %v1646, 4
    %v1656 = vrot.slane %v1648, 4
    %v1657 = vsel %vm101, %v1649, %v1650
    %v1658 = vsel %vm363, %v1634, %v1657
    %v1659 = vsel %vm101, %v1650, %v1651
    %v1660 = vsel %vm363, %v1636, %v1659
    %v1661 = vsel %vm101, %v1651, %v1652
    %v1662 = vsel %vm363, %v1638, %v1661
    %v1663 = vsel %vm101, %v1653, %v1654
    %v1664 = vsel %vm363, %v1642, %v1663
    %v1665 = vsel %vm101, %v1654, %v1655
    %v1666 = vsel %vm363, %v1644, %v1665
    %v1667 = vsel %vm101, %v1655, %v1656
    %v1668 = vsel %vm363, %v1646, %v1667
    %1675 = vst [vmem:[#allocation2 + $0xf0] sm:$0xff] %v1658
    %1676 = vst [vmem:[#allocation2 + $0xf8] sm:$0xff] %v1660
    %1677 = vst [vmem:[#allocation2 + $0x100] sm:$0xff] %v1662
    %1678 = vst [vmem:[#allocation2 + $0x108] sm:$0xff] %v1664
    %1679 = vst [vmem:[#allocation2 + $0x110] sm:$0xff] %v1666
    %1680 = vst [vmem:[#allocation2 + $0x118] sm:$0xff] %v1668
    %v1681 = vld [vmem:[#allocation3] sm:$0xff]
    %v1682 = vld [vmem:[#allocation3 + $0x8] sm:$0xff]
    %v1683 = vld [vmem:[#allocation3 + $0x10] sm:$0xff]
    %v1684 = vld [vmem:[#allocation3 + $0x18] sm:$0xf]
    %v1685 = vld [vmem:[#allocation3 + $0x1c] sm:$0xff]
    %v1686 = vld [vmem:[#allocation3 + $0x24] sm:$0xff]
    %v1687 = vld [vmem:[#allocation3 + $0x2c] sm:$0xff]
    %v1688 = vld [vmem:[#allocation3 + $0x34] sm:$0xf]
    %1697 = vrot.lane.b32.xlu0 %v1681, 92
    %v1698 = vpop.permute.xlu0 %1697
    %1699 = vrot.lane.b32.xlu0 %v1682, 92
    %v1700 = vpop.permute.xlu0 %1699
    %1701 = vrot.lane.b32.xlu0 %v1683, 92
    %v1702 = vpop.permute.xlu0 %1701
    %1703 = vrot.lane.b32.xlu0 %v1684, 92
    %v1704 = vpop.permute.xlu0 %1703
    %1705 = vrot.lane.b32.xlu0 %v1685, 92
    %v1706 = vpop.permute.xlu0 %1705
    %1707 = vrot.lane.b32.xlu0 %v1686, 92
    %v1708 = vpop.permute.xlu0 %1707
    %1709 = vrot.lane.b32.xlu0 %v1687, 92
    %v1710 = vpop.permute.xlu0 %1709
    %1711 = vrot.lane.b32.xlu0 %v1688, 92
    %v1712 = vpop.permute.xlu0 %1711
    %v1713 = vrot.slane %v1698, 4
    %v1714 = vrot.slane %v1700, 4
    %v1715 = vrot.slane %v1702, 4
    %v1716 = vrot.slane %v1704, 4
    %v1717 = vrot.slane %v1706, 4
    %v1718 = vrot.slane %v1708, 4
    %v1719 = vrot.slane %v1710, 4
    %v1720 = vrot.slane %v1712, 4
    %v1721 = vsel %vm101, %v1713, %v1714
    %v1722 = vsel %vm428, %v1698, %v1721
    %v1723 = vsel %vm101, %v1714, %v1715
    %v1724 = vsel %vm428, %v1700, %v1723
    %v1725 = vsel %vm101, %v1715, %v1716
    %v1726 = vsel %vm428, %v1702, %v1725
    %v1727 = vsel %vm101, %v1717, %v1718
    %v1728 = vsel %vm428, %v1706, %v1727
    %v1729 = vsel %vm101, %v1718, %v1719
    %v1730 = vsel %vm428, %v1708, %v1729
    %v1731 = vsel %vm101, %v1719, %v1720
    %v1732 = vsel %vm428, %v1710, %v1731
    %1739 = vst [vmem:[#allocation2 + $0x120] sm:$0xff] %v1722
    %1740 = vst [vmem:[#allocation2 + $0x128] sm:$0xff] %v1724
    %1741 = vst [vmem:[#allocation2 + $0x130] sm:$0xff] %v1726
    %1742 = vst [vmem:[#allocation2 + $0x138] sm:$0xff] %v1728
    %1743 = vst [vmem:[#allocation2 + $0x140] sm:$0xff] %v1730
    %1744 = vst [vmem:[#allocation2 + $0x148] sm:$0xff] %v1732
    %v1745 = vld [vmem:[#allocation3] sm:$0xff]
    %v1746 = vld [vmem:[#allocation3 + $0x8] sm:$0xff]
    %v1747 = vld [vmem:[#allocation3 + $0x10] sm:$0xff]
    %v1748 = vld [vmem:[#allocation3 + $0x18] sm:$0xf]
    %v1749 = vld [vmem:[#allocation3 + $0x1c] sm:$0xff]
    %v1750 = vld [vmem:[#allocation3 + $0x24] sm:$0xff]
    %v1751 = vld [vmem:[#allocation3 + $0x2c] sm:$0xff]
    %v1752 = vld [vmem:[#allocation3 + $0x34] sm:$0xf]
    %1761 = vrot.lane.b32.xlu0 %v1745, 91
    %v1762 = vpop.permute.xlu0 %1761
    %1763 = vrot.lane.b32.xlu0 %v1746, 91
    %v1764 = vpop.permute.xlu0 %1763
    %1765 = vrot.lane.b32.xlu0 %v1747, 91
    %v1766 = vpop.permute.xlu0 %1765
    %1767 = vrot.lane.b32.xlu0 %v1748, 91
    %v1768 = vpop.permute.xlu0 %1767
    %1769 = vrot.lane.b32.xlu0 %v1749, 91
    %v1770 = vpop.permute.xlu0 %1769
    %1771 = vrot.lane.b32.xlu0 %v1750, 91
    %v1772 = vpop.permute.xlu0 %1771
    %1773 = vrot.lane.b32.xlu0 %v1751, 91
    %v1774 = vpop.permute.xlu0 %1773
    %1775 = vrot.lane.b32.xlu0 %v1752, 91
    %v1776 = vpop.permute.xlu0 %1775
    %v1777 = vrot.slane %v1762, 4
    %v1778 = vrot.slane %v1764, 4
    %v1779 = vrot.slane %v1766, 4
    %v1780 = vrot.slane %v1768, 4
    %v1781 = vrot.slane %v1770, 4
    %v1782 = vrot.slane %v1772, 4
    %v1783 = vrot.slane %v1774, 4
    %v1784 = vrot.slane %v1776, 4
    %v1785 = vsel %vm101, %v1777, %v1778
    %v1786 = vsel %vm493, %v1762, %v1785
    %v1787 = vsel %vm101, %v1778, %v1779
    %v1788 = vsel %vm493, %v1764, %v1787
    %v1789 = vsel %vm101, %v1779, %v1780
    %v1790 = vsel %vm493, %v1766, %v1789
    %v1791 = vsel %vm101, %v1781, %v1782
    %v1792 = vsel %vm493, %v1770, %v1791
    %v1793 = vsel %vm101, %v1782, %v1783
    %v1794 = vsel %vm493, %v1772, %v1793
    %v1795 = vsel %vm101, %v1783, %v1784
    %v1796 = vsel %vm493, %v1774, %v1795
    %1803 = vst [vmem:[#allocation2 + $0x150] sm:$0xff] %v1786
    %1804 = vst [vmem:[#allocation2 + $0x158] sm:$0xff] %v1788
    %1805 = vst [vmem:[#allocation2 + $0x160] sm:$0xff] %v1790
    %1806 = vst [vmem:[#allocation2 + $0x168] sm:$0xff] %v1792
    %1807 = vst [vmem:[#allocation2 + $0x170] sm:$0xff] %v1794
    %1808 = vst [vmem:[#allocation2 + $0x178] sm:$0xff] %v1796
    %v1809 = vld [vmem:[#allocation3] sm:$0xff]
    %v1810 = vld [vmem:[#allocation3 + $0x8] sm:$0xff]
    %v1811 = vld [vmem:[#allocation3 + $0x10] sm:$0xff]
    %v1812 = vld [vmem:[#allocation3 + $0x18] sm:$0xf]
    %v1813 = vld [vmem:[#allocation3 + $0x1c] sm:$0xff]
    %v1814 = vld [vmem:[#allocation3 + $0x24] sm:$0xff]
    %v1815 = vld [vmem:[#allocation3 + $0x2c] sm:$0xff]
    %v1816 = vld [vmem:[#allocation3 + $0x34] sm:$0xf]
    %1825 = vrot.lane.b32.xlu0 %v1809, 90
    %v1826 = vpop.permute.xlu0 %1825
    %1827 = vrot.lane.b32.xlu0 %v1810, 90
    %v1828 = vpop.permute.xlu0 %1827
    %1829 = vrot.lane.b32.xlu0 %v1811, 90
    %v1830 = vpop.permute.xlu0 %1829
    %1831 = vrot.lane.b32.xlu0 %v1812, 90
    %v1832 = vpop.permute.xlu0 %1831
    %1833 = vrot.lane.b32.xlu0 %v1813, 90
    %v1834 = vpop.permute.xlu0 %1833
    %1835 = vrot.lane.b32.xlu0 %v1814, 90
    %v1836 = vpop.permute.xlu0 %1835
    %1837 = vrot.lane.b32.xlu0 %v1815, 90
    %v1838 = vpop.permute.xlu0 %1837
    %1839 = vrot.lane.b32.xlu0 %v1816, 90
    %v1840 = vpop.permute.xlu0 %1839
    %v1841 = vrot.slane %v1826, 4
    %v1842 = vrot.slane %v1828, 4
    %v1843 = vrot.slane %v1830, 4
    %v1844 = vrot.slane %v1832, 4
    %v1845 = vrot.slane %v1834, 4
    %v1846 = vrot.slane %v1836, 4
    %v1847 = vrot.slane %v1838, 4
    %v1848 = vrot.slane %v1840, 4
    %v1849 = vsel %vm101, %v1841, %v1842
    %v1850 = vsel %vm558, %v1826, %v1849
    %v1851 = vsel %vm101, %v1842, %v1843
    %v1852 = vsel %vm558, %v1828, %v1851
    %v1853 = vsel %vm101, %v1843, %v1844
    %v1854 = vsel %vm558, %v1830, %v1853
    %v1855 = vsel %vm101, %v1845, %v1846
    %v1856 = vsel %vm558, %v1834, %v1855
    %v1857 = vsel %vm101, %v1846, %v1847
    %v1858 = vsel %vm558, %v1836, %v1857
    %v1859 = vsel %vm101, %v1847, %v1848
    %v1860 = vsel %vm558, %v1838, %v1859
    %1867 = vst [vmem:[#allocation2 + $0x180] sm:$0xff] %v1850
    %1868 = vst [vmem:[#allocation2 + $0x188] sm:$0xff] %v1852
    %1869 = vst [vmem:[#allocation2 + $0x190] sm:$0xff] %v1854
    %1870 = vst [vmem:[#allocation2 + $0x198] sm:$0xff] %v1856
    %1871 = vst [vmem:[#allocation2 + $0x1a0] sm:$0xff] %v1858
    %1872 = vst [vmem:[#allocation2 + $0x1a8] sm:$0xff] %v1860
    %v1873 = vld [vmem:[#allocation2] sm:$0xff]
    %v1874 = vld [vmem:[#allocation2 + $0x8] sm:$0xff]
    %v1875 = vld [vmem:[#allocation2 + $0x10] sm:$0xff]
    %v1876 = vld [vmem:[#allocation2 + $0x18] sm:$0xff]
    %v1877 = vld [vmem:[#allocation2 + $0x20] sm:$0xff]
    %v1878 = vld [vmem:[#allocation2 + $0x28] sm:$0xff]
    %v1879 = vld [vmem:[#allocation2 + $0x30] sm:$0xff]
    %v1880 = vld [vmem:[#allocation2 + $0x38] sm:$0xff]
    %v1881 = vld [vmem:[#allocation2 + $0x40] sm:$0xff]
    %v1882 = vld [vmem:[#allocation2 + $0x48] sm:$0xff]
    %v1883 = vld [vmem:[#allocation2 + $0x50] sm:$0xff]
    %v1884 = vld [vmem:[#allocation2 + $0x58] sm:$0xff]
    %v1885 = vld [vmem:[#allocation2 + $0x60] sm:$0xff]
    %v1886 = vld [vmem:[#allocation2 + $0x68] sm:$0xff]
    %v1887 = vld [vmem:[#allocation2 + $0x70] sm:$0xff]
    %v1888 = vld [vmem:[#allocation2 + $0x78] sm:$0xff]
    %v1889 = vld [vmem:[#allocation2 + $0x80] sm:$0xff]
    %v1890 = vld [vmem:[#allocation2 + $0x88] sm:$0xff]
    %v1891 = vld [vmem:[#allocation2 + $0x90] sm:$0xff]
    %v1892 = vld [vmem:[#allocation2 + $0x98] sm:$0xff]
    %v1893 = vld [vmem:[#allocation2 + $0xa0] sm:$0xff]
    %v1894 = vld [vmem:[#allocation2 + $0xa8] sm:$0xff]
    %v1895 = vld [vmem:[#allocation2 + $0xb0] sm:$0xff]
    %v1896 = vld [vmem:[#allocation2 + $0xb8] sm:$0xff]
    %v1897 = vld [vmem:[#allocation2 + $0xc0] sm:$0xff]
    %v1898 = vld [vmem:[#allocation2 + $0xc8] sm:$0xff]
    %v1899 = vld [vmem:[#allocation2 + $0xd0] sm:$0xff]
    %v1900 = vld [vmem:[#allocation2 + $0xd8] sm:$0xff]
    %v1901 = vld [vmem:[#allocation2 + $0xe0] sm:$0xff]
    %v1902 = vld [vmem:[#allocation2 + $0xe8] sm:$0xff]
    %v1903 = vld [vmem:[#allocation2 + $0xf0] sm:$0xff]
    %v1904 = vld [vmem:[#allocation2 + $0xf8] sm:$0xff]
    %v1905 = vld [vmem:[#allocation2 + $0x100] sm:$0xff]
    %v1906 = vld [vmem:[#allocation2 + $0x108] sm:$0xff]
    %v1907 = vld [vmem:[#allocation2 + $0x110] sm:$0xff]
    %v1908 = vld [vmem:[#allocation2 + $0x118] sm:$0xff]
    %v1909 = vld [vmem:[#allocation2 + $0x120] sm:$0xff]
    %v1910 = vld [vmem:[#allocation2 + $0x128] sm:$0xff]
    %v1911 = vld [vmem:[#allocation2 + $0x130] sm:$0xff]
    %v1912 = vld [vmem:[#allocation2 + $0x138] sm:$0xff]
    %v1913 = vld [vmem:[#allocation2 + $0x140] sm:$0xff]
    %v1914 = vld [vmem:[#allocation2 + $0x148] sm:$0xff]
    %v1915 = vld [vmem:[#allocation2 + $0x150] sm:$0xff]
    %v1916 = vld [vmem:[#allocation2 + $0x158] sm:$0xff]
    %v1917 = vld [vmem:[#allocation2 + $0x160] sm:$0xff]
    %v1918 = vld [vmem:[#allocation2 + $0x168] sm:$0xff]
    %v1919 = vld [vmem:[#allocation2 + $0x170] sm:$0xff]
    %v1920 = vld [vmem:[#allocation2 + $0x178] sm:$0xff]
    %v1921 = vld [vmem:[#allocation2 + $0x180] sm:$0xff]
    %v1922 = vld [vmem:[#allocation2 + $0x188] sm:$0xff]
    %v1923 = vld [vmem:[#allocation2 + $0x190] sm:$0xff]
    %v1924 = vld [vmem:[#allocation2 + $0x198] sm:$0xff]
    %v1925 = vld [vmem:[#allocation2 + $0x1a0] sm:$0xff]
    %v1926 = vld [vmem:[#allocation2 + $0x1a8] sm:$0xff]
    %v1929 = vunpack.c.l.b16 %v1278
    %v1930 = vunpack.c.h.b16 %v1278
    %v1931 = vunpack.c.l.b16 %v1279
    %v1932 = vunpack.c.h.b16 %v1279
    %v1933 = vpack.c.b16 %v1931, %v1929
    %v1934 = vpack.c.b16 %v1932, %v1930
    %v1990 = vunpack.c.l.b16 %v1873
    %v1991 = vunpack.c.h.b16 %v1873
    %v1992 = vunpack.c.l.b16 %v1874
    %v1993 = vunpack.c.h.b16 %v1874
    %v1994 = vunpack.c.l.b16 %v1875
    %v1995 = vunpack.c.h.b16 %v1875
    %v1996 = vunpack.c.l.b16 %v1876
    %v1997 = vunpack.c.h.b16 %v1876
    %v1998 = vunpack.c.l.b16 %v1877
    %v1999 = vunpack.c.h.b16 %v1877
    %v2000 = vunpack.c.l.b16 %v1878
    %v2001 = vunpack.c.h.b16 %v1878
    %v2002 = vunpack.c.l.b16 %v1879
    %v2003 = vunpack.c.h.b16 %v1879
    %v2004 = vunpack.c.l.b16 %v1880
    %v2005 = vunpack.c.h.b16 %v1880
    %v2006 = vunpack.c.l.b16 %v1881
    %v2007 = vunpack.c.h.b16 %v1881
    %v2008 = vunpack.c.l.b16 %v1882
    %v2009 = vunpack.c.h.b16 %v1882
    %v2010 = vunpack.c.l.b16 %v1883
    %v2011 = vunpack.c.h.b16 %v1883
    %v2012 = vunpack.c.l.b16 %v1884
    %v2013 = vunpack.c.h.b16 %v1884
    %v2014 = vunpack.c.l.b16 %v1885
    %v2015 = vunpack.c.h.b16 %v1885
    %v2016 = vunpack.c.l.b16 %v1886
    %v2017 = vunpack.c.h.b16 %v1886
    %v2018 = vunpack.c.l.b16 %v1887
    %v2019 = vunpack.c.h.b16 %v1887
    %v2020 = vunpack.c.l.b16 %v1888
    %v2021 = vunpack.c.h.b16 %v1888
    %v2022 = vunpack.c.l.b16 %v1889
    %v2023 = vunpack.c.h.b16 %v1889
    %v2024 = vunpack.c.l.b16 %v1890
    %v2025 = vunpack.c.h.b16 %v1890
    %v2026 = vunpack.c.l.b16 %v1891
    %v2027 = vunpack.c.h.b16 %v1891
    %v2028 = vunpack.c.l.b16 %v1892
    %v2029 = vunpack.c.h.b16 %v1892
    %v2030 = vunpack.c.l.b16 %v1893
    %v2031 = vunpack.c.h.b16 %v1893
    %v2032 = vunpack.c.l.b16 %v1894
    %v2033 = vunpack.c.h.b16 %v1894
    %v2034 = vunpack.c.l.b16 %v1895
    %v2035 = vunpack.c.h.b16 %v1895
    %v2036 = vunpack.c.l.b16 %v1896
    %v2037 = vunpack.c.h.b16 %v1896
    %v2038 = vunpack.c.l.b16 %v1897
    %v2039 = vunpack.c.h.b16 %v1897
    %v2040 = vunpack.c.l.b16 %v1898
    %v2041 = vunpack.c.h.b16 %v1898
    %v2042 = vunpack.c.l.b16 %v1899
    %v2043 = vunpack.c.h.b16 %v1899
    %v2044 = vunpack.c.l.b16 %v1900
    %v2045 = vunpack.c.h.b16 %v1900
    %v2046 = vunpack.c.l.b16 %v1901
    %v2047 = vunpack.c.h.b16 %v1901
    %v2048 = vunpack.c.l.b16 %v1902
    %v2049 = vunpack.c.h.b16 %v1902
    %v2050 = vunpack.c.l.b16 %v1903
    %v2051 = vunpack.c.h.b16 %v1903
    %v2052 = vunpack.c.l.b16 %v1904
    %v2053 = vunpack.c.h.b16 %v1904
    %v2054 = vunpack.c.l.b16 %v1905
    %v2055 = vunpack.c.h.b16 %v1905
    %v2056 = vunpack.c.l.b16 %v1906
    %v2057 = vunpack.c.h.b16 %v1906
    %v2058 = vunpack.c.l.b16 %v1907
    %v2059 = vunpack.c.h.b16 %v1907
    %v2060 = vunpack.c.l.b16 %v1908
    %v2061 = vunpack.c.h.b16 %v1908
    %v2062 = vunpack.c.l.b16 %v1909
    %v2063 = vunpack.c.h.b16 %v1909
    %v2064 = vunpack.c.l.b16 %v1910
    %v2065 = vunpack.c.h.b16 %v1910
    %v2066 = vunpack.c.l.b16 %v1911
    %v2067 = vunpack.c.h.b16 %v1911
    %v2068 = vunpack.c.l.b16 %v1912
    %v2069 = vunpack.c.h.b16 %v1912
    %v2070 = vunpack.c.l.b16 %v1913
    %v2071 = vunpack.c.h.b16 %v1913
    %v2072 = vunpack.c.l.b16 %v1914
    %v2073 = vunpack.c.h.b16 %v1914
    %v2074 = vunpack.c.l.b16 %v1915
    %v2075 = vunpack.c.h.b16 %v1915
    %v2076 = vunpack.c.l.b16 %v1916
    %v2077 = vunpack.c.h.b16 %v1916
    %v2078 = vunpack.c.l.b16 %v1917
    %v2079 = vunpack.c.h.b16 %v1917
    %v2080 = vunpack.c.l.b16 %v1918
    %v2081 = vunpack.c.h.b16 %v1918
    %v2082 = vunpack.c.l.b16 %v1919
    %v2083 = vunpack.c.h.b16 %v1919
    %v2084 = vunpack.c.l.b16 %v1920
    %v2085 = vunpack.c.h.b16 %v1920
    %v2086 = vunpack.c.l.b16 %v1921
    %v2087 = vunpack.c.h.b16 %v1921
    %v2088 = vunpack.c.l.b16 %v1922
    %v2089 = vunpack.c.h.b16 %v1922
    %v2090 = vunpack.c.l.b16 %v1923
    %v2091 = vunpack.c.h.b16 %v1923
    %v2092 = vunpack.c.l.b16 %v1924
    %v2093 = vunpack.c.h.b16 %v1924
    %v2094 = vunpack.c.l.b16 %v1925
    %v2095 = vunpack.c.h.b16 %v1925
    %v2096 = vunpack.c.l.b16 %v1926
    %v2097 = vunpack.c.h.b16 %v1926
    %v2098 = vpack.c.b16 %v1996, %v1990
    %v2099 = vpack.c.b16 %v1997, %v1991
    %v2100 = vpack.c.b16 %v1998, %v1992
    %v2101 = vpack.c.b16 %v1999, %v1993
    %v2102 = vpack.c.b16 %v2000, %v1994
    %v2103 = vpack.c.b16 %v2001, %v1995
    %v2104 = vpack.c.b16 %v2008, %v2002
    %v2105 = vpack.c.b16 %v2009, %v2003
    %v2106 = vpack.c.b16 %v2010, %v2004
    %v2107 = vpack.c.b16 %v2011, %v2005
    %v2108 = vpack.c.b16 %v2012, %v2006
    %v2109 = vpack.c.b16 %v2013, %v2007
    %v2110 = vpack.c.b16 %v2020, %v2014
    %v2111 = vpack.c.b16 %v2021, %v2015
    %v2112 = vpack.c.b16 %v2022, %v2016
    %v2113 = vpack.c.b16 %v2023, %v2017
    %v2114 = vpack.c.b16 %v2024, %v2018
    %v2115 = vpack.c.b16 %v2025, %v2019
    %v2116 = vpack.c.b16 %v2032, %v2026
    %v2117 = vpack.c.b16 %v2033, %v2027
    %v2118 = vpack.c.b16 %v2034, %v2028
    %v2119 = vpack.c.b16 %v2035, %v2029
    %v2120 = vpack.c.b16 %v2036, %v2030
    %v2121 = vpack.c.b16 %v2037, %v2031
    %v2122 = vpack.c.b16 %v2044, %v2038
    %v2123 = vpack.c.b16 %v2045, %v2039
    %v2124 = vpack.c.b16 %v2046, %v2040
    %v2125 = vpack.c.b16 %v2047, %v2041
    %v2126 = vpack.c.b16 %v2048, %v2042
    %v2127 = vpack.c.b16 %v2049, %v2043
    %v2128 = vpack.c.b16 %v2056, %v2050
    %v2129 = vpack.c.b16 %v2057, %v2051
    %v2130 = vpack.c.b16 %v2058, %v2052
    %v2131 = vpack.c.b16 %v2059, %v2053
    %v2132 = vpack.c.b16 %v2060, %v2054
    %v2133 = vpack.c.b16 %v2061, %v2055
    %v2134 = vpack.c.b16 %v2068, %v2062
    %v2135 = vpack.c.b16 %v2069, %v2063
    %v2136 = vpack.c.b16 %v2070, %v2064
    %v2137 = vpack.c.b16 %v2071, %v2065
    %v2138 = vpack.c.b16 %v2072, %v2066
    %v2139 = vpack.c.b16 %v2073, %v2067
    %v2140 = vpack.c.b16 %v2080, %v2074
    %v2141 = vpack.c.b16 %v2081, %v2075
    %v2142 = vpack.c.b16 %v2082, %v2076
    %v2143 = vpack.c.b16 %v2083, %v2077
    %v2144 = vpack.c.b16 %v2084, %v2078
    %v2145 = vpack.c.b16 %v2085, %v2079
    %v2146 = vpack.c.b16 %v2092, %v2086
    %v2147 = vpack.c.b16 %v2093, %v2087
    %v2148 = vpack.c.b16 %v2094, %v2088
    %v2149 = vpack.c.b16 %v2095, %v2089
    %v2150 = vpack.c.b16 %v2096, %v2090
    %v2151 = vpack.c.b16 %v2097, %v2091
    %v2207 = vsel %vm917, %v1934, 0
    %2209 = vmatpush.bf16.msra.mxu0 %v2140
    %2210 = vmatpush.bf16.msra.mxu0 %v2134
    %2211 = vmatpush.bf16.msra.mxu0 %v2128
    %2212 = vmatpush.bf16.msra.mxu0 %v2122
    %2213 = vmatpush.bf16.msra.mxu0 %v2116
    %2214 = vmatpush.bf16.msra.mxu0 %v2110
    %2215 = vmatpush.bf16.msra.mxu0 %v2104
    %2216 = vmatpush.bf16.msra.mxu0 %v2098
    %2217 = vmatmul.bf16.gmra.mxu0 %v1933
    %v2218 = vpop.f32.mrf.mxu0
    %v2219 = vadd.f32 0.0, %v2218
    %v2220 = vpop.f32.mrf.mxu0
    %v2221 = vadd.f32 0.0, %v2220
    %2222 = vdwg.mxu0
    %2223 = vmatpush.bf16.msra.mxu0 0
    %2224 = vmatpush.bf16.msra.mxu0 0
    %2225 = vmatpush.bf16.msra.mxu0 0
    %2226 = vmatpush.bf16.msra.mxu0 0
    %2227 = vmatpush.bf16.msra.mxu0 0
    %2228 = vmatpush.bf16.msra.mxu0 0
    %2229 = vmatpush.bf16.msra.mxu0 0
    %2230 = vmatpush.bf16.msra.mxu0 %v2146
    %2231 = vmatmul.bf16.gmra.mxu0 %v2207
    %v2232 = vpop.f32.mrf.mxu0
    %v2233 = vadd.f32 %v2219, %v2232
    %v2234 = vpop.f32.mrf.mxu0
    %v2235 = vadd.f32 %v2221, %v2234
    %2236 = vdwg.mxu0
    %2237 = vmatpush.bf16.msra.mxu0 %v2141
    %2238 = vmatpush.bf16.msra.mxu0 %v2135
    %2239 = vmatpush.bf16.msra.mxu0 %v2129
    %2240 = vmatpush.bf16.msra.mxu0 %v2123
    %2241 = vmatpush.bf16.msra.mxu0 %v2117
    %2242 = vmatpush.bf16.msra.mxu0 %v2111
    %2243 = vmatpush.bf16.msra.mxu0 %v2105
    %2244 = vmatpush.bf16.msra.mxu0 %v2099
    %2245 = vmatmul.bf16.gmra.mxu0 %v1933
    %v2246 = vpop.f32.mrf.mxu0
    %v2247 = vadd.f32 0.0, %v2246
    %v2248 = vpop.f32.mrf.mxu0
    %v2249 = vadd.f32 0.0, %v2248
    %2250 = vdwg.mxu0
    %2251 = vmatpush.bf16.msra.mxu0 0
    %2252 = vmatpush.bf16.msra.mxu0 0
    %2253 = vmatpush.bf16.msra.mxu0 0
    %2254 = vmatpush.bf16.msra.mxu0 0
    %2255 = vmatpush.bf16.msra.mxu0 0
    %2256 = vmatpush.bf16.msra.mxu0 0
    %2257 = vmatpush.bf16.msra.mxu0 0
    %2258 = vmatpush.bf16.msra.mxu0 %v2147
    %2259 = vmatmul.bf16.gmra.mxu0 %v2207
    %v2260 = vpop.f32.mrf.mxu0
    %v2261 = vadd.f32 %v2247, %v2260
    %v2262 = vpop.f32.mrf.mxu0
    %v2263 = vadd.f32 %v2249, %v2262
    %2264 = vdwg.mxu0
    %2265 = vmatpush.bf16.msra.mxu0 %v2142
    %2266 = vmatpush.bf16.msra.mxu0 %v2136
    %2267 = vmatpush.bf16.msra.mxu0 %v2130
    %2268 = vmatpush.bf16.msra.mxu0 %v2124
    %2269 = vmatpush.bf16.msra.mxu0 %v2118
    %2270 = vmatpush.bf16.msra.mxu0 %v2112
    %2271 = vmatpush.bf16.msra.mxu0 %v2106
    %2272 = vmatpush.bf16.msra.mxu0 %v2100
    %2273 = vmatmul.bf16.gmra.mxu0 %v1933
    %v2274 = vpop.f32.mrf.mxu0
    %v2275 = vadd.f32 0.0, %v2274
    %v2276 = vpop.f32.mrf.mxu0
    %v2277 = vadd.f32 0.0, %v2276
    %2278 = vdwg.mxu0
    %2279 = vmatpush.bf16.msra.mxu0 0
    %2280 = vmatpush.bf16.msra.mxu0 0
    %2281 = vmatpush.bf16.msra.mxu0 0
    %2282 = vmatpush.bf16.msra.mxu0 0
    %2283 = vmatpush.bf16.msra.mxu0 0
    %2284 = vmatpush.bf16.msra.mxu0 0
    %2285 = vmatpush.bf16.msra.mxu0 0
    %2286 = vmatpush.bf16.msra.mxu0 %v2148
    %2287 = vmatmul.bf16.gmra.mxu0 %v2207
    %v2288 = vpop.f32.mrf.mxu0
    %v2289 = vadd.f32 %v2275, %v2288
    %v2290 = vpop.f32.mrf.mxu0
    %v2291 = vadd.f32 %v2277, %v2290
    %2292 = vdwg.mxu0
    %2293 = vmatpush.bf16.msra.mxu0 %v2143
    %2294 = vmatpush.bf16.msra.mxu0 %v2137
    %2295 = vmatpush.bf16.msra.mxu0 %v2131
    %2296 = vmatpush.bf16.msra.mxu0 %v2125
    %2297 = vmatpush.bf16.msra.mxu0 %v2119
    %2298 = vmatpush.bf16.msra.mxu0 %v2113
    %2299 = vmatpush.bf16.msra.mxu0 %v2107
    %2300 = vmatpush.bf16.msra.mxu0 %v2101
    %2301 = vmatmul.bf16.gmra.mxu0 %v1933
    %v2302 = vpop.f32.mrf.mxu0
    %v2303 = vadd.f32 0.0, %v2302
    %v2304 = vpop.f32.mrf.mxu0
    %v2305 = vadd.f32 0.0, %v2304
    %2306 = vdwg.mxu0
    %2307 = vmatpush.bf16.msra.mxu0 0
    %2308 = vmatpush.bf16.msra.mxu0 0
    %2309 = vmatpush.bf16.msra.mxu0 0
    %2310 = vmatpush.bf16.msra.mxu0 0
    %2311 = vmatpush.bf16.msra.mxu0 0
    %2312 = vmatpush.bf16.msra.mxu0 0
    %2313 = vmatpush.bf16.msra.mxu0 0
    %2314 = vmatpush.bf16.msra.mxu0 %v2149
    %2315 = vmatmul.bf16.gmra.mxu0 %v2207
    %v2316 = vpop.f32.mrf.mxu0
    %v2317 = vadd.f32 %v2303, %v2316
    %v2318 = vpop.f32.mrf.mxu0
    %v2319 = vadd.f32 %v2305, %v2318
    %2320 = vdwg.mxu0
    %2321 = vmatpush.bf16.msra.mxu0 %v2144
    %2322 = vmatpush.bf16.msra.mxu0 %v2138
    %2323 = vmatpush.bf16.msra.mxu0 %v2132
    %2324 = vmatpush.bf16.msra.mxu0 %v2126
    %2325 = vmatpush.bf16.msra.mxu0 %v2120
    %2326 = vmatpush.bf16.msra.mxu0 %v2114
    %2327 = vmatpush.bf16.msra.mxu0 %v2108
    %2328 = vmatpush.bf16.msra.mxu0 %v2102
    %2329 = vmatmul.bf16.gmra.mxu0 %v1933
    %v2330 = vpop.f32.mrf.mxu0
    %v2331 = vadd.f32 0.0, %v2330
    %v2332 = vpop.f32.mrf.mxu0
    %v2333 = vadd.f32 0.0, %v2332
    %2334 = vdwg.mxu0
    %2335 = vmatpush.bf16.msra.mxu0 0
    %2336 = vmatpush.bf16.msra.mxu0 0
    %2337 = vmatpush.bf16.msra.mxu0 0
    %2338 = vmatpush.bf16.msra.mxu0 0
    %2339 = vmatpush.bf16.msra.mxu0 0
    %2340 = vmatpush.bf16.msra.mxu0 0
    %2341 = vmatpush.bf16.msra.mxu0 0
    %2342 = vmatpush.bf16.msra.mxu0 %v2150
    %2343 = vmatmul.bf16.gmra.mxu0 %v2207
    %v2344 = vpop.f32.mrf.mxu0
    %v2345 = vadd.f32 %v2331, %v2344
    %v2346 = vpop.f32.mrf.mxu0
    %v2347 = vadd.f32 %v2333, %v2346
    %2348 = vdwg.mxu0
    %2349 = vmatpush.bf16.msra.mxu0 %v2145
    %2350 = vmatpush.bf16.msra.mxu0 %v2139
    %2351 = vmatpush.bf16.msra.mxu0 %v2133
    %2352 = vmatpush.bf16.msra.mxu0 %v2127
    %2353 = vmatpush.bf16.msra.mxu0 %v2121
    %2354 = vmatpush.bf16.msra.mxu0 %v2115
    %2355 = vmatpush.bf16.msra.mxu0 %v2109
    %2356 = vmatpush.bf16.msra.mxu0 %v2103
    %2357 = vmatmul.bf16.gmra.mxu0 %v1933
    %v2358 = vpop.f32.mrf.mxu0
    %v2359 = vadd.f32 0.0, %v2358
    %v2360 = vpop.f32.mrf.mxu0
    %v2361 = vadd.f32 0.0, %v2360
    %2362 = vdwg.mxu0
    %2363 = vmatpush.bf16.msra.mxu0 0
    %2364 = vmatpush.bf16.msra.mxu0 0
    %2365 = vmatpush.bf16.msra.mxu0 0
    %2366 = vmatpush.bf16.msra.mxu0 0
    %2367 = vmatpush.bf16.msra.mxu0 0
    %2368 = vmatpush.bf16.msra.mxu0 0
    %2369 = vmatpush.bf16.msra.mxu0 0
    %2370 = vmatpush.bf16.msra.mxu0 %v2151
    %2371 = vmatmul.bf16.gmra.mxu0 %v2207
    %v2372 = vpop.f32.mrf.mxu0
    %v2373 = vadd.f32 %v2359, %v2372
    %v2374 = vpop.f32.mrf.mxu0
    %v2375 = vadd.f32 %v2361, %v2374
    %2376 = vdwg.mxu0
    %v2377 = vadd.f32 %v945, %v2233
    %v2378 = vadd.f32 %v973, %v2261
    %v2379 = vadd.f32 %v1001, %v2289
    %v2380 = vadd.f32 %v1029, %v2317
    %v2381 = vadd.f32 %v1057, %v2345
    %v2382 = vadd.f32 %v1085, %v2373
    %v2383 = vadd.f32 %v947, %v2235
    %v2384 = vadd.f32 %v975, %v2263
    %v2385 = vadd.f32 %v1003, %v2291
    %v2386 = vadd.f32 %v1031, %v2319
    %v2387 = vadd.f32 %v1059, %v2347
    %v2388 = vadd.f32 %v1087, %v2375
    %v2389 = vmul.f32 %v2377, %v1090
    %v2390 = vmul.f32 %v2378, %v1091
    %v2391 = vmul.f32 %v2379, %v1092
    %v2392 = vmul.f32 %v2380, %v1093
    %v2393 = vmul.f32 %v2381, %v1094
    %v2394 = vmul.f32 %v2382, %v1095
    %v2395 = vmul.f32 %v2383, %v1090
    %v2396 = vmul.f32 %v2384, %v1091
    %v2397 = vmul.f32 %v2385, %v1092
    %v2398 = vmul.f32 %v2386, %v1093
    %v2399 = vmul.f32 %v2387, %v1094
    %v2400 = vmul.f32 %v2388, %v1095
    %v2401 = vadd.f32 %v2389, %v2390
    %v2402 = vadd.f32 %v2401, %v2391
    %v2403 = vadd.f32 %v2402, %v2392
    %v2404 = vadd.f32 %v2403, %v2393
    %v2405 = vadd.f32 %v2404, %v2394
    %2406 = vadd.xlane.f32.xlu0 %v2405
    %v2407 = vpop.xlane.xlu0 %2406
    %v2408 = vadd.f32 %v2395, %v2396
    %v2409 = vadd.f32 %v2408, %v2397
    %v2410 = vadd.f32 %v2409, %v2398
    %v2411 = vadd.f32 %v2410, %v2399
    %v2412 = vadd.f32 %v2411, %v2400
    %2413 = vadd.xlane.f32.xlu0 %v2412
    %v2414 = vpop.xlane.xlu0 %2413
    %v2415 = vmul.f32 %v2407, 0.001953125
    %v2416 = vmul.f32 %v2414, 0.001953125
    %v2417 = vsub.f32 %v2377, %v2415
    %v2418 = vsub.f32 %v2378, %v2415
    %v2419 = vsub.f32 %v2379, %v2415
    %v2420 = vsub.f32 %v2380, %v2415
    %v2421 = vsub.f32 %v2381, %v2415
    %v2422 = vsub.f32 %v2382, %v2415
    %v2423 = vsub.f32 %v2383, %v2416
    %v2424 = vsub.f32 %v2384, %v2416
    %v2425 = vsub.f32 %v2385, %v2416
    %v2426 = vsub.f32 %v2386, %v2416
    %v2427 = vsub.f32 %v2387, %v2416
    %v2428 = vsub.f32 %v2388, %v2416
    %v2429 = vmul.f32 %v2417, %v1090
    %v2430 = vmul.f32 %v2418, %v1091
    %v2431 = vmul.f32 %v2419, %v1092
    %v2432 = vmul.f32 %v2420, %v1093
    %v2433 = vmul.f32 %v2421, %v1094
    %v2434 = vmul.f32 %v2422, %v1095
    %v2435 = vmul.f32 %v2423, %v1090
    %v2436 = vmul.f32 %v2424, %v1091
    %v2437 = vmul.f32 %v2425, %v1092
    %v2438 = vmul.f32 %v2426, %v1093
    %v2439 = vmul.f32 %v2427, %v1094
    %v2440 = vmul.f32 %v2428, %v1095
    %v2441 = vmul.f32 %v2429, %v2429
    %v2442 = vmul.f32 %v2430, %v2430
    %v2443 = vmul.f32 %v2431, %v2431
    %v2444 = vmul.f32 %v2432, %v2432
    %v2445 = vmul.f32 %v2433, %v2433
    %v2446 = vmul.f32 %v2434, %v2434
    %v2447 = vmul.f32 %v2435, %v2435
    %v2448 = vmul.f32 %v2436, %v2436
    %v2449 = vmul.f32 %v2437, %v2437
    %v2450 = vmul.f32 %v2438, %v2438
    %v2451 = vmul.f32 %v2439, %v2439
    %v2452 = vmul.f32 %v2440, %v2440
    %v2453 = vadd.f32 %v2441, %v2442
    %v2454 = vadd.f32 %v2453, %v2443
    %v2455 = vadd.f32 %v2454, %v2444
    %v2456 = vadd.f32 %v2455, %v2445
    %v2457 = vadd.f32 %v2456, %v2446
    %2458 = vadd.xlane.f32.xlu0 %v2457
    %v2459 = vpop.xlane.xlu0 %2458
    %v2460 = vadd.f32 %v2447, %v2448
    %v2461 = vadd.f32 %v2460, %v2449
    %v2462 = vadd.f32 %v2461, %v2450
    %v2463 = vadd.f32 %v2462, %v2451
    %v2464 = vadd.f32 %v2463, %v2452
    %2465 = vadd.xlane.f32.xlu0 %v2464
    %v2466 = vpop.xlane.xlu0 %2465
    %v2467 = vmul.f32 %v2459, 0.001953125
    %v2468 = vmul.f32 %v2466, 0.001953125
    %v2469 = vadd.f32 %v2467, 1e-05
    %v2470 = vadd.f32 %v2468, 1e-05
    %v2471 = vrsqrt.pop %v2469
    %v2472 = vmul.f32 %v2471, %v2469
    %v2473 = vmul.f32 %v2472, %v2471
    %v2474 = vmul.f32 0.5, %v2473
    %v2475 = vsub.f32 1.5, %v2474
    %v2476 = vmul.f32 %v2471, %v2475
    %vm2477 = vweird.f32 %v2469
    %vm2478 = vweird.f32 %v2471
    %vm2479 = vmor %vm2477, %vm2478
    %v2480 = vsel %vm2479, %v2471, %v2476
    %v2481 = vrsqrt.pop %v2470
    %v2482 = vmul.f32 %v2481, %v2470
    %v2483 = vmul.f32 %v2482, %v2481
    %v2484 = vmul.f32 0.5, %v2483
    %v2485 = vsub.f32 1.5, %v2484
    %v2486 = vmul.f32 %v2481, %v2485
    %vm2487 = vweird.f32 %v2470
    %vm2488 = vweird.f32 %v2481
    %vm2489 = vmor %vm2487, %vm2488
    %v2490 = vsel %vm2489, %v2481, %v2486
    %v2491 = vmul.f32 %v44, %v2480
    %v2492 = vmul.f32 %v45, %v2490
    %v2493 = vmul.f32 %v2415, %v2491
    %v2494 = vmul.f32 %v2416, %v2492
    %v2495 = vsub.f32 %v46, %v2493
    %v2496 = vsub.f32 %v47, %v2494
    %2498 = vset.pattern.permute.xlu0 0
    %2499 = vperm.xlu0 %2498, %v2491
    %v2500 = vpop.permute.xlu0 %2499
    %2503 = vset.pattern.permute.xlu0 0
    %2504 = vperm.xlu0 %2503, %v2492
    %v2505 = vpop.permute.xlu0 %2504
    %v2507 = vmul.f32 %v2377, %v2500
    %v2508 = vmul.f32 %v2378, %v2500
    %v2509 = vmul.f32 %v2379, %v2500
    %v2510 = vmul.f32 %v2380, %v2500
    %v2511 = vmul.f32 %v2381, %v2500
    %v2512 = vmul.f32 %v2382, %v2500
    %v2513 = vmul.f32 %v2383, %v2505
    %v2514 = vmul.f32 %v2384, %v2505
    %v2515 = vmul.f32 %v2385, %v2505
    %v2516 = vmul.f32 %v2386, %v2505
    %v2517 = vmul.f32 %v2387, %v2505
    %v2518 = vmul.f32 %v2388, %v2505
    %2520 = vset.pattern.permute.xlu0 0
    %2521 = vperm.xlu0 %2520, %v2495
    %v2522 = vpop.permute.xlu0 %2521
    %2525 = vset.pattern.permute.xlu0 0
    %2526 = vperm.xlu0 %2525, %v2496
    %v2527 = vpop.permute.xlu0 %2526
    %v2529 = vadd.f32 %v2507, %v2522
    %v2530 = vadd.f32 %v2508, %v2522
    %v2531 = vadd.f32 %v2509, %v2522
    %v2532 = vadd.f32 %v2510, %v2522
    %v2533 = vadd.f32 %v2511, %v2522
    %v2534 = vadd.f32 %v2512, %v2522
    %v2535 = vadd.f32 %v2513, %v2527
    %v2536 = vadd.f32 %v2514, %v2527
    %v2537 = vadd.f32 %v2515, %v2527
    %v2538 = vadd.f32 %v2516, %v2527
    %v2539 = vadd.f32 %v2517, %v2527
    %v2540 = vadd.f32 %v2518, %v2527
    %v2541 = vmax.f32 %v2529, 0.0
    %v2542 = vmax.f32 %v2530, 0.0
    %v2543 = vmax.f32 %v2531, 0.0
    %v2544 = vmax.f32 %v2532, 0.0
    %v2545 = vmax.f32 %v2533, 0.0
    %v2546 = vmax.f32 %v2534, 0.0
    %v2547 = vmax.f32 %v2535, 0.0
    %v2548 = vmax.f32 %v2536, 0.0
    %v2549 = vmax.f32 %v2537, 0.0
    %v2550 = vmax.f32 %v2538, 0.0
    %v2551 = vmax.f32 %v2539, 0.0
    %v2552 = vmax.f32 %v2540, 0.0
    %v2553 = vmul.f32 %v2541, %v1090
    %v2554 = vmul.f32 %v2542, %v1091
    %v2555 = vmul.f32 %v2543, %v1092
    %v2556 = vmul.f32 %v2544, %v1093
    %v2557 = vmul.f32 %v2545, %v1094
    %v2558 = vmul.f32 %v2546, %v1095
    %v2559 = vmul.f32 %v2547, %v1090
    %v2560 = vmul.f32 %v2548, %v1091
    %v2561 = vmul.f32 %v2549, %v1092
    %v2562 = vmul.f32 %v2550, %v1093
    %v2563 = vmul.f32 %v2551, %v1094
    %v2564 = vmul.f32 %v2552, %v1095
    %v2565 = vpack.c.bf16 %v2554, %v2553
    %v2566 = vpack.c.bf16 %v2556, %v2555
    %v2567 = vpack.c.bf16 %v2558, %v2557
    %v2568 = vpack.c.bf16 %v2560, %v2559
    %v2569 = vpack.c.bf16 %v2562, %v2561
    %v2570 = vpack.c.bf16 %v2564, %v2563
    %2577 = vrot.lane.b32.xlu0 %v2565, 19
    %v2578 = vpop.permute.xlu0 %2577
    %2579 = vrot.lane.b32.xlu0 %v2566, 19
    %v2580 = vpop.permute.xlu0 %2579
    %2581 = vrot.lane.b32.xlu0 %v2567, 19
    %v2582 = vpop.permute.xlu0 %2581
    %2583 = vrot.lane.b32.xlu0 %v2568, 19
    %v2584 = vpop.permute.xlu0 %2583
    %2585 = vrot.lane.b32.xlu0 %v2569, 19
    %v2586 = vpop.permute.xlu0 %2585
    %2587 = vrot.lane.b32.xlu0 %v2570, 19
    %v2588 = vpop.permute.xlu0 %2587
    %v2589 = vrot.slane %v2578, 4
    %v2590 = vrot.slane %v2580, 4
    %v2591 = vrot.slane %v2582, 4
    %v2592 = vrot.slane %v2584, 4
    %v2593 = vrot.slane %v2586, 4
    %v2594 = vrot.slane %v2588, 4
    %v2595 = vsel %vm1318, %v2589, %v2578
    %v2596 = vsel %vm101, %v2589, %v2590
    %v2597 = vsel %vm1318, %v2596, %v2580
    %v2598 = vsel %vm101, %v2590, %v2591
    %v2599 = vsel %vm1318, %v2598, %v2582
    %v2600 = vsel %vm1318, %v2592, %v2584
    %v2601 = vsel %vm101, %v2592, %v2593
    %v2602 = vsel %vm1318, %v2601, %v2586
    %v2603 = vsel %vm101, %v2593, %v2594
    %v2604 = vsel %vm1318, %v2603, %v2588
    %2613 = vst.msk [vmem:[#allocation3] sm:$0xff] %vm1339, %v2595
    %2614 = vst [vmem:[#allocation3 + $0x8] sm:$0xff] %v2597
    %2615 = vst [vmem:[#allocation3 + $0x10] sm:$0xff] %v2599
    %2616 = vst.msk [vmem:[#allocation3 + $0x18] sm:$0xf] %vm1343, %v2591
    %2617 = vst.msk [vmem:[#allocation3 + $0x1c] sm:$0xff] %vm1339, %v2600
    %2618 = vst [vmem:[#allocation3 + $0x24] sm:$0xff] %v2602
    %2619 = vst [vmem:[#allocation3 + $0x2c] sm:$0xff] %v2604
    %2620 = vst.msk [vmem:[#allocation3 + $0x34] sm:$0xf] %vm1343, %v2594
    %v2621 = vld [vmem:[#allocation3] sm:$0xff]
    %v2622 = vld [vmem:[#allocation3 + $0x8] sm:$0xff]
    %v2623 = vld [vmem:[#allocation3 + $0x10] sm:$0xff]
    %v2624 = vld [vmem:[#allocation3 + $0x1c] sm:$0xff]
    %v2625 = vld [vmem:[#allocation3 + $0x24] sm:$0xff]
    %v2626 = vld [vmem:[#allocation3 + $0x2c] sm:$0xff]
    %2627 = vst [vmem:[#allocation2] sm:$0xff] %v2621
    %2628 = vst [vmem:[#allocation2 + $0x8] sm:$0xff] %v2622
    %2629 = vst [vmem:[#allocation2 + $0x10] sm:$0xff] %v2623
    %2630 = vst [vmem:[#allocation2 + $0x18] sm:$0xff] %v2624
    %2631 = vst [vmem:[#allocation2 + $0x20] sm:$0xff] %v2625
    %2632 = vst [vmem:[#allocation2 + $0x28] sm:$0xff] %v2626
    %v2633 = vld [vmem:[#allocation3] sm:$0xff]
    %v2634 = vld [vmem:[#allocation3 + $0x8] sm:$0xff]
    %v2635 = vld [vmem:[#allocation3 + $0x10] sm:$0xff]
    %v2636 = vld [vmem:[#allocation3 + $0x18] sm:$0xf]
    %v2637 = vld [vmem:[#allocation3 + $0x1c] sm:$0xff]
    %v2638 = vld [vmem:[#allocation3 + $0x24] sm:$0xff]
    %v2639 = vld [vmem:[#allocation3 + $0x2c] sm:$0xff]
    %v2640 = vld [vmem:[#allocation3 + $0x34] sm:$0xf]
    %2649 = vrot.lane.b32.xlu0 %v2633, 127
    %v2650 = vpop.permute.xlu0 %2649
    %2651 = vrot.lane.b32.xlu0 %v2634, 127
    %v2652 = vpop.permute.xlu0 %2651
    %2653 = vrot.lane.b32.xlu0 %v2635, 127
    %v2654 = vpop.permute.xlu0 %2653
    %2655 = vrot.lane.b32.xlu0 %v2636, 127
    %v2656 = vpop.permute.xlu0 %2655
    %2657 = vrot.lane.b32.xlu0 %v2637, 127
    %v2658 = vpop.permute.xlu0 %2657
    %2659 = vrot.lane.b32.xlu0 %v2638, 127
    %v2660 = vpop.permute.xlu0 %2659
    %2661 = vrot.lane.b32.xlu0 %v2639, 127
    %v2662 = vpop.permute.xlu0 %2661
    %2663 = vrot.lane.b32.xlu0 %v2640, 127
    %v2664 = vpop.permute.xlu0 %2663
    %v2665 = vrot.slane %v2650, 4
    %v2666 = vrot.slane %v2652, 4
    %v2667 = vrot.slane %v2654, 4
    %v2668 = vrot.slane %v2656, 4
    %v2669 = vrot.slane %v2658, 4
    %v2670 = vrot.slane %v2660, 4
    %v2671 = vrot.slane %v2662, 4
    %v2672 = vrot.slane %v2664, 4
    %v2673 = vsel %vm101, %v2665, %v2666
    %v2674 = vsel %vm103, %v2650, %v2673
    %v2675 = vsel %vm101, %v2666, %v2667
    %v2676 = vsel %vm103, %v2652, %v2675
    %v2677 = vsel %vm101, %v2667, %v2668
    %v2678 = vsel %vm103, %v2654, %v2677
    %v2679 = vsel %vm101, %v2669, %v2670
    %v2680 = vsel %vm103, %v2658, %v2679
    %v2681 = vsel %vm101, %v2670, %v2671
    %v2682 = vsel %vm103, %v2660, %v2681
    %v2683 = vsel %vm101, %v2671, %v2672
    %v2684 = vsel %vm103, %v2662, %v2683
    %2691 = vst [vmem:[#allocation2 + $0x30] sm:$0xff] %v2674
    %2692 = vst [vmem:[#allocation2 + $0x38] sm:$0xff] %v2676
    %2693 = vst [vmem:[#allocation2 + $0x40] sm:$0xff] %v2678
    %2694 = vst [vmem:[#allocation2 + $0x48] sm:$0xff] %v2680
    %2695 = vst [vmem:[#allocation2 + $0x50] sm:$0xff] %v2682
    %2696 = vst [vmem:[#allocation2 + $0x58] sm:$0xff] %v2684
    %v2697 = vld [vmem:[#allocation3] sm:$0xff]
    %v2698 = vld [vmem:[#allocation3 + $0x8] sm:$0xff]
    %v2699 = vld [vmem:[#allocation3 + $0x10] sm:$0xff]
    %v2700 = vld [vmem:[#allocation3 + $0x18] sm:$0xf]
    %v2701 = vld [vmem:[#allocation3 + $0x1c] sm:$0xff]
    %v2702 = vld [vmem:[#allocation3 + $0x24] sm:$0xff]
    %v2703 = vld [vmem:[#allocation3 + $0x2c] sm:$0xff]
    %v2704 = vld [vmem:[#allocation3 + $0x34] sm:$0xf]
    %2713 = vrot.lane.b32.xlu0 %v2697, 126
    %v2714 = vpop.permute.xlu0 %2713
    %2715 = vrot.lane.b32.xlu0 %v2698, 126
    %v2716 = vpop.permute.xlu0 %2715
    %2717 = vrot.lane.b32.xlu0 %v2699, 126
    %v2718 = vpop.permute.xlu0 %2717
    %2719 = vrot.lane.b32.xlu0 %v2700, 126
    %v2720 = vpop.permute.xlu0 %2719
    %2721 = vrot.lane.b32.xlu0 %v2701, 126
    %v2722 = vpop.permute.xlu0 %2721
    %2723 = vrot.lane.b32.xlu0 %v2702, 126
    %v2724 = vpop.permute.xlu0 %2723
    %2725 = vrot.lane.b32.xlu0 %v2703, 126
    %v2726 = vpop.permute.xlu0 %2725
    %2727 = vrot.lane.b32.xlu0 %v2704, 126
    %v2728 = vpop.permute.xlu0 %2727
    %v2729 = vrot.slane %v2714, 4
    %v2730 = vrot.slane %v2716, 4
    %v2731 = vrot.slane %v2718, 4
    %v2732 = vrot.slane %v2720, 4
    %v2733 = vrot.slane %v2722, 4
    %v2734 = vrot.slane %v2724, 4
    %v2735 = vrot.slane %v2726, 4
    %v2736 = vrot.slane %v2728, 4
    %v2737 = vsel %vm101, %v2729, %v2730
    %v2738 = vsel %vm168, %v2714, %v2737
    %v2739 = vsel %vm101, %v2730, %v2731
    %v2740 = vsel %vm168, %v2716, %v2739
    %v2741 = vsel %vm101, %v2731, %v2732
    %v2742 = vsel %vm168, %v2718, %v2741
    %v2743 = vsel %vm101, %v2733, %v2734
    %v2744 = vsel %vm168, %v2722, %v2743
    %v2745 = vsel %vm101, %v2734, %v2735
    %v2746 = vsel %vm168, %v2724, %v2745
    %v2747 = vsel %vm101, %v2735, %v2736
    %v2748 = vsel %vm168, %v2726, %v2747
    %2755 = vst [vmem:[#allocation2 + $0x60] sm:$0xff] %v2738
    %2756 = vst [vmem:[#allocation2 + $0x68] sm:$0xff] %v2740
    %2757 = vst [vmem:[#allocation2 + $0x70] sm:$0xff] %v2742
    %2758 = vst [vmem:[#allocation2 + $0x78] sm:$0xff] %v2744
    %2759 = vst [vmem:[#allocation2 + $0x80] sm:$0xff] %v2746
    %2760 = vst [vmem:[#allocation2 + $0x88] sm:$0xff] %v2748
    %v2761 = vld [vmem:[#allocation3] sm:$0xff]
    %v2762 = vld [vmem:[#allocation3 + $0x8] sm:$0xff]
    %v2763 = vld [vmem:[#allocation3 + $0x10] sm:$0xff]
    %v2764 = vld [vmem:[#allocation3 + $0x18] sm:$0xf]
    %v2765 = vld [vmem:[#allocation3 + $0x1c] sm:$0xff]
    %v2766 = vld [vmem:[#allocation3 + $0x24] sm:$0xff]
    %v2767 = vld [vmem:[#allocation3 + $0x2c] sm:$0xff]
    %v2768 = vld [vmem:[#allocation3 + $0x34] sm:$0xf]
    %2777 = vrot.lane.b32.xlu0 %v2761, 110
    %v2778 = vpop.permute.xlu0 %2777
    %2779 = vrot.lane.b32.xlu0 %v2762, 110
    %v2780 = vpop.permute.xlu0 %2779
    %2781 = vrot.lane.b32.xlu0 %v2763, 110
    %v2782 = vpop.permute.xlu0 %2781
    %2783 = vrot.lane.b32.xlu0 %v2764, 110
    %v2784 = vpop.permute.xlu0 %2783
    %2785 = vrot.lane.b32.xlu0 %v2765, 110
    %v2786 = vpop.permute.xlu0 %2785
    %2787 = vrot.lane.b32.xlu0 %v2766, 110
    %v2788 = vpop.permute.xlu0 %2787
    %2789 = vrot.lane.b32.xlu0 %v2767, 110
    %v2790 = vpop.permute.xlu0 %2789
    %2791 = vrot.lane.b32.xlu0 %v2768, 110
    %v2792 = vpop.permute.xlu0 %2791
    %v2793 = vrot.slane %v2778, 4
    %v2794 = vrot.slane %v2780, 4
    %v2795 = vrot.slane %v2782, 4
    %v2796 = vrot.slane %v2784, 4
    %v2797 = vrot.slane %v2786, 4
    %v2798 = vrot.slane %v2788, 4
    %v2799 = vrot.slane %v2790, 4
    %v2800 = vrot.slane %v2792, 4
    %v2801 = vsel %vm101, %v2793, %v2794
    %v2802 = vsel %vm233, %v2778, %v2801
    %v2803 = vsel %vm101, %v2794, %v2795
    %v2804 = vsel %vm233, %v2780, %v2803
    %v2805 = vsel %vm101, %v2795, %v2796
    %v2806 = vsel %vm233, %v2782, %v2805
    %v2807 = vsel %vm101, %v2797, %v2798
    %v2808 = vsel %vm233, %v2786, %v2807
    %v2809 = vsel %vm101, %v2798, %v2799
    %v2810 = vsel %vm233, %v2788, %v2809
    %v2811 = vsel %vm101, %v2799, %v2800
    %v2812 = vsel %vm233, %v2790, %v2811
    %2819 = vst [vmem:[#allocation2 + $0x90] sm:$0xff] %v2802
    %2820 = vst [vmem:[#allocation2 + $0x98] sm:$0xff] %v2804
    %2821 = vst [vmem:[#allocation2 + $0xa0] sm:$0xff] %v2806
    %2822 = vst [vmem:[#allocation2 + $0xa8] sm:$0xff] %v2808
    %2823 = vst [vmem:[#allocation2 + $0xb0] sm:$0xff] %v2810
    %2824 = vst [vmem:[#allocation2 + $0xb8] sm:$0xff] %v2812
    %v2825 = vld [vmem:[#allocation3] sm:$0xff]
    %v2826 = vld [vmem:[#allocation3 + $0x8] sm:$0xff]
    %v2827 = vld [vmem:[#allocation3 + $0x10] sm:$0xff]
    %v2828 = vld [vmem:[#allocation3 + $0x18] sm:$0xf]
    %v2829 = vld [vmem:[#allocation3 + $0x1c] sm:$0xff]
    %v2830 = vld [vmem:[#allocation3 + $0x24] sm:$0xff]
    %v2831 = vld [vmem:[#allocation3 + $0x2c] sm:$0xff]
    %v2832 = vld [vmem:[#allocation3 + $0x34] sm:$0xf]
    %2841 = vrot.lane.b32.xlu0 %v2825, 109
    %v2842 = vpop.permute.xlu0 %2841
    %2843 = vrot.lane.b32.xlu0 %v2826, 109
    %v2844 = vpop.permute.xlu0 %2843
    %2845 = vrot.lane.b32.xlu0 %v2827, 109
    %v2846 = vpop.permute.xlu0 %2845
    %2847 = vrot.lane.b32.xlu0 %v2828, 109
    %v2848 = vpop.permute.xlu0 %2847
    %2849 = vrot.lane.b32.xlu0 %v2829, 109
    %v2850 = vpop.permute.xlu0 %2849
    %2851 = vrot.lane.b32.xlu0 %v2830, 109
    %v2852 = vpop.permute.xlu0 %2851
    %2853 = vrot.lane.b32.xlu0 %v2831, 109
    %v2854 = vpop.permute.xlu0 %2853
    %2855 = vrot.lane.b32.xlu0 %v2832, 109
    %v2856 = vpop.permute.xlu0 %2855
    %v2857 = vrot.slane %v2842, 4
    %v2858 = vrot.slane %v2844, 4
    %v2859 = vrot.slane %v2846, 4
    %v2860 = vrot.slane %v2848, 4
    %v2861 = vrot.slane %v2850, 4
    %v2862 = vrot.slane %v2852, 4
    %v2863 = vrot.slane %v2854, 4
    %v2864 = vrot.slane %v2856, 4
    %v2865 = vsel %vm101, %v2857, %v2858
    %v2866 = vsel %vm298, %v2842, %v2865
    %v2867 = vsel %vm101, %v2858, %v2859
    %v2868 = vsel %vm298, %v2844, %v2867
    %v2869 = vsel %vm101, %v2859, %v2860
    %v2870 = vsel %vm298, %v2846, %v2869
    %v2871 = vsel %vm101, %v2861, %v2862
    %v2872 = vsel %vm298, %v2850, %v2871
    %v2873 = vsel %vm101, %v2862, %v2863
    %v2874 = vsel %vm298, %v2852, %v2873
    %v2875 = vsel %vm101, %v2863, %v2864
    %v2876 = vsel %vm298, %v2854, %v2875
    %2883 = vst [vmem:[#allocation2 + $0xc0] sm:$0xff] %v2866
    %2884 = vst [vmem:[#allocation2 + $0xc8] sm:$0xff] %v2868
    %2885 = vst [vmem:[#allocation2 + $0xd0] sm:$0xff] %v2870
    %2886 = vst [vmem:[#allocation2 + $0xd8] sm:$0xff] %v2872
    %2887 = vst [vmem:[#allocation2 + $0xe0] sm:$0xff] %v2874
    %2888 = vst [vmem:[#allocation2 + $0xe8] sm:$0xff] %v2876
    %v2889 = vld [vmem:[#allocation3] sm:$0xff]
    %v2890 = vld [vmem:[#allocation3 + $0x8] sm:$0xff]
    %v2891 = vld [vmem:[#allocation3 + $0x10] sm:$0xff]
    %v2892 = vld [vmem:[#allocation3 + $0x18] sm:$0xf]
    %v2893 = vld [vmem:[#allocation3 + $0x1c] sm:$0xff]
    %v2894 = vld [vmem:[#allocation3 + $0x24] sm:$0xff]
    %v2895 = vld [vmem:[#allocation3 + $0x2c] sm:$0xff]
    %v2896 = vld [vmem:[#allocation3 + $0x34] sm:$0xf]
    %2905 = vrot.lane.b32.xlu0 %v2889, 108
    %v2906 = vpop.permute.xlu0 %2905
    %2907 = vrot.lane.b32.xlu0 %v2890, 108
    %v2908 = vpop.permute.xlu0 %2907
    %2909 = vrot.lane.b32.xlu0 %v2891, 108
    %v2910 = vpop.permute.xlu0 %2909
    %2911 = vrot.lane.b32.xlu0 %v2892, 108
    %v2912 = vpop.permute.xlu0 %2911
    %2913 = vrot.lane.b32.xlu0 %v2893, 108
    %v2914 = vpop.permute.xlu0 %2913
    %2915 = vrot.lane.b32.xlu0 %v2894, 108
    %v2916 = vpop.permute.xlu0 %2915
    %2917 = vrot.lane.b32.xlu0 %v2895, 108
    %v2918 = vpop.permute.xlu0 %2917
    %2919 = vrot.lane.b32.xlu0 %v2896, 108
    %v2920 = vpop.permute.xlu0 %2919
    %v2921 = vrot.slane %v2906, 4
    %v2922 = vrot.slane %v2908, 4
    %v2923 = vrot.slane %v2910, 4
    %v2924 = vrot.slane %v2912, 4
    %v2925 = vrot.slane %v2914, 4
    %v2926 = vrot.slane %v2916, 4
    %v2927 = vrot.slane %v2918, 4
    %v2928 = vrot.slane %v2920, 4
    %v2929 = vsel %vm101, %v2921, %v2922
    %v2930 = vsel %vm363, %v2906, %v2929
    %v2931 = vsel %vm101, %v2922, %v2923
    %v2932 = vsel %vm363, %v2908, %v2931
    %v2933 = vsel %vm101, %v2923, %v2924
    %v2934 = vsel %vm363, %v2910, %v2933
    %v2935 = vsel %vm101, %v2925, %v2926
    %v2936 = vsel %vm363, %v2914, %v2935
    %v2937 = vsel %vm101, %v2926, %v2927
    %v2938 = vsel %vm363, %v2916, %v2937
    %v2939 = vsel %vm101, %v2927, %v2928
    %v2940 = vsel %vm363, %v2918, %v2939
    %2947 = vst [vmem:[#allocation2 + $0xf0] sm:$0xff] %v2930
    %2948 = vst [vmem:[#allocation2 + $0xf8] sm:$0xff] %v2932
    %2949 = vst [vmem:[#allocation2 + $0x100] sm:$0xff] %v2934
    %2950 = vst [vmem:[#allocation2 + $0x108] sm:$0xff] %v2936
    %2951 = vst [vmem:[#allocation2 + $0x110] sm:$0xff] %v2938
    %2952 = vst [vmem:[#allocation2 + $0x118] sm:$0xff] %v2940
    %v2953 = vld [vmem:[#allocation3] sm:$0xff]
    %v2954 = vld [vmem:[#allocation3 + $0x8] sm:$0xff]
    %v2955 = vld [vmem:[#allocation3 + $0x10] sm:$0xff]
    %v2956 = vld [vmem:[#allocation3 + $0x18] sm:$0xf]
    %v2957 = vld [vmem:[#allocation3 + $0x1c] sm:$0xff]
    %v2958 = vld [vmem:[#allocation3 + $0x24] sm:$0xff]
    %v2959 = vld [vmem:[#allocation3 + $0x2c] sm:$0xff]
    %v2960 = vld [vmem:[#allocation3 + $0x34] sm:$0xf]
    %2969 = vrot.lane.b32.xlu0 %v2953, 92
    %v2970 = vpop.permute.xlu0 %2969
    %2971 = vrot.lane.b32.xlu0 %v2954, 92
    %v2972 = vpop.permute.xlu0 %2971
    %2973 = vrot.lane.b32.xlu0 %v2955, 92
    %v2974 = vpop.permute.xlu0 %2973
    %2975 = vrot.lane.b32.xlu0 %v2956, 92
    %v2976 = vpop.permute.xlu0 %2975
    %2977 = vrot.lane.b32.xlu0 %v2957, 92
    %v2978 = vpop.permute.xlu0 %2977
    %2979 = vrot.lane.b32.xlu0 %v2958, 92
    %v2980 = vpop.permute.xlu0 %2979
    %2981 = vrot.lane.b32.xlu0 %v2959, 92
    %v2982 = vpop.permute.xlu0 %2981
    %2983 = vrot.lane.b32.xlu0 %v2960, 92
    %v2984 = vpop.permute.xlu0 %2983
    %v2985 = vrot.slane %v2970, 4
    %v2986 = vrot.slane %v2972, 4
    %v2987 = vrot.slane %v2974, 4
    %v2988 = vrot.slane %v2976, 4
    %v2989 = vrot.slane %v2978, 4
    %v2990 = vrot.slane %v2980, 4
    %v2991 = vrot.slane %v2982, 4
    %v2992 = vrot.slane %v2984, 4
    %v2993 = vsel %vm101, %v2985, %v2986
    %v2994 = vsel %vm428, %v2970, %v2993
    %v2995 = vsel %vm101, %v2986, %v2987
    %v2996 = vsel %vm428, %v2972, %v2995
    %v2997 = vsel %vm101, %v2987, %v2988
    %v2998 = vsel %vm428, %v2974, %v2997
    %v2999 = vsel %vm101, %v2989, %v2990
    %v3000 = vsel %vm428, %v2978, %v2999
    %v3001 = vsel %vm101, %v2990, %v2991
    %v3002 = vsel %vm428, %v2980, %v3001
    %v3003 = vsel %vm101, %v2991, %v2992
    %v3004 = vsel %vm428, %v2982, %v3003
    %3011 = vst [vmem:[#allocation2 + $0x120] sm:$0xff] %v2994
    %3012 = vst [vmem:[#allocation2 + $0x128] sm:$0xff] %v2996
    %3013 = vst [vmem:[#allocation2 + $0x130] sm:$0xff] %v2998
    %3014 = vst [vmem:[#allocation2 + $0x138] sm:$0xff] %v3000
    %3015 = vst [vmem:[#allocation2 + $0x140] sm:$0xff] %v3002
    %3016 = vst [vmem:[#allocation2 + $0x148] sm:$0xff] %v3004
    %v3017 = vld [vmem:[#allocation3] sm:$0xff]
    %v3018 = vld [vmem:[#allocation3 + $0x8] sm:$0xff]
    %v3019 = vld [vmem:[#allocation3 + $0x10] sm:$0xff]
    %v3020 = vld [vmem:[#allocation3 + $0x18] sm:$0xf]
    %v3021 = vld [vmem:[#allocation3 + $0x1c] sm:$0xff]
    %v3022 = vld [vmem:[#allocation3 + $0x24] sm:$0xff]
    %v3023 = vld [vmem:[#allocation3 + $0x2c] sm:$0xff]
    %v3024 = vld [vmem:[#allocation3 + $0x34] sm:$0xf]
    %3033 = vrot.lane.b32.xlu0 %v3017, 91
    %v3034 = vpop.permute.xlu0 %3033
    %3035 = vrot.lane.b32.xlu0 %v3018, 91
    %v3036 = vpop.permute.xlu0 %3035
    %3037 = vrot.lane.b32.xlu0 %v3019, 91
    %v3038 = vpop.permute.xlu0 %3037
    %3039 = vrot.lane.b32.xlu0 %v3020, 91
    %v3040 = vpop.permute.xlu0 %3039
    %3041 = vrot.lane.b32.xlu0 %v3021, 91
    %v3042 = vpop.permute.xlu0 %3041
    %3043 = vrot.lane.b32.xlu0 %v3022, 91
    %v3044 = vpop.permute.xlu0 %3043
    %3045 = vrot.lane.b32.xlu0 %v3023, 91
    %v3046 = vpop.permute.xlu0 %3045
    %3047 = vrot.lane.b32.xlu0 %v3024, 91
    %v3048 = vpop.permute.xlu0 %3047
    %v3049 = vrot.slane %v3034, 4
    %v3050 = vrot.slane %v3036, 4
    %v3051 = vrot.slane %v3038, 4
    %v3052 = vrot.slane %v3040, 4
    %v3053 = vrot.slane %v3042, 4
    %v3054 = vrot.slane %v3044, 4
    %v3055 = vrot.slane %v3046, 4
    %v3056 = vrot.slane %v3048, 4
    %v3057 = vsel %vm101, %v3049, %v3050
    %v3058 = vsel %vm493, %v3034, %v3057
    %v3059 = vsel %vm101, %v3050, %v3051
    %v3060 = vsel %vm493, %v3036, %v3059
    %v3061 = vsel %vm101, %v3051, %v3052
    %v3062 = vsel %vm493, %v3038, %v3061
    %v3063 = vsel %vm101, %v3053, %v3054
    %v3064 = vsel %vm493, %v3042, %v3063
    %v3065 = vsel %vm101, %v3054, %v3055
    %v3066 = vsel %vm493, %v3044, %v3065
    %v3067 = vsel %vm101, %v3055, %v3056
    %v3068 = vsel %vm493, %v3046, %v3067
    %3075 = vst [vmem:[#allocation2 + $0x150] sm:$0xff] %v3058
    %3076 = vst [vmem:[#allocation2 + $0x158] sm:$0xff] %v3060
    %3077 = vst [vmem:[#allocation2 + $0x160] sm:$0xff] %v3062
    %3078 = vst [vmem:[#allocation2 + $0x168] sm:$0xff] %v3064
    %3079 = vst [vmem:[#allocation2 + $0x170] sm:$0xff] %v3066
    %3080 = vst [vmem:[#allocation2 + $0x178] sm:$0xff] %v3068
    %v3081 = vld [vmem:[#allocation3] sm:$0xff]
    %v3082 = vld [vmem:[#allocation3 + $0x8] sm:$0xff]
    %v3083 = vld [vmem:[#allocation3 + $0x10] sm:$0xff]
    %v3084 = vld [vmem:[#allocation3 + $0x18] sm:$0xf]
    %v3085 = vld [vmem:[#allocation3 + $0x1c] sm:$0xff]
    %v3086 = vld [vmem:[#allocation3 + $0x24] sm:$0xff]
    %v3087 = vld [vmem:[#allocation3 + $0x2c] sm:$0xff]
    %v3088 = vld [vmem:[#allocation3 + $0x34] sm:$0xf]
    %3097 = vrot.lane.b32.xlu0 %v3081, 90
    %v3098 = vpop.permute.xlu0 %3097
    %3099 = vrot.lane.b32.xlu0 %v3082, 90
    %v3100 = vpop.permute.xlu0 %3099
    %3101 = vrot.lane.b32.xlu0 %v3083, 90
    %v3102 = vpop.permute.xlu0 %3101
    %3103 = vrot.lane.b32.xlu0 %v3084, 90
    %v3104 = vpop.permute.xlu0 %3103
    %3105 = vrot.lane.b32.xlu0 %v3085, 90
    %v3106 = vpop.permute.xlu0 %3105
    %3107 = vrot.lane.b32.xlu0 %v3086, 90
    %v3108 = vpop.permute.xlu0 %3107
    %3109 = vrot.lane.b32.xlu0 %v3087, 90
    %v3110 = vpop.permute.xlu0 %3109
    %3111 = vrot.lane.b32.xlu0 %v3088, 90
    %v3112 = vpop.permute.xlu0 %3111
    %v3113 = vrot.slane %v3098, 4
    %v3114 = vrot.slane %v3100, 4
    %v3115 = vrot.slane %v3102, 4
    %v3116 = vrot.slane %v3104, 4
    %v3117 = vrot.slane %v3106, 4
    %v3118 = vrot.slane %v3108, 4
    %v3119 = vrot.slane %v3110, 4
    %v3120 = vrot.slane %v3112, 4
    %v3121 = vsel %vm101, %v3113, %v3114
    %v3122 = vsel %vm558, %v3098, %v3121
    %v3123 = vsel %vm101, %v3114, %v3115
    %v3124 = vsel %vm558, %v3100, %v3123
    %v3125 = vsel %vm101, %v3115, %v3116
    %v3126 = vsel %vm558, %v3102, %v3125
    %v3127 = vsel %vm101, %v3117, %v3118
    %v3128 = vsel %vm558, %v3106, %v3127
    %v3129 = vsel %vm101, %v3118, %v3119
    %v3130 = vsel %vm558, %v3108, %v3129
    %v3131 = vsel %vm101, %v3119, %v3120
    %v3132 = vsel %vm558, %v3110, %v3131
    %3139 = vst [vmem:[#allocation2 + $0x180] sm:$0xff] %v3122
    %3140 = vst [vmem:[#allocation2 + $0x188] sm:$0xff] %v3124
    %3141 = vst [vmem:[#allocation2 + $0x190] sm:$0xff] %v3126
    %3142 = vst [vmem:[#allocation2 + $0x198] sm:$0xff] %v3128
    %3143 = vst [vmem:[#allocation2 + $0x1a0] sm:$0xff] %v3130
    %3144 = vst [vmem:[#allocation2 + $0x1a8] sm:$0xff] %v3132
    %v3145 = vld [vmem:[#allocation2] sm:$0xff]
    %v3146 = vld [vmem:[#allocation2 + $0x8] sm:$0xff]
    %v3147 = vld [vmem:[#allocation2 + $0x10] sm:$0xff]
    %v3148 = vld [vmem:[#allocation2 + $0x18] sm:$0xff]
    %v3149 = vld [vmem:[#allocation2 + $0x20] sm:$0xff]
    %v3150 = vld [vmem:[#allocation2 + $0x28] sm:$0xff]
    %v3151 = vld [vmem:[#allocation2 + $0x30] sm:$0xff]
    %v3152 = vld [vmem:[#allocation2 + $0x38] sm:$0xff]
    %v3153 = vld [vmem:[#allocation2 + $0x40] sm:$0xff]
    %v3154 = vld [vmem:[#allocation2 + $0x48] sm:$0xff]
    %v3155 = vld [vmem:[#allocation2 + $0x50] sm:$0xff]
    %v3156 = vld [vmem:[#allocation2 + $0x58] sm:$0xff]
    %v3157 = vld [vmem:[#allocation2 + $0x60] sm:$0xff]
    %v3158 = vld [vmem:[#allocation2 + $0x68] sm:$0xff]
    %v3159 = vld [vmem:[#allocation2 + $0x70] sm:$0xff]
    %v3160 = vld [vmem:[#allocation2 + $0x78] sm:$0xff]
    %v3161 = vld [vmem:[#allocation2 + $0x80] sm:$0xff]
    %v3162 = vld [vmem:[#allocation2 + $0x88] sm:$0xff]
    %v3163 = vld [vmem:[#allocation2 + $0x90] sm:$0xff]
    %v3164 = vld [vmem:[#allocation2 + $0x98] sm:$0xff]
    %v3165 = vld [vmem:[#allocation2 + $0xa0] sm:$0xff]
    %v3166 = vld [vmem:[#allocation2 + $0xa8] sm:$0xff]
    %v3167 = vld [vmem:[#allocation2 + $0xb0] sm:$0xff]
    %v3168 = vld [vmem:[#allocation2 + $0xb8] sm:$0xff]
    %v3169 = vld [vmem:[#allocation2 + $0xc0] sm:$0xff]
    %v3170 = vld [vmem:[#allocation2 + $0xc8] sm:$0xff]
    %v3171 = vld [vmem:[#allocation2 + $0xd0] sm:$0xff]
    %v3172 = vld [vmem:[#allocation2 + $0xd8] sm:$0xff]
    %v3173 = vld [vmem:[#allocation2 + $0xe0] sm:$0xff]
    %v3174 = vld [vmem:[#allocation2 + $0xe8] sm:$0xff]
    %v3175 = vld [vmem:[#allocation2 + $0xf0] sm:$0xff]
    %v3176 = vld [vmem:[#allocation2 + $0xf8] sm:$0xff]
    %v3177 = vld [vmem:[#allocation2 + $0x100] sm:$0xff]
    %v3178 = vld [vmem:[#allocation2 + $0x108] sm:$0xff]
    %v3179 = vld [vmem:[#allocation2 + $0x110] sm:$0xff]
    %v3180 = vld [vmem:[#allocation2 + $0x118] sm:$0xff]
    %v3181 = vld [vmem:[#allocation2 + $0x120] sm:$0xff]
    %v3182 = vld [vmem:[#allocation2 + $0x128] sm:$0xff]
    %v3183 = vld [vmem:[#allocation2 + $0x130] sm:$0xff]
    %v3184 = vld [vmem:[#allocation2 + $0x138] sm:$0xff]
    %v3185 = vld [vmem:[#allocation2 + $0x140] sm:$0xff]
    %v3186 = vld [vmem:[#allocation2 + $0x148] sm:$0xff]
    %v3187 = vld [vmem:[#allocation2 + $0x150] sm:$0xff]
    %v3188 = vld [vmem:[#allocation2 + $0x158] sm:$0xff]
    %v3189 = vld [vmem:[#allocation2 + $0x160] sm:$0xff]
    %v3190 = vld [vmem:[#allocation2 + $0x168] sm:$0xff]
    %v3191 = vld [vmem:[#allocation2 + $0x170] sm:$0xff]
    %v3192 = vld [vmem:[#allocation2 + $0x178] sm:$0xff]
    %v3193 = vld [vmem:[#allocation2 + $0x180] sm:$0xff]
    %v3194 = vld [vmem:[#allocation2 + $0x188] sm:$0xff]
    %v3195 = vld [vmem:[#allocation2 + $0x190] sm:$0xff]
    %v3196 = vld [vmem:[#allocation2 + $0x198] sm:$0xff]
    %v3197 = vld [vmem:[#allocation2 + $0x1a0] sm:$0xff]
    %v3198 = vld [vmem:[#allocation2 + $0x1a8] sm:$0xff]
    %v3253 = vunpack.c.l.b16 %v3145
    %v3254 = vunpack.c.h.b16 %v3145
    %v3255 = vunpack.c.l.b16 %v3146
    %v3256 = vunpack.c.h.b16 %v3146
    %v3257 = vunpack.c.l.b16 %v3147
    %v3258 = vunpack.c.h.b16 %v3147
    %v3259 = vunpack.c.l.b16 %v3148
    %v3260 = vunpack.c.h.b16 %v3148
    %v3261 = vunpack.c.l.b16 %v3149
    %v3262 = vunpack.c.h.b16 %v3149
    %v3263 = vunpack.c.l.b16 %v3150
    %v3264 = vunpack.c.h.b16 %v3150
    %v3265 = vunpack.c.l.b16 %v3151
    %v3266 = vunpack.c.h.b16 %v3151
    %v3267 = vunpack.c.l.b16 %v3152
    %v3268 = vunpack.c.h.b16 %v3152
    %v3269 = vunpack.c.l.b16 %v3153
    %v3270 = vunpack.c.h.b16 %v3153
    %v3271 = vunpack.c.l.b16 %v3154
    %v3272 = vunpack.c.h.b16 %v3154
    %v3273 = vunpack.c.l.b16 %v3155
    %v3274 = vunpack.c.h.b16 %v3155
    %v3275 = vunpack.c.l.b16 %v3156
    %v3276 = vunpack.c.h.b16 %v3156
    %v3277 = vunpack.c.l.b16 %v3157
    %v3278 = vunpack.c.h.b16 %v3157
    %v3279 = vunpack.c.l.b16 %v3158
    %v3280 = vunpack.c.h.b16 %v3158
    %v3281 = vunpack.c.l.b16 %v3159
    %v3282 = vunpack.c.h.b16 %v3159
    %v3283 = vunpack.c.l.b16 %v3160
    %v3284 = vunpack.c.h.b16 %v3160
    %v3285 = vunpack.c.l.b16 %v3161
    %v3286 = vunpack.c.h.b16 %v3161
    %v3287 = vunpack.c.l.b16 %v3162
    %v3288 = vunpack.c.h.b16 %v3162
    %v3289 = vunpack.c.l.b16 %v3163
    %v3290 = vunpack.c.h.b16 %v3163
    %v3291 = vunpack.c.l.b16 %v3164
    %v3292 = vunpack.c.h.b16 %v3164
    %v3293 = vunpack.c.l.b16 %v3165
    %v3294 = vunpack.c.h.b16 %v3165
    %v3295 = vunpack.c.l.b16 %v3166
    %v3296 = vunpack.c.h.b16 %v3166
    %v3297 = vunpack.c.l.b16 %v3167
    %v3298 = vunpack.c.h.b16 %v3167
    %v3299 = vunpack.c.l.b16 %v3168
    %v3300 = vunpack.c.h.b16 %v3168
    %v3301 = vunpack.c.l.b16 %v3169
    %v3302 = vunpack.c.h.b16 %v3169
    %v3303 = vunpack.c.l.b16 %v3170
    %v3304 = vunpack.c.h.b16 %v3170
    %v3305 = vunpack.c.l.b16 %v3171
    %v3306 = vunpack.c.h.b16 %v3171
    %v3307 = vunpack.c.l.b16 %v3172
    %v3308 = vunpack.c.h.b16 %v3172
    %v3309 = vunpack.c.l.b16 %v3173
    %v3310 = vunpack.c.h.b16 %v3173
    %v3311 = vunpack.c.l.b16 %v3174
    %v3312 = vunpack.c.h.b16 %v3174
    %v3313 = vunpack.c.l.b16 %v3175
    %v3314 = vunpack.c.h.b16 %v3175
    %v3315 = vunpack.c.l.b16 %v3176
    %v3316 = vunpack.c.h.b16 %v3176
    %v3317 = vunpack.c.l.b16 %v3177
    %v3318 = vunpack.c.h.b16 %v3177
    %v3319 = vunpack.c.l.b16 %v3178
    %v3320 = vunpack.c.h.b16 %v3178
    %v3321 = vunpack.c.l.b16 %v3179
    %v3322 = vunpack.c.h.b16 %v3179
    %v3323 = vunpack.c.l.b16 %v3180
    %v3324 = vunpack.c.h.b16 %v3180
    %v3325 = vunpack.c.l.b16 %v3181
    %v3326 = vunpack.c.h.b16 %v3181
    %v3327 = vunpack.c.l.b16 %v3182
    %v3328 = vunpack.c.h.b16 %v3182
    %v3329 = vunpack.c.l.b16 %v3183
    %v3330 = vunpack.c.h.b16 %v3183
    %v3331 = vunpack.c.l.b16 %v3184
    %v3332 = vunpack.c.h.b16 %v3184
    %v3333 = vunpack.c.l.b16 %v3185
    %v3334 = vunpack.c.h.b16 %v3185
    %v3335 = vunpack.c.l.b16 %v3186
    %v3336 = vunpack.c.h.b16 %v3186
    %v3337 = vunpack.c.l.b16 %v3187
    %v3338 = vunpack.c.h.b16 %v3187
    %v3339 = vunpack.c.l.b16 %v3188
    %v3340 = vunpack.c.h.b16 %v3188
    %v3341 = vunpack.c.l.b16 %v3189
    %v3342 = vunpack.c.h.b16 %v3189
    %v3343 = vunpack.c.l.b16 %v3190
    %v3344 = vunpack.c.h.b16 %v3190
    %v3345 = vunpack.c.l.b16 %v3191
    %v3346 = vunpack.c.h.b16 %v3191
    %v3347 = vunpack.c.l.b16 %v3192
    %v3348 = vunpack.c.h.b16 %v3192
    %v3349 = vunpack.c.l.b16 %v3193
    %v3350 = vunpack.c.h.b16 %v3193
    %v3351 = vunpack.c.l.b16 %v3194
    %v3352 = vunpack.c.h.b16 %v3194
    %v3353 = vunpack.c.l.b16 %v3195
    %v3354 = vunpack.c.h.b16 %v3195
    %v3355 = vunpack.c.l.b16 %v3196
    %v3356 = vunpack.c.h.b16 %v3196
    %v3357 = vunpack.c.l.b16 %v3197
    %v3358 = vunpack.c.h.b16 %v3197
    %v3359 = vunpack.c.l.b16 %v3198
    %v3360 = vunpack.c.h.b16 %v3198
    %v3361 = vpack.c.b16 %v3259, %v3253
    %v3362 = vpack.c.b16 %v3260, %v3254
    %v3363 = vpack.c.b16 %v3261, %v3255
    %v3364 = vpack.c.b16 %v3262, %v3256
    %v3365 = vpack.c.b16 %v3263, %v3257
    %v3366 = vpack.c.b16 %v3264, %v3258
    %v3367 = vpack.c.b16 %v3271, %v3265
    %v3368 = vpack.c.b16 %v3272, %v3266
    %v3369 = vpack.c.b16 %v3273, %v3267
    %v3370 = vpack.c.b16 %v3274, %v3268
    %v3371 = vpack.c.b16 %v3275, %v3269
    %v3372 = vpack.c.b16 %v3276, %v3270
    %v3373 = vpack.c.b16 %v3283, %v3277
    %v3374 = vpack.c.b16 %v3284, %v3278
    %v3375 = vpack.c.b16 %v3285, %v3279
    %v3376 = vpack.c.b16 %v3286, %v3280
    %v3377 = vpack.c.b16 %v3287, %v3281
    %v3378 = vpack.c.b16 %v3288, %v3282
    %v3379 = vpack.c.b16 %v3295, %v3289
    %v3380 = vpack.c.b16 %v3296, %v3290
    %v3381 = vpack.c.b16 %v3297, %v3291
    %v3382 = vpack.c.b16 %v3298, %v3292
    %v3383 = vpack.c.b16 %v3299, %v3293
    %v3384 = vpack.c.b16 %v3300, %v3294
    %v3385 = vpack.c.b16 %v3307, %v3301
    %v3386 = vpack.c.b16 %v3308, %v3302
    %v3387 = vpack.c.b16 %v3309, %v3303
    %v3388 = vpack.c.b16 %v3310, %v3304
    %v3389 = vpack.c.b16 %v3311, %v3305
    %v3390 = vpack.c.b16 %v3312, %v3306
    %v3391 = vpack.c.b16 %v3319, %v3313
    %v3392 = vpack.c.b16 %v3320, %v3314
    %v3393 = vpack.c.b16 %v3321, %v3315
    %v3394 = vpack.c.b16 %v3322, %v3316
    %v3395 = vpack.c.b16 %v3323, %v3317
    %v3396 = vpack.c.b16 %v3324, %v3318
    %v3397 = vpack.c.b16 %v3331, %v3325
    %v3398 = vpack.c.b16 %v3332, %v3326
    %v3399 = vpack.c.b16 %v3333, %v3327
    %v3400 = vpack.c.b16 %v3334, %v3328
    %v3401 = vpack.c.b16 %v3335, %v3329
    %v3402 = vpack.c.b16 %v3336, %v3330
    %v3403 = vpack.c.b16 %v3343, %v3337
    %v3404 = vpack.c.b16 %v3344, %v3338
    %v3405 = vpack.c.b16 %v3345, %v3339
    %v3406 = vpack.c.b16 %v3346, %v3340
    %v3407 = vpack.c.b16 %v3347, %v3341
    %v3408 = vpack.c.b16 %v3348, %v3342
    %v3409 = vpack.c.b16 %v3355, %v3349
    %v3410 = vpack.c.b16 %v3356, %v3350
    %v3411 = vpack.c.b16 %v3357, %v3351
    %v3412 = vpack.c.b16 %v3358, %v3352
    %v3413 = vpack.c.b16 %v3359, %v3353
    %v3414 = vpack.c.b16 %v3360, %v3354
    %3469 = vmatpush.bf16.msra.mxu0 %v3403
    %3470 = vmatpush.bf16.msra.mxu0 %v3397
    %3471 = vmatpush.bf16.msra.mxu0 %v3391
    %3472 = vmatpush.bf16.msra.mxu0 %v3385
    %3473 = vmatpush.bf16.msra.mxu0 %v3379
    %3474 = vmatpush.bf16.msra.mxu0 %v3373
    %3475 = vmatpush.bf16.msra.mxu0 %v3367
    %3476 = vmatpush.bf16.msra.mxu0 %v3361
    %3477 = vmatmul.bf16.gmra.mxu0 %v1933
    %v3478 = vpop.f32.mrf.mxu0
    %v3479 = vadd.f32 0.0, %v3478
    %v3480 = vpop.f32.mrf.mxu0
    %v3481 = vadd.f32 0.0, %v3480
    %3482 = vdwg.mxu0
    %3483 = vmatpush.bf16.msra.mxu0 0
    %3484 = vmatpush.bf16.msra.mxu0 0
    %3485 = vmatpush.bf16.msra.mxu0 0
    %3486 = vmatpush.bf16.msra.mxu0 0
    %3487 = vmatpush.bf16.msra.mxu0 0
    %3488 = vmatpush.bf16.msra.mxu0 0
    %3489 = vmatpush.bf16.msra.mxu0 0
    %3490 = vmatpush.bf16.msra.mxu0 %v3409
    %3491 = vmatmul.bf16.gmra.mxu0 %v2207
    %v3492 = vpop.f32.mrf.mxu0
    %v3493 = vadd.f32 %v3479, %v3492
    %v3494 = vpop.f32.mrf.mxu0
    %v3495 = vadd.f32 %v3481, %v3494
    %3496 = vdwg.mxu0
    %3497 = vmatpush.bf16.msra.mxu0 %v3404
    %3498 = vmatpush.bf16.msra.mxu0 %v3398
    %3499 = vmatpush.bf16.msra.mxu0 %v3392
    %3500 = vmatpush.bf16.msra.mxu0 %v3386
    %3501 = vmatpush.bf16.msra.mxu0 %v3380
    %3502 = vmatpush.bf16.msra.mxu0 %v3374
    %3503 = vmatpush.bf16.msra.mxu0 %v3368
    %3504 = vmatpush.bf16.msra.mxu0 %v3362
    %3505 = vmatmul.bf16.gmra.mxu0 %v1933
    %v3506 = vpop.f32.mrf.mxu0
    %v3507 = vadd.f32 0.0, %v3506
    %v3508 = vpop.f32.mrf.mxu0
    %v3509 = vadd.f32 0.0, %v3508
    %3510 = vdwg.mxu0
    %3511 = vmatpush.bf16.msra.mxu0 0
    %3512 = vmatpush.bf16.msra.mxu0 0
    %3513 = vmatpush.bf16.msra.mxu0 0
    %3514 = vmatpush.bf16.msra.mxu0 0
    %3515 = vmatpush.bf16.msra.mxu0 0
    %3516 = vmatpush.bf16.msra.mxu0 0
    %3517 = vmatpush.bf16.msra.mxu0 0
    %3518 = vmatpush.bf16.msra.mxu0 %v3410
    %3519 = vmatmul.bf16.gmra.mxu0 %v2207
    %v3520 = vpop.f32.mrf.mxu0
    %v3521 = vadd.f32 %v3507, %v3520
    %v3522 = vpop.f32.mrf.mxu0
    %v3523 = vadd.f32 %v3509, %v3522
    %3524 = vdwg.mxu0
    %3525 = vmatpush.bf16.msra.mxu0 %v3405
    %3526 = vmatpush.bf16.msra.mxu0 %v3399
    %3527 = vmatpush.bf16.msra.mxu0 %v3393
    %3528 = vmatpush.bf16.msra.mxu0 %v3387
    %3529 = vmatpush.bf16.msra.mxu0 %v3381
    %3530 = vmatpush.bf16.msra.mxu0 %v3375
    %3531 = vmatpush.bf16.msra.mxu0 %v3369
    %3532 = vmatpush.bf16.msra.mxu0 %v3363
    %3533 = vmatmul.bf16.gmra.mxu0 %v1933
    %v3534 = vpop.f32.mrf.mxu0
    %v3535 = vadd.f32 0.0, %v3534
    %v3536 = vpop.f32.mrf.mxu0
    %v3537 = vadd.f32 0.0, %v3536
    %3538 = vdwg.mxu0
    %3539 = vmatpush.bf16.msra.mxu0 0
    %3540 = vmatpush.bf16.msra.mxu0 0
    %3541 = vmatpush.bf16.msra.mxu0 0
    %3542 = vmatpush.bf16.msra.mxu0 0
    %3543 = vmatpush.bf16.msra.mxu0 0
    %3544 = vmatpush.bf16.msra.mxu0 0
    %3545 = vmatpush.bf16.msra.mxu0 0
    %3546 = vmatpush.bf16.msra.mxu0 %v3411
    %3547 = vmatmul.bf16.gmra.mxu0 %v2207
    %v3548 = vpop.f32.mrf.mxu0
    %v3549 = vadd.f32 %v3535, %v3548
    %v3550 = vpop.f32.mrf.mxu0
    %v3551 = vadd.f32 %v3537, %v3550
    %3552 = vdwg.mxu0
    %3553 = vmatpush.bf16.msra.mxu0 %v3406
    %3554 = vmatpush.bf16.msra.mxu0 %v3400
    %3555 = vmatpush.bf16.msra.mxu0 %v3394
    %3556 = vmatpush.bf16.msra.mxu0 %v3388
    %3557 = vmatpush.bf16.msra.mxu0 %v3382
    %3558 = vmatpush.bf16.msra.mxu0 %v3376
    %3559 = vmatpush.bf16.msra.mxu0 %v3370
    %3560 = vmatpush.bf16.msra.mxu0 %v3364
    %3561 = vmatmul.bf16.gmra.mxu0 %v1933
    %v3562 = vpop.f32.mrf.mxu0
    %v3563 = vadd.f32 0.0, %v3562
    %v3564 = vpop.f32.mrf.mxu0
    %v3565 = vadd.f32 0.0, %v3564
    %3566 = vdwg.mxu0
    %3567 = vmatpush.bf16.msra.mxu0 0
    %3568 = vmatpush.bf16.msra.mxu0 0
    %3569 = vmatpush.bf16.msra.mxu0 0
    %3570 = vmatpush.bf16.msra.mxu0 0
    %3571 = vmatpush.bf16.msra.mxu0 0
    %3572 = vmatpush.bf16.msra.mxu0 0
    %3573 = vmatpush.bf16.msra.mxu0 0
    %3574 = vmatpush.bf16.msra.mxu0 %v3412
    %3575 = vmatmul.bf16.gmra.mxu0 %v2207
    %v3576 = vpop.f32.mrf.mxu0
    %v3577 = vadd.f32 %v3563, %v3576
    %v3578 = vpop.f32.mrf.mxu0
    %v3579 = vadd.f32 %v3565, %v3578
    %3580 = vdwg.mxu0
    %3581 = vmatpush.bf16.msra.mxu0 %v3407
    %3582 = vmatpush.bf16.msra.mxu0 %v3401
    %3583 = vmatpush.bf16.msra.mxu0 %v3395
    %3584 = vmatpush.bf16.msra.mxu0 %v3389
    %3585 = vmatpush.bf16.msra.mxu0 %v3383
    %3586 = vmatpush.bf16.msra.mxu0 %v3377
    %3587 = vmatpush.bf16.msra.mxu0 %v3371
    %3588 = vmatpush.bf16.msra.mxu0 %v3365
    %3589 = vmatmul.bf16.gmra.mxu0 %v1933
    %v3590 = vpop.f32.mrf.mxu0
    %v3591 = vadd.f32 0.0, %v3590
    %v3592 = vpop.f32.mrf.mxu0
    %v3593 = vadd.f32 0.0, %v3592
    %3594 = vdwg.mxu0
    %3595 = vmatpush.bf16.msra.mxu0 0
    %3596 = vmatpush.bf16.msra.mxu0 0
    %3597 = vmatpush.bf16.msra.mxu0 0
    %3598 = vmatpush.bf16.msra.mxu0 0
    %3599 = vmatpush.bf16.msra.mxu0 0
    %3600 = vmatpush.bf16.msra.mxu0 0
    %3601 = vmatpush.bf16.msra.mxu0 0
    %3602 = vmatpush.bf16.msra.mxu0 %v3413
    %3603 = vmatmul.bf16.gmra.mxu0 %v2207
    %v3604 = vpop.f32.mrf.mxu0
    %v3605 = vadd.f32 %v3591, %v3604
    %v3606 = vpop.f32.mrf.mxu0
    %v3607 = vadd.f32 %v3593, %v3606
    %3608 = vdwg.mxu0
    %3609 = vmatpush.bf16.msra.mxu0 %v3408
    %3610 = vmatpush.bf16.msra.mxu0 %v3402
    %3611 = vmatpush.bf16.msra.mxu0 %v3396
    %3612 = vmatpush.bf16.msra.mxu0 %v3390
    %3613 = vmatpush.bf16.msra.mxu0 %v3384
    %3614 = vmatpush.bf16.msra.mxu0 %v3378
    %3615 = vmatpush.bf16.msra.mxu0 %v3372
    %3616 = vmatpush.bf16.msra.mxu0 %v3366
    %3617 = vmatmul.bf16.gmra.mxu0 %v1933
    %v3618 = vpop.f32.mrf.mxu0
    %v3619 = vadd.f32 0.0, %v3618
    %v3620 = vpop.f32.mrf.mxu0
    %v3621 = vadd.f32 0.0, %v3620
    %3622 = vdwg.mxu0
    %3623 = vmatpush.bf16.msra.mxu0 0
    %3624 = vmatpush.bf16.msra.mxu0 0
    %3625 = vmatpush.bf16.msra.mxu0 0
    %3626 = vmatpush.bf16.msra.mxu0 0
    %3627 = vmatpush.bf16.msra.mxu0 0
    %3628 = vmatpush.bf16.msra.mxu0 0
    %3629 = vmatpush.bf16.msra.mxu0 0
    %3630 = vmatpush.bf16.msra.mxu0 %v3414
    %3631 = vmatmul.bf16.gmra.mxu0 %v2207
    %v3632 = vpop.f32.mrf.mxu0
    %v3633 = vadd.f32 %v3619, %v3632
    %v3634 = vpop.f32.mrf.mxu0
    %v3635 = vadd.f32 %v3621, %v3634
    %3636 = vdwg.mxu0
    %v3637 = vadd.f32 %v945, %v3493
    %v3638 = vadd.f32 %v973, %v3521
    %v3639 = vadd.f32 %v1001, %v3549
    %v3640 = vadd.f32 %v1029, %v3577
    %v3641 = vadd.f32 %v1057, %v3605
    %v3642 = vadd.f32 %v1085, %v3633
    %v3643 = vadd.f32 %v947, %v3495
    %v3644 = vadd.f32 %v975, %v3523
    %v3645 = vadd.f32 %v1003, %v3551
    %v3646 = vadd.f32 %v1031, %v3579
    %v3647 = vadd.f32 %v1059, %v3607
    %v3648 = vadd.f32 %v1087, %v3635
    %v3649 = vmul.f32 %v3637, %v1090
    %v3650 = vmul.f32 %v3638, %v1091
    %v3651 = vmul.f32 %v3639, %v1092
    %v3652 = vmul.f32 %v3640, %v1093
    %v3653 = vmul.f32 %v3641, %v1094
    %v3654 = vmul.f32 %v3642, %v1095
    %v3655 = vmul.f32 %v3643, %v1090
    %v3656 = vmul.f32 %v3644, %v1091
    %v3657 = vmul.f32 %v3645, %v1092
    %v3658 = vmul.f32 %v3646, %v1093
    %v3659 = vmul.f32 %v3647, %v1094
    %v3660 = vmul.f32 %v3648, %v1095
    %v3661 = vadd.f32 %v3649, %v3650
    %v3662 = vadd.f32 %v3661, %v3651
    %v3663 = vadd.f32 %v3662, %v3652
    %v3664 = vadd.f32 %v3663, %v3653
    %v3665 = vadd.f32 %v3664, %v3654
    %3666 = vadd.xlane.f32.xlu0 %v3665
    %v3667 = vpop.xlane.xlu0 %3666
    %v3668 = vadd.f32 %v3655, %v3656
    %v3669 = vadd.f32 %v3668, %v3657
    %v3670 = vadd.f32 %v3669, %v3658
    %v3671 = vadd.f32 %v3670, %v3659
    %v3672 = vadd.f32 %v3671, %v3660
    %3673 = vadd.xlane.f32.xlu0 %v3672
    %v3674 = vpop.xlane.xlu0 %3673
    %v3675 = vmul.f32 %v3667, 0.001953125
    %v3676 = vmul.f32 %v3674, 0.001953125
    %v3677 = vsub.f32 %v3637, %v3675
    %v3678 = vsub.f32 %v3638, %v3675
    %v3679 = vsub.f32 %v3639, %v3675
    %v3680 = vsub.f32 %v3640, %v3675
    %v3681 = vsub.f32 %v3641, %v3675
    %v3682 = vsub.f32 %v3642, %v3675
    %v3683 = vsub.f32 %v3643, %v3676
    %v3684 = vsub.f32 %v3644, %v3676
    %v3685 = vsub.f32 %v3645, %v3676
    %v3686 = vsub.f32 %v3646, %v3676
    %v3687 = vsub.f32 %v3647, %v3676
    %v3688 = vsub.f32 %v3648, %v3676
    %v3689 = vmul.f32 %v3677, %v1090
    %v3690 = vmul.f32 %v3678, %v1091
    %v3691 = vmul.f32 %v3679, %v1092
    %v3692 = vmul.f32 %v3680, %v1093
    %v3693 = vmul.f32 %v3681, %v1094
    %v3694 = vmul.f32 %v3682, %v1095
    %v3695 = vmul.f32 %v3683, %v1090
    %v3696 = vmul.f32 %v3684, %v1091
    %v3697 = vmul.f32 %v3685, %v1092
    %v3698 = vmul.f32 %v3686, %v1093
    %v3699 = vmul.f32 %v3687, %v1094
    %v3700 = vmul.f32 %v3688, %v1095
    %v3701 = vmul.f32 %v3689, %v3689
    %v3702 = vmul.f32 %v3690, %v3690
    %v3703 = vmul.f32 %v3691, %v3691
    %v3704 = vmul.f32 %v3692, %v3692
    %v3705 = vmul.f32 %v3693, %v3693
    %v3706 = vmul.f32 %v3694, %v3694
    %v3707 = vmul.f32 %v3695, %v3695
    %v3708 = vmul.f32 %v3696, %v3696
    %v3709 = vmul.f32 %v3697, %v3697
    %v3710 = vmul.f32 %v3698, %v3698
    %v3711 = vmul.f32 %v3699, %v3699
    %v3712 = vmul.f32 %v3700, %v3700
    %v3713 = vadd.f32 %v3701, %v3702
    %v3714 = vadd.f32 %v3713, %v3703
    %v3715 = vadd.f32 %v3714, %v3704
    %v3716 = vadd.f32 %v3715, %v3705
    %v3717 = vadd.f32 %v3716, %v3706
    %3718 = vadd.xlane.f32.xlu0 %v3717
    %v3719 = vpop.xlane.xlu0 %3718
    %v3720 = vadd.f32 %v3707, %v3708
    %v3721 = vadd.f32 %v3720, %v3709
    %v3722 = vadd.f32 %v3721, %v3710
    %v3723 = vadd.f32 %v3722, %v3711
    %v3724 = vadd.f32 %v3723, %v3712
    %3725 = vadd.xlane.f32.xlu0 %v3724
    %v3726 = vpop.xlane.xlu0 %3725
    %v3727 = vmul.f32 %v3719, 0.001953125
    %v3728 = vmul.f32 %v3726, 0.001953125
    %v3729 = vadd.f32 %v3727, 1e-05
    %v3730 = vadd.f32 %v3728, 1e-05
    %v3731 = vrsqrt.pop %v3729
    %v3732 = vmul.f32 %v3731, %v3729
    %v3733 = vmul.f32 %v3732, %v3731
    %v3734 = vmul.f32 0.5, %v3733
    %v3735 = vsub.f32 1.5, %v3734
    %v3736 = vmul.f32 %v3731, %v3735
    %vm3737 = vweird.f32 %v3729
    %vm3738 = vweird.f32 %v3731
    %vm3739 = vmor %vm3737, %vm3738
    %v3740 = vsel %vm3739, %v3731, %v3736
    %v3741 = vrsqrt.pop %v3730
    %v3742 = vmul.f32 %v3741, %v3730
    %v3743 = vmul.f32 %v3742, %v3741
    %v3744 = vmul.f32 0.5, %v3743
    %v3745 = vsub.f32 1.5, %v3744
    %v3746 = vmul.f32 %v3741, %v3745
    %vm3747 = vweird.f32 %v3730
    %vm3748 = vweird.f32 %v3741
    %vm3749 = vmor %vm3747, %vm3748
    %v3750 = vsel %vm3749, %v3741, %v3746
    %v3751 = vmul.f32 %v44, %v3740
    %v3752 = vmul.f32 %v45, %v3750
    %v3753 = vmul.f32 %v3675, %v3751
    %v3754 = vmul.f32 %v3676, %v3752
    %v3755 = vsub.f32 %v46, %v3753
    %v3756 = vsub.f32 %v47, %v3754
    %3758 = vset.pattern.permute.xlu0 0
    %3759 = vperm.xlu0 %3758, %v3751
    %v3760 = vpop.permute.xlu0 %3759
    %3763 = vset.pattern.permute.xlu0 0
    %3764 = vperm.xlu0 %3763, %v3752
    %v3765 = vpop.permute.xlu0 %3764
    %v3767 = vmul.f32 %v3637, %v3760
    %v3768 = vmul.f32 %v3638, %v3760
    %v3769 = vmul.f32 %v3639, %v3760
    %v3770 = vmul.f32 %v3640, %v3760
    %v3771 = vmul.f32 %v3641, %v3760
    %v3772 = vmul.f32 %v3642, %v3760
    %v3773 = vmul.f32 %v3643, %v3765
    %v3774 = vmul.f32 %v3644, %v3765
    %v3775 = vmul.f32 %v3645, %v3765
    %v3776 = vmul.f32 %v3646, %v3765
    %v3777 = vmul.f32 %v3647, %v3765
    %v3778 = vmul.f32 %v3648, %v3765
    %3780 = vset.pattern.permute.xlu0 0
    %3781 = vperm.xlu0 %3780, %v3755
    %v3782 = vpop.permute.xlu0 %3781
    %3785 = vset.pattern.permute.xlu0 0
    %3786 = vperm.xlu0 %3785, %v3756
    %v3787 = vpop.permute.xlu0 %3786
    %v3789 = vadd.f32 %v3767, %v3782
    %v3790 = vadd.f32 %v3768, %v3782
    %v3791 = vadd.f32 %v3769, %v3782
    %v3792 = vadd.f32 %v3770, %v3782
    %v3793 = vadd.f32 %v3771, %v3782
    %v3794 = vadd.f32 %v3772, %v3782
    %v3795 = vadd.f32 %v3773, %v3787
    %v3796 = vadd.f32 %v3774, %v3787
    %v3797 = vadd.f32 %v3775, %v3787
    %v3798 = vadd.f32 %v3776, %v3787
    %v3799 = vadd.f32 %v3777, %v3787
    %v3800 = vadd.f32 %v3778, %v3787
    %v3801 = vmax.f32 %v3789, 0.0
    %v3802 = vmax.f32 %v3790, 0.0
    %v3803 = vmax.f32 %v3791, 0.0
    %v3804 = vmax.f32 %v3792, 0.0
    %v3805 = vmax.f32 %v3793, 0.0
    %v3806 = vmax.f32 %v3794, 0.0
    %v3807 = vmax.f32 %v3795, 0.0
    %v3808 = vmax.f32 %v3796, 0.0
    %v3809 = vmax.f32 %v3797, 0.0
    %v3810 = vmax.f32 %v3798, 0.0
    %v3811 = vmax.f32 %v3799, 0.0
    %v3812 = vmax.f32 %v3800, 0.0
    %3813 = vst [vmem:[#allocation7] sm:$0xff] %v3801
    %3814 = vst [vmem:[#allocation7 + $0x8] sm:$0xff] %v3802
    %3815 = vst [vmem:[#allocation7 + $0x10] sm:$0xff] %v3803
    %3816 = vst [vmem:[#allocation7 + $0x18] sm:$0xff] %v3804
    %3817 = vst [vmem:[#allocation7 + $0x20] sm:$0xff] %v3805
    %3818 = vst [vmem:[#allocation7 + $0x28] sm:$0xff] %v3806
    %3819 = vst [vmem:[#allocation7 + $0x30] sm:$0xff] %v3807
    %3820 = vst [vmem:[#allocation7 + $0x38] sm:$0xff] %v3808
    %3821 = vst [vmem:[#allocation7 + $0x40] sm:$0xff] %v3809
    %3822 = vst [vmem:[#allocation7 + $0x48] sm:$0xff] %v3810
    %3823 = vst [vmem:[#allocation7 + $0x50] sm:$0xff] %v3811
    %3824 = vst [vmem:[#allocation7 + $0x58] sm:$0xff] %v3812
    // Predicated region
    $region34: #{tpu_custom_call.1} parent=1 // pred_check
      _
    $region35: #{tpu_custom_call.1} parent=1 // pred_check_branch
      %3826 = sbr.rel (0) target = $region37
    $region36: #{tpu_custom_call.1} parent=1 // pred_region
      %3828 = vsyncadd [#allocation6], 0
      %s3829 = sshll.u32 [#allocation7], 4
      %s3830 = int_to_ptr.vmem [resolvable:$true] %s3829
      %s3831 = sshll.u32 %s7, 4
      %s3832 = int_to_ptr.hbm [resolvable:$true] %s3831
      %3837 = dma.vmem_to_hbm [thread:$0]  %s3830, 1536, %s3832, [#allocation6], 768, 768, 48
    $region37: #{tpu_custom_call.1} parent=1 // pred_fallthru
      _
    // Predicated region
    $region38: #{tpu_custom_call.1} parent=1 // pred_check
      _
    $region39: #{tpu_custom_call.1} parent=1 // pred_check_branch
      %3839 = sbr.rel (0) target = $region41
    $region40: #{tpu_custom_call.1} parent=1 // pred_region
      %3841 = dma.done [#allocation6], 1536
    $region41: #{tpu_custom_call.1} parent=1 // pred_fallthru
      _
    %3842 = vsyncpa [#allocation5], 1
    %3843 = vsyncpa [#allocation6], 1

</llo_original>
